<compile_context>
chip_gen: v5e
topology: v5e:2x2
jax: 0.10.0
libtpu: 0.0.40
codegen_flags: <defaults>
</compile_context>

<pallas_src>
import functools

import jax
import jax.numpy as jnp
from jax.experimental import pallas as pl
from jax.experimental.pallas import tpu as pltpu


_VMEM_LIMIT = 48 * 1024 * 1024   # explicit scoped-VMEM limit, < v7x 64 MiB phys


def _pick_rows(h, w, target_m=512, max_m=2048):
    """Largest divisor TR of h with TR*w <= max_m, stopping once TR*w >= target_m."""
    best = 1
    for d in range(2, h + 1):
        if h % d:
            continue
        if d * w > max_m:
            break
        best = d
        if d * w >= target_m:
            break
    return best


# ---------------------------------------------------------------------------
# Init-time weight fusion (done ONCE, never per call).
# ---------------------------------------------------------------------------

def make_deconv_s2_weight(w, dtype=jnp.bfloat16):
    """Fold a (Cin, Cout, 3, 3) ConvTranspose2d(k=3,s=2,p=1,op=1) weight into a
    single fused (4*Cin, 4*Cout) matmul weight.

    For the output row-pair produced by input row i:
      [Y[2i,2j] Y[2i,2j+1] | Y[2i+1,2j] Y[2i+1,2j+1]]
        = [x[i,j] | x[i,j+1] | x[i+1,j] | x[i+1,j+1]] @ W_comb
    """
    cin, cout = w.shape[0], w.shape[1]
    z = jnp.zeros((cin, cout), w.dtype)
    t = lambda ky, kx: w[:, :, ky, kx]
    we = jnp.concatenate([                              # even output row 2i
        jnp.concatenate([t(1, 1), t(1, 2)], axis=1),    # x[i, j]
        jnp.concatenate([z,       t(1, 0)], axis=1),    # x[i, j+1]
        jnp.concatenate([z,       z], axis=1),          # x[i+1, j]   (unused)
        jnp.concatenate([z,       z], axis=1),          # x[i+1, j+1] (unused)
    ], axis=0)                                          # (4Cin, 2Cout)
    wo = jnp.concatenate([                              # odd output row 2i+1
        jnp.concatenate([t(2, 1), t(2, 2)], axis=1),    # x[i, j]
        jnp.concatenate([z,       t(2, 0)], axis=1),    # x[i, j+1]
        jnp.concatenate([t(0, 1), t(0, 2)], axis=1),    # x[i+1, j]
        jnp.concatenate([z,       t(0, 0)], axis=1),    # x[i+1, j+1]
    ], axis=0)                                          # (4Cin, 2Cout)
    return jnp.concatenate([we, wo], axis=1).astype(dtype)   # (4Cin, 4Cout)


def make_tconv_s1_weight(w, dtype=jnp.bfloat16):
    """(Cin, Cout, 3, 3) stride-1 ConvTranspose2d weight -> (3, 3*Cin, Cout):
    one fused (3Cin, Cout) matmul weight per kernel tap-row dy (spatial flip
    folded in at init)."""
    rows = [jnp.concatenate([w[:, :, 2 - dy, 2 - dx] for dx in range(3)], axis=0)
            for dy in range(3)]
    return jnp.stack(rows, axis=0).astype(dtype)


# ---------------------------------------------------------------------------
# Stride-2 3x3 transposed conv (+ fused bias/ReLU), sub-pixel fused-weight form.
# ---------------------------------------------------------------------------

def _deconv3x3_s2_kernel(xm_ref, xh_ref, w_ref, b_ref, o_ref, *, apply_relu):
    # xm: (1, TR, W+1, Cin) padded input rows [r*TR, (r+1)*TR)
    # xh: (1, 1,  W+1, Cin) halo row (r+1)*TR (next block's first row / zero pad)
    # w : (4Cin, 4Cout) fused even/odd sub-pixel weight (bf16)
    # b : (1, 4Cout) f32 bias (tiled 4x)
    # o : (1, TR, 2W, 2Cout); cols [0:W) hold output row 2i, [W:2W) row 2i+1,
    #     last dim packs (column parity, channel) -> lane dense.
    tr = o_ref.shape[1]
    w_in = o_ref.shape[2] // 2
    cout2 = o_ref.shape[3]
    cin = xm_ref.shape[3]

    xa = xm_ref[0]                                            # input rows i
    if tr > 1:
        xb = jnp.concatenate([xa[1:], xh_ref[0]], axis=0)     # input rows i+1
    else:
        xb = xh_ref[0]
    # All four taps along lanes -> ONE MXU matmul with K = 4*Cin.
    z = jnp.concatenate(
        [xa[:, :w_in, :], xa[:, 1:w_in + 1, :],
         xb[:, :w_in, :], xb[:, 1:w_in + 1, :]], axis=-1)     # (TR, W, 4Cin)
    acc = jnp.dot(z.reshape(tr * w_in, 4 * cin), w_ref[...],
                  preferred_element_type=jnp.float32)         # (M, 4Cout) f32
    acc = acc + b_ref[...]
    if apply_relu:
        acc = jnp.maximum(acc, 0.0)                           # ReLU in f32
    res = acc.reshape(tr, w_in, 2 * cout2)
    o_ref[0, :, :w_in, :] = res[:, :, :cout2].astype(o_ref.dtype)   # even rows
    o_ref[0, :, w_in:, :] = res[:, :, cout2:].astype(o_ref.dtype)   # odd rows


def deconv3x3_s2(x, w_comb, bias4, *, relu, block_rows=None):
    """x: (N, H, W, Cin) NHWC -> (N, 2H, 2W, Cout); ConvTranspose2d(3, s=2, p=1, op=1)."""
    n, h, w, cin = x.shape
    cout4 = w_comb.shape[1]
    cout2 = cout4 // 2
    tr = block_rows or _pick_rows(h, w)
    # One zero row/column bottom/right: the boundary taps read zeros.
    xp = jnp.pad(x, ((0, 0), (0, 1), (0, 1), (0, 0)))
    out = pl.pallas_call(
        functools.partial(_deconv3x3_s2_kernel, apply_relu=relu),
        out_shape=jax.ShapeDtypeStruct((n, h, 2 * w, cout2), x.dtype),
        grid=(n, h // tr),
        in_specs=[
            pl.BlockSpec((1, tr, w + 1, cin), lambda b, r: (b, r, 0, 0)),
            pl.BlockSpec((1, 1, w + 1, cin), lambda b, r: (b, (r + 1) * tr, 0, 0)),
            pl.BlockSpec((4 * cin, cout4), lambda b, r: (0, 0)),       # resident
            pl.BlockSpec((1, cout4), lambda b, r: (0, 0)),             # resident
        ],
        out_specs=pl.BlockSpec((1, tr, 2 * w, cout2), lambda b, r: (b, r, 0, 0)),
        compiler_params=pltpu.CompilerParams(
            dimension_semantics=("parallel", "parallel"),
            vmem_limit_bytes=_VMEM_LIMIT),
    )(xp, xp, w_comb, bias4)
    # (N, H, 2W, 2Cout) is already row-major (N, 2H, 2W, Cout): free reshape.
    return out.reshape(n, 2 * h, 2 * w, cout2 // 2)


# ---------------------------------------------------------------------------
# Stride-1 3x3 transposed conv (= 'same' conv with flipped kernel) + bias.
# ---------------------------------------------------------------------------

def _tconv3x3_s1_kernel(xm_ref, xh0_ref, xh1_ref, w_ref, b_ref, o_ref):
    # xm : (1, TR, W+2, Cin) padded rows [r*TR, r*TR+TR)
    # xh0/xh1: (1, 1, W+2, Cin) halo rows r*TR+TR, r*TR+TR+1
    # w  : (3, 3Cin, Cout) fused tap-row weights; b: (1, Cout) f32
    # o  : (1, TR, W, Cout)
    tr = o_ref.shape[1]
    w_out = o_ref.shape[2]
    cin = xm_ref.shape[3]

    x0 = xm_ref[0]                                              # (TR,  W+2, Cin)
    tail = jnp.concatenate([xh0_ref[0], xh1_ref[0]], axis=0)    # (2,   W+2, Cin)

    acc = None
    for dy in range(3):                                         # 3 dots, K = 3*Cin
        if dy == 0:
            rows = x0
        elif dy < tr:
            rows = jnp.concatenate([x0[dy:], tail[:dy]], axis=0)
        else:
            rows = tail[dy - tr:dy - tr + tr]
        zdy = jnp.concatenate(
            [rows[:, dx:dx + w_out, :] for dx in range(3)], axis=-1)  # (TR, W, 3Cin)
        d = jnp.dot(zdy.reshape(tr * w_out, 3 * cin), w_ref[dy],
                    preferred_element_type=jnp.float32)
        acc = d if acc is None else acc + d
    acc = acc + b_ref[...]
    o_ref[0] = acc.reshape(tr, w_out, o_ref.shape[3]).astype(o_ref.dtype)


def tconv3x3_s1(x, w3, bias, *, out_dtype=None, block_rows=None):
    """x: (N, H, W, Cin) -> (N, H, W, Cout); ConvTranspose2d(k=3, s=1, p=1)."""
    n, h, w, cin = x.shape
    cout = w3.shape[2]
    tr = block_rows or _pick_rows(h, w)
    xp = jnp.pad(x, ((0, 0), (1, 1), (1, 1), (0, 0)))
    return pl.pallas_call(
        _tconv3x3_s1_kernel,
        out_shape=jax.ShapeDtypeStruct((n, h, w, cout), out_dtype or x.dtype),
        grid=(n, h // tr),
        in_specs=[
            pl.BlockSpec((1, tr, w + 2, cin), lambda b, r: (b, r, 0, 0)),
            pl.BlockSpec((1, 1, w + 2, cin), lambda b, r: (b, (r + 1) * tr, 0, 0)),
            pl.BlockSpec((1, 1, w + 2, cin), lambda b, r: (b, (r + 1) * tr + 1, 0, 0)),
            pl.BlockSpec((3, 3 * cin, cout), lambda b, r: (0, 0, 0)),   # resident
            pl.BlockSpec((1, cout), lambda b, r: (0, 0)),               # resident
        ],
        out_specs=pl.BlockSpec((1, tr, w, cout), lambda b, r: (b, r, 0, 0)),
        compiler_params=pltpu.CompilerParams(
            dimension_semantics=("parallel", "parallel"),
            vmem_limit_bytes=_VMEM_LIMIT),
    )(xp, xp, xp, w3, bias)


# ---------------------------------------------------------------------------
# ConditionalLayer (FiLM) kernel.
# ---------------------------------------------------------------------------

def make_conditional_weights(w_scale, w_bias):
    """nn.Linear weights (F, C) -> one fused (C, 2F) matmul weight (init-time)."""
    return jnp.concatenate([w_scale.T, w_bias.T], axis=1)


def _conditional_layer_kernel(x_ref, cond_ref, wcat_ref, o_ref, *, num_features):
    sb = jnp.dot(cond_ref[...], wcat_ref[...], preferred_element_type=jnp.float32)
    s_lin = sb[:, :num_features]
    b_lin = sb[:, num_features:]
    # numerically stable softplus
    scale = jnp.log1p(jnp.exp(-jnp.abs(s_lin))) + jnp.maximum(s_lin, 0.0)
    o_ref[...] = (scale * x_ref[...] + b_lin).astype(o_ref.dtype)


def conditional_layer(inputs, condition, w_cat, *, block_rows=512):
    """FiLM: softplus(cond @ Ws^T) * inputs + cond @ Wb^T on (B, F) inputs."""
    b, f = inputs.shape
    c = condition.shape[1]
    tb = min(block_rows, b)
    return pl.pallas_call(
        functools.partial(_conditional_layer_kernel, num_features=f),
        out_shape=jax.ShapeDtypeStruct((b, f), inputs.dtype),
        grid=(pl.cdiv(b, tb),),
        in_specs=[
            pl.BlockSpec((tb, f), lambda i: (i, 0)),
            pl.BlockSpec((tb, c), lambda i: (i, 0)),
            pl.BlockSpec((c, 2 * f), lambda i: (0, 0)),
        ],
        out_specs=pl.BlockSpec((tb, f), lambda i: (i, 0)),
        compiler_params=pltpu.CompilerParams(
            dimension_semantics=("parallel",),
            vmem_limit_bytes=_VMEM_LIMIT),
    )(inputs, condition, w_cat)


# ---------------------------------------------------------------------------
# HyperSynthesisTransform: parameters prepared once at init, forward pass.
# ---------------------------------------------------------------------------

def init_hyper_synthesis_params(key, num_hyperpriors, num_filters, num_features,
                                compute_dtype=jnp.bfloat16):
    k1, k2, k3, k4, k5, k6 = jax.random.split(key, 6)
    # PyTorch ConvTranspose2d weight layout: (in_channels, out_channels, kH, kW)
    w1 = 0.1 * jax.random.normal(k1, (num_hyperpriors, num_filters, 3, 3), jnp.float32)
    w2 = 0.1 * jax.random.normal(k2, (num_filters, num_filters, 3, 3), jnp.float32)
    w3 = 0.1 * jax.random.normal(k3, (num_filters, num_features, 3, 3), jnp.float32)
    b1 = 0.05 * jax.random.normal(k4, (num_filters,), jnp.float32)
    b2 = 0.05 * jax.random.normal(k5, (num_filters,), jnp.float32)
    b3 = 0.05 * jax.random.normal(k6, (num_features,), jnp.float32)
    return dict(
        raw_w=(w1, w2, w3), raw_b=(b1, b2, b3),
        w1c=make_deconv_s2_weight(w1, compute_dtype),
        w2c=make_deconv_s2_weight(w2, compute_dtype),
        w3c=make_tconv_s1_weight(w3, compute_dtype),
        b1c=jnp.tile(b1, 4)[None, :],      # (1, 4*num_filters) f32
        b2c=jnp.tile(b2, 4)[None, :],
        b3c=b3[None, :],                   # (1, num_features)  f32
    )


def hyper_synthesis_forward(x, params, condition=None):
    """x: (N, H, W, num_hyperpriors) NHWC -> (N, 4H, 4W, num_features) f32."""
    del condition
    # TODO(synk): the original TransposedConv's lmda_cond branch applies
    # ConditionalLayer(out_channels) to the *pre-deconv* input, which is
    # shape-inconsistent in the source; only the default (condition=None)
    # HyperSynthesisTransform path is wired here. The improved ConditionalLayer
    # kernel is provided and tested standalone below.
    y = x.astype(params["w1c"].dtype)                               # bf16 activations
    y = deconv3x3_s2(y, params["w1c"], params["b1c"], relu=True)    # d1 + ReLU
    y = deconv3x3_s2(y, params["w2c"], params["b2c"], relu=True)    # d2 + ReLU
    y = tconv3x3_s1(y, params["w3c"], params["b3c"],
                    out_dtype=jnp.float32)                          # d3
    return y


# ---------------------------------------------------------------------------
# Pure-JAX reference (same bf16 parameter/activation rounding as the kernels).
# ---------------------------------------------------------------------------

def tconv_ref(x, w, b, stride, padding, output_padding):
    """ConvTranspose2d reference in NHWC with PyTorch-layout weight (Cin,Cout,kh,kw)."""
    k = w.shape[2]
    w_conv = jnp.transpose(jnp.flip(w, axis=(2, 3)), (2, 3, 0, 1))   # HWIO
    lo = k - 1 - padding
    hi = k - 1 - padding + output_padding
    y = jax.lax.conv_general_dilated(
        x, w_conv, window_strides=(1, 1), padding=((lo, hi), (lo, hi)),
        lhs_dilation=(stride, stride),
        dimension_numbers=("NHWC", "HWIO", "NHWC"))
    return y + b


def hyper_synthesis_ref(x, params, compute_dtype=jnp.bfloat16):
    w1, w2, w3 = params["raw_w"]
    b1, b2, b3 = params["raw_b"]
    q = lambda a: a.astype(compute_dtype).astype(jnp.float32)
    y = q(x)
    y = q(jnp.maximum(tconv_ref(y, q(w1), b1, 2, 1, 1), 0.0))
    y = q(jnp.maximum(tconv_ref(y, q(w2), b2, 2, 1, 1), 0.0))
    return tconv_ref(y, q(w3), b3, 1, 1, 0)


if __name__ == "__main__":
    key = jax.random.PRNGKey(0)
    kx, kp, kc1, kc2, kc3, kc4 = jax.random.split(key, 6)

    # --- HyperSynthesisTransform: small NHWC shapes -------------------------
    N, H, W = 2, 8, 8
    num_hyperpriors, num_filters, num_features = 32, 64, 128

    x = jax.random.normal(kx, (N, H, W, num_hyperpriors), dtype=jnp.float32)
    params = init_hyper_synthesis_params(kp, num_hyperpriors, num_filters, num_features)

    fwd = jax.jit(hyper_synthesis_forward)
    out = jax.block_until_ready(fwd(x, params))

    ref = hyper_synthesis_ref(x, params)
    assert out.shape == (N, 4 * H, 4 * W, num_features), out.shape
    max_err = float(jnp.max(jnp.abs(out - ref)))
    assert jnp.allclose(out, ref, atol=2e-2, rtol=2e-2), max_err

    # --- ConditionalLayer (FiLM) kernel, standalone -------------------------
    B, F, C = 256, 128, 8
    f_in = jax.random.normal(kc1, (B, F), dtype=jnp.float32)
    cond = jax.random.normal(kc2, (B, C), dtype=jnp.float32)
    w_scale = 0.1 * jax.random.normal(kc3, (F, C), dtype=jnp.float32)
    w_bias = 0.1 * jax.random.normal(kc4, (F, C), dtype=jnp.float32)
    w_cat = make_conditional_weights(w_scale, w_bias)

    film = jax.block_until_ready(conditional_layer(f_in, cond, w_cat))
    film_ref = jax.nn.softplus(cond @ w_scale.T) * f_in + cond @ w_bias.T
    assert jnp.allclose(film, film_ref, atol=1e-5, rtol=1e-5)

    print("KERNEL_OK")
</pallas_src>

<mosaic_0001>
module attributes {stable_mosaic.version = 11 : i64} {
  func.func @_deconv3x3_s2_kernel(%arg0: i32, %arg1: i32, %arg2: memref<1x8x9x32xbf16, #tpu.memory_space<vmem>>, %arg3: memref<1x1x9x32xbf16, #tpu.memory_space<vmem>>, %arg4: memref<128x256xbf16, #tpu.memory_space<vmem>>, %arg5: memref<1x256xf32, #tpu.memory_space<vmem>>, %arg6: memref<1x8x16x128xbf16, #tpu.memory_space<vmem>>) attributes {dimension_semantics = [#tpu.dimension_semantics<parallel>, #tpu.dimension_semantics<parallel>], iteration_bounds = array<i64: 2, 1>, scalar_prefetch = 0 : i64, scratch_operands = 0 : i64, tpu.core_type = #tpu.core_type<tc>, window_params = [{transform_indices = @transform_0, window_bounds = array<i64: 1, 8, 9, 32>}, {transform_indices = @transform_1, window_bounds = array<i64: 1, 1, 9, 32>}, {pipeline_mode = #tpu.pipeline_mode<synchronous>, transform_indices = @transform_2, window_bounds = array<i64: 128, 256>}, {pipeline_mode = #tpu.pipeline_mode<synchronous>, transform_indices = @transform_3, window_bounds = array<i64: 1, 256>}, {transform_indices = @transform_4, window_bounds = array<i64: 1, 8, 16, 128>}]} {
    %c0 = arith.constant 0 : index
    %c0_0 = arith.constant 0 : index
    %c0_1 = arith.constant 0 : index
    %c0_2 = arith.constant 0 : index
    %0 = vector.load %arg2[%c0, %c0_0, %c0_1, %c0_2] : memref<1x8x9x32xbf16, #tpu.memory_space<vmem>>, vector<1x8x9x32xbf16>
    %1 = vector.shape_cast %0 : vector<1x8x9x32xbf16> to vector<8x9x32xbf16>
    %2 = vector.extract_strided_slice %1 {offsets = [1, 0, 0], sizes = [7, 9, 32], strides = [1, 1, 1]} : vector<8x9x32xbf16> to vector<7x9x32xbf16>
    %c0_3 = arith.constant 0 : index
    %c0_4 = arith.constant 0 : index
    %c0_5 = arith.constant 0 : index
    %c0_6 = arith.constant 0 : index
    %3 = vector.load %arg3[%c0_3, %c0_4, %c0_5, %c0_6] : memref<1x1x9x32xbf16, #tpu.memory_space<vmem>>, vector<1x1x9x32xbf16>
    %4 = vector.shape_cast %3 : vector<1x1x9x32xbf16> to vector<1x9x32xbf16>
    %5 = tpu.concatenate %2, %4 in 0 : vector<7x9x32xbf16>, vector<1x9x32xbf16> -> vector<8x9x32xbf16>
    %6 = vector.extract_strided_slice %1 {offsets = [0, 0, 0], sizes = [8, 8, 32], strides = [1, 1, 1]} : vector<8x9x32xbf16> to vector<8x8x32xbf16>
    %7 = vector.extract_strided_slice %1 {offsets = [0, 1, 0], sizes = [8, 8, 32], strides = [1, 1, 1]} : vector<8x9x32xbf16> to vector<8x8x32xbf16>
    %8 = vector.extract_strided_slice %5 {offsets = [0, 0, 0], sizes = [8, 8, 32], strides = [1, 1, 1]} : vector<8x9x32xbf16> to vector<8x8x32xbf16>
    %9 = vector.extract_strided_slice %5 {offsets = [0, 1, 0], sizes = [8, 8, 32], strides = [1, 1, 1]} : vector<8x9x32xbf16> to vector<8x8x32xbf16>
    %10 = tpu.concatenate %6, %7, %8, %9 in 2 : vector<8x8x32xbf16>, vector<8x8x32xbf16>, vector<8x8x32xbf16>, vector<8x8x32xbf16> -> vector<8x8x128xbf16>
    %11 = vector.shape_cast %10 : vector<8x8x128xbf16> to vector<64x128xbf16>
    %c0_7 = arith.constant 0 : index
    %c0_8 = arith.constant 0 : index
    %12 = vector.load %arg4[%c0_7, %c0_8] : memref<128x256xbf16, #tpu.memory_space<vmem>>, vector<128x256xbf16>
    %cst = arith.constant dense<0.000000e+00> : vector<64x256xf32>
    %13 = tpu.matmul %11, %12, %cst {dimension_numbers = #tpu.dot_dimension_numbers<[1], [0], [0], [1], [0, 0, 1, 1], [], []>} : vector<64x128xbf16>, vector<128x256xbf16>, vector<64x256xf32> -> vector<64x256xf32>
    %c0_9 = arith.constant 0 : index
    %c0_10 = arith.constant 0 : index
    %14 = vector.load %arg5[%c0_9, %c0_10] : memref<1x256xf32, #tpu.memory_space<vmem>>, vector<1x256xf32>
    %15 = vector.broadcast %14 : vector<1x256xf32> to vector<64x256xf32>
    %16 = arith.addf %13, %15 : vector<64x256xf32>
    %cst_11 = arith.constant 0.000000e+00 : f32
    %17 = vector.broadcast %cst_11 : f32 to vector<64x256xf32>
    %18 = arith.maximumf %16, %17 : vector<64x256xf32>
    %19 = vector.shape_cast %18 : vector<64x256xf32> to vector<8x8x256xf32>
    %20 = vector.extract_strided_slice %19 {offsets = [0, 0, 0], sizes = [8, 8, 128], strides = [1, 1, 1]} : vector<8x8x256xf32> to vector<8x8x128xf32>
    %21 = arith.truncf %20 : vector<8x8x128xf32> to vector<8x8x128xbf16>
    %c0_12 = arith.constant 0 : index
    %c0_13 = arith.constant 0 : index
    %c0_14 = arith.constant 0 : index
    %c0_15 = arith.constant 0 : index
    %22 = vector.load %arg6[%c0_12, %c0_13, %c0_14, %c0_15] : memref<1x8x16x128xbf16, #tpu.memory_space<vmem>>, vector<1x8x8x128xbf16>
    %23 = vector.shape_cast %22 : vector<1x8x8x128xbf16> to vector<8x8x128xbf16>
    %24 = vector.shape_cast %21 : vector<8x8x128xbf16> to vector<1x8x8x128xbf16>
    tpu.vector_store %arg6[%c0_12, %c0_13, %c0_14, %c0_15], %24 {strides = array<i32>} : memref<1x8x16x128xbf16, #tpu.memory_space<vmem>>, vector<1x8x8x128xbf16>,
    %25 = vector.extract_strided_slice %19 {offsets = [0, 0, 128], sizes = [8, 8, 128], strides = [1, 1, 1]} : vector<8x8x256xf32> to vector<8x8x128xf32>
    %26 = arith.truncf %25 : vector<8x8x128xf32> to vector<8x8x128xbf16>
    %c0_16 = arith.constant 0 : index
    %c0_17 = arith.constant 0 : index
    %c8 = arith.constant 8 : index
    %c0_18 = arith.constant 0 : index
    %27 = vector.load %arg6[%c0_16, %c0_17, %c8, %c0_18] : memref<1x8x16x128xbf16, #tpu.memory_space<vmem>>, vector<1x8x8x128xbf16>
    %28 = vector.shape_cast %27 : vector<1x8x8x128xbf16> to vector<8x8x128xbf16>
    %29 = vector.shape_cast %26 : vector<8x8x128xbf16> to vector<1x8x8x128xbf16>
    tpu.vector_store %arg6[%c0_16, %c0_17, %c8, %c0_18], %29 {strides = array<i32>} : memref<1x8x16x128xbf16, #tpu.memory_space<vmem>>, vector<1x8x8x128xbf16>,
    return
  }
  func.func @transform_0(%arg0: i32, %arg1: i32) -> (i32, i32, i32, i32) {
    %c0_i32 = arith.constant 0 : i32
    %c0_i32_0 = arith.constant 0 : i32
    %c0_i32_1 = arith.constant 0 : i32
    return %arg0, %arg1, %c0_i32, %c0_i32_0 : i32, i32, i32, i32
  }
  func.func @transform_1(%arg0: i32, %arg1: i32) -> (i32, i32, i32, i32) {
    %c1_i32 = arith.constant 1 : i32
    %0 = arith.addi %arg1, %c1_i32 : i32
    %c8_i32 = arith.constant 8 : i32
    %1 = arith.muli %0, %c8_i32 : i32
    %c0_i32 = arith.constant 0 : i32
    %c0_i32_0 = arith.constant 0 : i32
    %c0_i32_1 = arith.constant 0 : i32
    return %arg0, %1, %c0_i32, %c0_i32_0 : i32, i32, i32, i32
  }
  func.func @transform_2(%arg0: i32, %arg1: i32) -> (i32, i32) {
    %c0_i32 = arith.constant 0 : i32
    %c0_i32_0 = arith.constant 0 : i32
    %c0_i32_1 = arith.constant 0 : i32
    return %c0_i32, %c0_i32_0 : i32, i32
  }
  func.func @transform_3(%arg0: i32, %arg1: i32) -> (i32, i32) {
    %c0_i32 = arith.constant 0 : i32
    %c0_i32_0 = arith.constant 0 : i32
    %c0_i32_1 = arith.constant 0 : i32
    return %c0_i32, %c0_i32_0 : i32, i32
  }
  func.func @transform_4(%arg0: i32, %arg1: i32) -> (i32, i32, i32, i32) {
    %c0_i32 = arith.constant 0 : i32
    %c0_i32_0 = arith.constant 0 : i32
    %c0_i32_1 = arith.constant 0 : i32
    return %arg0, %arg1, %c0_i32, %c0_i32_0 : i32, i32, i32, i32
  }
}

module attributes {stable_mosaic.version = 11 : i64} {
  func.func @_deconv3x3_s2_kernel(%arg0: i32, %arg1: i32, %arg2: memref<1x16x17x64xbf16, #tpu.memory_space<vmem>>, %arg3: memref<1x1x17x64xbf16, #tpu.memory_space<vmem>>, %arg4: memref<256x256xbf16, #tpu.memory_space<vmem>>, %arg5: memref<1x256xf32, #tpu.memory_space<vmem>>, %arg6: memref<1x16x32x128xbf16, #tpu.memory_space<vmem>>) attributes {dimension_semantics = [#tpu.dimension_semantics<parallel>, #tpu.dimension_semantics<parallel>], iteration_bounds = array<i64: 2, 1>, scalar_prefetch = 0 : i64, scratch_operands = 0 : i64, tpu.core_type = #tpu.core_type<tc>, window_params = [{transform_indices = @transform_0, window_bounds = array<i64: 1, 16, 17, 64>}, {transform_indices = @transform_1, window_bounds = array<i64: 1, 1, 17, 64>}, {pipeline_mode = #tpu.pipeline_mode<synchronous>, transform_indices = @transform_2, window_bounds = array<i64: 256, 256>}, {pipeline_mode = #tpu.pipeline_mode<synchronous>, transform_indices = @transform_3, window_bounds = array<i64: 1, 256>}, {transform_indices = @transform_4, window_bounds = array<i64: 1, 16, 32, 128>}]} {
    %c0 = arith.constant 0 : index
    %c0_0 = arith.constant 0 : index
    %c0_1 = arith.constant 0 : index
    %c0_2 = arith.constant 0 : index
    %0 = vector.load %arg2[%c0, %c0_0, %c0_1, %c0_2] : memref<1x16x17x64xbf16, #tpu.memory_space<vmem>>, vector<1x16x17x64xbf16>
    %1 = vector.shape_cast %0 : vector<1x16x17x64xbf16> to vector<16x17x64xbf16>
    %2 = vector.extract_strided_slice %1 {offsets = [1, 0, 0], sizes = [15, 17, 64], strides = [1, 1, 1]} : vector<16x17x64xbf16> to vector<15x17x64xbf16>
    %c0_3 = arith.constant 0 : index
    %c0_4 = arith.constant 0 : index
    %c0_5 = arith.constant 0 : index
    %c0_6 = arith.constant 0 : index
    %3 = vector.load %arg3[%c0_3, %c0_4, %c0_5, %c0_6] : memref<1x1x17x64xbf16, #tpu.memory_space<vmem>>, vector<1x1x17x64xbf16>
    %4 = vector.shape_cast %3 : vector<1x1x17x64xbf16> to vector<1x17x64xbf16>
    %5 = tpu.concatenate %2, %4 in 0 : vector<15x17x64xbf16>, vector<1x17x64xbf16> -> vector<16x17x64xbf16>
    %6 = vector.extract_strided_slice %1 {offsets = [0, 0, 0], sizes = [16, 16, 64], strides = [1, 1, 1]} : vector<16x17x64xbf16> to vector<16x16x64xbf16>
    %7 = vector.extract_strided_slice %1 {offsets = [0, 1, 0], sizes = [16, 16, 64], strides = [1, 1, 1]} : vector<16x17x64xbf16> to vector<16x16x64xbf16>
    %8 = vector.extract_strided_slice %5 {offsets = [0, 0, 0], sizes = [16, 16, 64], strides = [1, 1, 1]} : vector<16x17x64xbf16> to vector<16x16x64xbf16>
    %9 = vector.extract_strided_slice %5 {offsets = [0, 1, 0], sizes = [16, 16, 64], strides = [1, 1, 1]} : vector<16x17x64xbf16> to vector<16x16x64xbf16>
    %10 = tpu.concatenate %6, %7, %8, %9 in 2 : vector<16x16x64xbf16>, vector<16x16x64xbf16>, vector<16x16x64xbf16>, vector<16x16x64xbf16> -> vector<16x16x256xbf16>
    %11 = vector.shape_cast %10 : vector<16x16x256xbf16> to vector<256x256xbf16>
    %c0_7 = arith.constant 0 : index
    %c0_8 = arith.constant 0 : index
    %12 = vector.load %arg4[%c0_7, %c0_8] : memref<256x256xbf16, #tpu.memory_space<vmem>>, vector<256x256xbf16>
    %cst = arith.constant dense<0.000000e+00> : vector<256x256xf32>
    %13 = tpu.matmul %11, %12, %cst {dimension_numbers = #tpu.dot_dimension_numbers<[1], [0], [0], [1], [0, 0, 1, 1], [], []>} : vector<256x256xbf16>, vector<256x256xbf16>, vector<256x256xf32> -> vector<256x256xf32>
    %c0_9 = arith.constant 0 : index
    %c0_10 = arith.constant 0 : index
    %14 = vector.load %arg5[%c0_9, %c0_10] : memref<1x256xf32, #tpu.memory_space<vmem>>, vector<1x256xf32>
    %15 = vector.broadcast %14 : vector<1x256xf32> to vector<256x256xf32>
    %16 = arith.addf %13, %15 : vector<256x256xf32>
    %cst_11 = arith.constant 0.000000e+00 : f32
    %17 = vector.broadcast %cst_11 : f32 to vector<256x256xf32>
    %18 = arith.maximumf %16, %17 : vector<256x256xf32>
    %19 = vector.shape_cast %18 : vector<256x256xf32> to vector<16x16x256xf32>
    %20 = vector.extract_strided_slice %19 {offsets = [0, 0, 0], sizes = [16, 16, 128], strides = [1, 1, 1]} : vector<16x16x256xf32> to vector<16x16x128xf32>
    %21 = arith.truncf %20 : vector<16x16x128xf32> to vector<16x16x128xbf16>
    %c0_12 = arith.constant 0 : index
    %c0_13 = arith.constant 0 : index
    %c0_14 = arith.constant 0 : index
    %c0_15 = arith.constant 0 : index
    %22 = vector.load %arg6[%c0_12, %c0_13, %c0_14, %c0_15] : memref<1x16x32x128xbf16, #tpu.memory_space<vmem>>, vector<1x16x16x128xbf16>
    %23 = vector.shape_cast %22 : vector<1x16x16x128xbf16> to vector<16x16x128xbf16>
    %24 = vector.shape_cast %21 : vector<16x16x128xbf16> to vector<1x16x16x128xbf16>
    tpu.vector_store %arg6[%c0_12, %c0_13, %c0_14, %c0_15], %24 {strides = array<i32>} : memref<1x16x32x128xbf16, #tpu.memory_space<vmem>>, vector<1x16x16x128xbf16>,
    %25 = vector.extract_strided_slice %19 {offsets = [0, 0, 128], sizes = [16, 16, 128], strides = [1, 1, 1]} : vector<16x16x256xf32> to vector<16x16x128xf32>
    %26 = arith.truncf %25 : vector<16x16x128xf32> to vector<16x16x128xbf16>
    %c0_16 = arith.constant 0 : index
    %c0_17 = arith.constant 0 : index
    %c16 = arith.constant 16 : index
    %c0_18 = arith.constant 0 : index
    %27 = vector.load %arg6[%c0_16, %c0_17, %c16, %c0_18] : memref<1x16x32x128xbf16, #tpu.memory_space<vmem>>, vector<1x16x16x128xbf16>
    %28 = vector.shape_cast %27 : vector<1x16x16x128xbf16> to vector<16x16x128xbf16>
    %29 = vector.shape_cast %26 : vector<16x16x128xbf16> to vector<1x16x16x128xbf16>
    tpu.vector_store %arg6[%c0_16, %c0_17, %c16, %c0_18], %29 {strides = array<i32>} : memref<1x16x32x128xbf16, #tpu.memory_space<vmem>>, vector<1x16x16x128xbf16>,
    return
  }
  func.func @transform_0(%arg0: i32, %arg1: i32) -> (i32, i32, i32, i32) {
    %c0_i32 = arith.constant 0 : i32
    %c0_i32_0 = arith.constant 0 : i32
    %c0_i32_1 = arith.constant 0 : i32
    return %arg0, %arg1, %c0_i32, %c0_i32_0 : i32, i32, i32, i32
  }
  func.func @transform_1(%arg0: i32, %arg1: i32) -> (i32, i32, i32, i32) {
    %c1_i32 = arith.constant 1 : i32
    %0 = arith.addi %arg1, %c1_i32 : i32
    %c16_i32 = arith.constant 16 : i32
    %1 = arith.muli %0, %c16_i32 : i32
    %c0_i32 = arith.constant 0 : i32
    %c0_i32_0 = arith.constant 0 : i32
    %c0_i32_1 = arith.constant 0 : i32
    return %arg0, %1, %c0_i32, %c0_i32_0 : i32, i32, i32, i32
  }
  func.func @transform_2(%arg0: i32, %arg1: i32) -> (i32, i32) {
    %c0_i32 = arith.constant 0 : i32
    %c0_i32_0 = arith.constant 0 : i32
    %c0_i32_1 = arith.constant 0 : i32
    return %c0_i32, %c0_i32_0 : i32, i32
  }
  func.func @transform_3(%arg0: i32, %arg1: i32) -> (i32, i32) {
    %c0_i32 = arith.constant 0 : i32
    %c0_i32_0 = arith.constant 0 : i32
    %c0_i32_1 = arith.constant 0 : i32
    return %c0_i32, %c0_i32_0 : i32, i32
  }
  func.func @transform_4(%arg0: i32, %arg1: i32) -> (i32, i32, i32, i32) {
    %c0_i32 = arith.constant 0 : i32
    %c0_i32_0 = arith.constant 0 : i32
    %c0_i32_1 = arith.constant 0 : i32
    return %arg0, %arg1, %c0_i32, %c0_i32_0 : i32, i32, i32, i32
  }
}

module attributes {stable_mosaic.version = 11 : i64} {
  func.func @_tconv3x3_s1_kernel(%arg0: i32, %arg1: i32, %arg2: memref<1x16x34x64xbf16, #tpu.memory_space<vmem>>, %arg3: memref<1x1x34x64xbf16, #tpu.memory_space<vmem>>, %arg4: memref<1x1x34x64xbf16, #tpu.memory_space<vmem>>, %arg5: memref<3x192x128xbf16, #tpu.memory_space<vmem>>, %arg6: memref<1x128xf32, #tpu.memory_space<vmem>>, %arg7: memref<1x16x32x128xf32, #tpu.memory_space<vmem>>) attributes {dimension_semantics = [#tpu.dimension_semantics<parallel>, #tpu.dimension_semantics<parallel>], iteration_bounds = array<i64: 2, 2>, scalar_prefetch = 0 : i64, scratch_operands = 0 : i64, tpu.core_type = #tpu.core_type<tc>, window_params = [{transform_indices = @transform_0, window_bounds = array<i64: 1, 16, 34, 64>}, {transform_indices = @transform_1, window_bounds = array<i64: 1, 1, 34, 64>}, {transform_indices = @transform_2, window_bounds = array<i64: 1, 1, 34, 64>}, {pipeline_mode = #tpu.pipeline_mode<synchronous>, transform_indices = @transform_3, window_bounds = array<i64: 3, 192, 128>}, {pipeline_mode = #tpu.pipeline_mode<synchronous>, transform_indices = @transform_4, window_bounds = array<i64: 1, 128>}, {transform_indices = @transform_5, window_bounds = array<i64: 1, 16, 32, 128>}]} {
    %c0 = arith.constant 0 : index
    %c0_0 = arith.constant 0 : index
    %c0_1 = arith.constant 0 : index
    %c0_2 = arith.constant 0 : index
    %0 = vector.load %arg2[%c0, %c0_0, %c0_1, %c0_2] : memref<1x16x34x64xbf16, #tpu.memory_space<vmem>>, vector<1x16x34x64xbf16>
    %1 = vector.shape_cast %0 : vector<1x16x34x64xbf16> to vector<16x34x64xbf16>
    %c0_3 = arith.constant 0 : index
    %c0_4 = arith.constant 0 : index
    %c0_5 = arith.constant 0 : index
    %c0_6 = arith.constant 0 : index
    %2 = vector.load %arg3[%c0_3, %c0_4, %c0_5, %c0_6] : memref<1x1x34x64xbf16, #tpu.memory_space<vmem>>, vector<1x1x34x64xbf16>
    %3 = vector.shape_cast %2 : vector<1x1x34x64xbf16> to vector<1x34x64xbf16>
    %c0_7 = arith.constant 0 : index
    %c0_8 = arith.constant 0 : index
    %c0_9 = arith.constant 0 : index
    %c0_10 = arith.constant 0 : index
    %4 = vector.load %arg4[%c0_7, %c0_8, %c0_9, %c0_10] : memref<1x1x34x64xbf16, #tpu.memory_space<vmem>>, vector<1x1x34x64xbf16>
    %5 = vector.shape_cast %4 : vector<1x1x34x64xbf16> to vector<1x34x64xbf16>
    %6 = tpu.concatenate %3, %5 in 0 : vector<1x34x64xbf16>, vector<1x34x64xbf16> -> vector<2x34x64xbf16>
    %7 = vector.extract_strided_slice %1 {offsets = [0, 0, 0], sizes = [16, 32, 64], strides = [1, 1, 1]} : vector<16x34x64xbf16> to vector<16x32x64xbf16>
    %8 = vector.extract_strided_slice %1 {offsets = [0, 1, 0], sizes = [16, 32, 64], strides = [1, 1, 1]} : vector<16x34x64xbf16> to vector<16x32x64xbf16>
    %9 = vector.extract_strided_slice %1 {offsets = [0, 2, 0], sizes = [16, 32, 64], strides = [1, 1, 1]} : vector<16x34x64xbf16> to vector<16x32x64xbf16>
    %10 = tpu.concatenate %7, %8, %9 in 2 : vector<16x32x64xbf16>, vector<16x32x64xbf16>, vector<16x32x64xbf16> -> vector<16x32x192xbf16>
    %11 = vector.shape_cast %10 : vector<16x32x192xbf16> to vector<512x192xbf16>
    %c0_11 = arith.constant 0 : index
    %c0_12 = arith.constant 0 : index
    %c0_13 = arith.constant 0 : index
    %12 = vector.load %arg5[%c0_11, %c0_12, %c0_13] : memref<3x192x128xbf16, #tpu.memory_space<vmem>>, vector<1x192x128xbf16>
    %13 = vector.shape_cast %12 : vector<1x192x128xbf16> to vector<192x128xbf16>
    %cst = arith.constant dense<0.000000e+00> : vector<512x128xf32>
    %14 = tpu.matmul %11, %13, %cst {dimension_numbers = #tpu.dot_dimension_numbers<[1], [0], [0], [1], [0, 0, 1, 1], [], []>} : vector<512x192xbf16>, vector<192x128xbf16>, vector<512x128xf32> -> vector<512x128xf32>
    %15 = vector.extract_strided_slice %1 {offsets = [1, 0, 0], sizes = [15, 34, 64], strides = [1, 1, 1]} : vector<16x34x64xbf16> to vector<15x34x64xbf16>
    %16 = vector.extract_strided_slice %6 {offsets = [0, 0, 0], sizes = [1, 34, 64], strides = [1, 1, 1]} : vector<2x34x64xbf16> to vector<1x34x64xbf16>
    %17 = tpu.concatenate %15, %16 in 0 : vector<15x34x64xbf16>, vector<1x34x64xbf16> -> vector<16x34x64xbf16>
    %18 = vector.extract_strided_slice %17 {offsets = [0, 0, 0], sizes = [16, 32, 64], strides = [1, 1, 1]} : vector<16x34x64xbf16> to vector<16x32x64xbf16>
    %19 = vector.extract_strided_slice %17 {offsets = [0, 1, 0], sizes = [16, 32, 64], strides = [1, 1, 1]} : vector<16x34x64xbf16> to vector<16x32x64xbf16>
    %20 = vector.extract_strided_slice %17 {offsets = [0, 2, 0], sizes = [16, 32, 64], strides = [1, 1, 1]} : vector<16x34x64xbf16> to vector<16x32x64xbf16>
    %21 = tpu.concatenate %18, %19, %20 in 2 : vector<16x32x64xbf16>, vector<16x32x64xbf16>, vector<16x32x64xbf16> -> vector<16x32x192xbf16>
    %22 = vector.shape_cast %21 : vector<16x32x192xbf16> to vector<512x192xbf16>
    %c1 = arith.constant 1 : index
    %c0_14 = arith.constant 0 : index
    %c0_15 = arith.constant 0 : index
    %23 = vector.load %arg5[%c1, %c0_14, %c0_15] : memref<3x192x128xbf16, #tpu.memory_space<vmem>>, vector<1x192x128xbf16>
    %24 = vector.shape_cast %23 : vector<1x192x128xbf16> to vector<192x128xbf16>
    %cst_16 = arith.constant dense<0.000000e+00> : vector<512x128xf32>
    %25 = tpu.matmul %22, %24, %cst_16 {dimension_numbers = #tpu.dot_dimension_numbers<[1], [0], [0], [1], [0, 0, 1, 1], [], []>} : vector<512x192xbf16>, vector<192x128xbf16>, vector<512x128xf32> -> vector<512x128xf32>
    %26 = arith.addf %14, %25 : vector<512x128xf32>
    %27 = vector.extract_strided_slice %1 {offsets = [2, 0, 0], sizes = [14, 34, 64], strides = [1, 1, 1]} : vector<16x34x64xbf16> to vector<14x34x64xbf16>
    %28 = tpu.concatenate %27, %6 in 0 : vector<14x34x64xbf16>, vector<2x34x64xbf16> -> vector<16x34x64xbf16>
    %29 = vector.extract_strided_slice %28 {offsets = [0, 0, 0], sizes = [16, 32, 64], strides = [1, 1, 1]} : vector<16x34x64xbf16> to vector<16x32x64xbf16>
    %30 = vector.extract_strided_slice %28 {offsets = [0, 1, 0], sizes = [16, 32, 64], strides = [1, 1, 1]} : vector<16x34x64xbf16> to vector<16x32x64xbf16>
    %31 = vector.extract_strided_slice %28 {offsets = [0, 2, 0], sizes = [16, 32, 64], strides = [1, 1, 1]} : vector<16x34x64xbf16> to vector<16x32x64xbf16>
    %32 = tpu.concatenate %29, %30, %31 in 2 : vector<16x32x64xbf16>, vector<16x32x64xbf16>, vector<16x32x64xbf16> -> vector<16x32x192xbf16>
    %33 = vector.shape_cast %32 : vector<16x32x192xbf16> to vector<512x192xbf16>
    %c2 = arith.constant 2 : index
    %c0_17 = arith.constant 0 : index
    %c0_18 = arith.constant 0 : index
    %34 = vector.load %arg5[%c2, %c0_17, %c0_18] : memref<3x192x128xbf16, #tpu.memory_space<vmem>>, vector<1x192x128xbf16>
    %35 = vector.shape_cast %34 : vector<1x192x128xbf16> to vector<192x128xbf16>
    %cst_19 = arith.constant dense<0.000000e+00> : vector<512x128xf32>
    %36 = tpu.matmul %33, %35, %cst_19 {dimension_numbers = #tpu.dot_dimension_numbers<[1], [0], [0], [1], [0, 0, 1, 1], [], []>} : vector<512x192xbf16>, vector<192x128xbf16>, vector<512x128xf32> -> vector<512x128xf32>
    %37 = arith.addf %26, %36 : vector<512x128xf32>
    %c0_20 = arith.constant 0 : index
    %c0_21 = arith.constant 0 : index
    %38 = vector.load %arg6[%c0_20, %c0_21] : memref<1x128xf32, #tpu.memory_space<vmem>>, vector<1x128xf32>
    %39 = vector.broadcast %38 : vector<1x128xf32> to vector<512x128xf32>
    %40 = arith.addf %37, %39 : vector<512x128xf32>
    %41 = vector.shape_cast %40 : vector<512x128xf32> to vector<16x32x128xf32>
    %c0_22 = arith.constant 0 : index
    %c0_23 = arith.constant 0 : index
    %c0_24 = arith.constant 0 : index
    %c0_25 = arith.constant 0 : index
    %42 = vector.load %arg7[%c0_22, %c0_23, %c0_24, %c0_25] : memref<1x16x32x128xf32, #tpu.memory_space<vmem>>, vector<1x16x32x128xf32>
    %43 = vector.shape_cast %42 : vector<1x16x32x128xf32> to vector<16x32x128xf32>
    %44 = vector.shape_cast %41 : vector<16x32x128xf32> to vector<1x16x32x128xf32>
    tpu.vector_store %arg7[%c0_22, %c0_23, %c0_24, %c0_25], %44 {strides = array<i32>} : memref<1x16x32x128xf32, #tpu.memory_space<vmem>>, vector<1x16x32x128xf32>,
    return
  }
  func.func @transform_0(%arg0: i32, %arg1: i32) -> (i32, i32, i32, i32) {
    %c0_i32 = arith.constant 0 : i32
    %c0_i32_0 = arith.constant 0 : i32
    %c0_i32_1 = arith.constant 0 : i32
    return %arg0, %arg1, %c0_i32, %c0_i32_0 : i32, i32, i32, i32
  }
  func.func @transform_1(%arg0: i32, %arg1: i32) -> (i32, i32, i32, i32) {
    %c1_i32 = arith.constant 1 : i32
    %0 = arith.addi %arg1, %c1_i32 : i32
    %c16_i32 = arith.constant 16 : i32
    %1 = arith.muli %0, %c16_i32 : i32
    %c0_i32 = arith.constant 0 : i32
    %c0_i32_0 = arith.constant 0 : i32
    %c0_i32_1 = arith.constant 0 : i32
    return %arg0, %1, %c0_i32, %c0_i32_0 : i32, i32, i32, i32
  }
  func.func @transform_2(%arg0: i32, %arg1: i32) -> (i32, i32, i32, i32) {
    %c1_i32 = arith.constant 1 : i32
    %0 = arith.addi %arg1, %c1_i32 : i32
    %c16_i32 = arith.constant 16 : i32
    %1 = arith.muli %0, %c16_i32 : i32
    %c1_i32_0 = arith.constant 1 : i32
    %2 = arith.addi %1, %c1_i32_0 : i32
    %c0_i32 = arith.constant 0 : i32
    %c0_i32_1 = arith.constant 0 : i32
    %c0_i32_2 = arith.constant 0 : i32
    return %arg0, %2, %c0_i32, %c0_i32_1 : i32, i32, i32, i32
  }
  func.func @transform_3(%arg0: i32, %arg1: i32) -> (i32, i32, i32) {
    %c0_i32 = arith.constant 0 : i32
    %c0_i32_0 = arith.constant 0 : i32
    %c0_i32_1 = arith.constant 0 : i32
    %c0_i32_2 = arith.constant 0 : i32
    return %c0_i32, %c0_i32_0, %c0_i32_1 : i32, i32, i32
  }
  func.func @transform_4(%arg0: i32, %arg1: i32) -> (i32, i32) {
    %c0_i32 = arith.constant 0 : i32
    %c0_i32_0 = arith.constant 0 : i32
    %c0_i32_1 = arith.constant 0 : i32
    return %c0_i32, %c0_i32_0 : i32, i32
  }
  func.func @transform_5(%arg0: i32, %arg1: i32) -> (i32, i32, i32, i32) {
    %c0_i32 = arith.constant 0 : i32
    %c0_i32_0 = arith.constant 0 : i32
    %c0_i32_1 = arith.constant 0 : i32
    return %arg0, %arg1, %c0_i32, %c0_i32_0 : i32, i32, i32, i32
  }
}

</mosaic_0001>

<llo_original>
// kernel: hyper_synthesis_forward.3
$region0: #{hyper_synthesis_forward.3}
  #allocation0 [shape = 'u32[]', space=smem, size = 0x4, offset = 0x4, fixed_abs, tag = 'smem constant byte address 0x4 - core index']
  #allocation1 [shape = 'u32[72,128]{1,0:T(1,128)}', space=vmem, size = 0x9000, scoped, tag = 'internal scratch']
  %s0 = inlined_call_operand.vmem [shape: bf16[2,9,9,32], index: 0, kind: input, shape index: {}, may-alias: {0,1}]
  %s1 = inlined_call_operand.vmem [shape: bf16[2,9,9,32], index: 1, kind: input, shape index: {}, may-alias: {0,1}]
  %s2 = inlined_call_operand.vmem [shape: bf16[128,256], index: 2, kind: input, shape index: {}]
  %s3 = inlined_call_operand.vmem [shape: f32[1,256], index: 3, kind: input, shape index: {}]
  %s4 = inlined_call_operand.vmem [shape: bf16[2,8,16,128], index: 4, kind: output, shape index: {}]
  %s5 = sld [smem:[#allocation0]]
  $region49: #{hyper_synthesis_forward.3} parent=0
    _
  %s7 = ssub.s32 1, %s5
  %s8 = scalar_select 0, %s7, %s5
  loop: start=0, step=1, limit=4
  $region2: #{hyper_synthesis_forward.3} parent=0 // loop_pre_header
    _
  $region3: #{hyper_synthesis_forward.3} parent=0 // loop_header
    %s10 = sphi 0, %s14
    %p11 = scmp.ge.s32.totalorder %s10, 4
    %s17 = sphi 0, %s29
    %s18 = sphi 0, %s25
    %s19 = sphi 0, %s17
    %s20 = sphi 0, %s18
    %s21 = sphi 0, %s19
    %s22 = sphi 0, %s20
    %s34 = sphi 0, %s36
    %s37 = sphi 0, %s34
    %s38 = sphi 0, %s37
    %s54 = sphi 0, %s38
    %s66 = sphi 0, %s68
    %s69 = sphi 0, %s66
    %s70 = sphi 0, %s69
    %s86 = sphi 0, %s70
    %s90 = sphi 0, %s90
    %s92 = sphi 0, %s90
    %s93 = sphi 0, %s92
    %s107 = sphi 0, %s93
    %s111 = sphi 0, %s111
    %s113 = sphi 0, %s111
    %s114 = sphi 0, %s113
    %s128 = sphi 0, %s114
    %s136 = sphi 0, %s138
    %s139 = sphi 0, %s136
    %s140 = sphi 0, %s139
    %s156 = sphi 0, %s140
  $region4: #{hyper_synthesis_forward.3} parent=0 // loop_header_branch
    %13 = sbr.rel (%p11) target = $region8
  $region5: #{hyper_synthesis_forward.3} parent=0 // loop_body
    %s15 = ssub.s32 %s10, 1
    %s16 = ssub.s32 %s10, 2
    %s23 = sadd.s32 1, %s18
    %p24 = scmp.ge.s32.totalorder %s23, 1
    %s25 = scalar_select %p24, 0, %s23
    %s26 = sadd.s32 1, %s17
    %s27 = scalar_select %p24, %s26, %s17
    %p28 = scmp.ge.s32.totalorder %s27, 2
    %s29 = scalar_select %p28, 0, %s27
    %s30 = ssub.s32 %s17, %s29
    %s31 = ssub.s32 %s18, %s25
    %s32 = sor.u32 %s30, %s31
    %p33 = scmp.eq.s32.totalorder %s32, 0
    %s35 = sadd.s32 %s34, 1
    %s36 = scalar_select %p33, %s34, %s35
    %p39 = pneg %p33
    %p40 = scmp.eq.s32.totalorder %s10, 1
    %p41 = por %p39, %p40
    %p42 = scmp.ne.s32.totalorder %s34, %s37
    %p43 = scmp.eq.s32.totalorder %s10, 0
    %p44 = por %p42, %p43
    %p45 = scmp.ne.s32.totalorder %s34, %s37
    %p46 = scmp.eq.s32.totalorder %s15, 1
    %p47 = por %p45, %p46
    %p48 = scmp.ne.s32.totalorder %s37, %s38
    %p49 = scmp.eq.s32.totalorder %s15, 0
    %p50 = por %p48, %p49
    %p51 = scmp.ne.s32.totalorder %s37, %s38
    %p52 = scmp.eq.s32.totalorder %s16, 1
    %p53 = por %p51, %p52
    %p55 = scmp.ne.s32.totalorder %s38, %s54
    %p56 = scmp.eq.s32.totalorder %s16, 0
    %p57 = por %p55, %p56
    %s58 = sadd.s32 %s18, 1
    %s59 = smul.u32 %s58, 8
    %s60 = sadd.s32 %s25, 1
    %s61 = smul.u32 %s60, 8
    %s62 = ssub.s32 %s17, %s29
    %s63 = ssub.s32 %s59, %s61
    %s64 = sor.u32 %s62, %s63
    %p65 = scmp.eq.s32.totalorder %s64, 0
    %s67 = sadd.s32 %s66, 1
    %s68 = scalar_select %p65, %s66, %s67
    %p71 = pneg %p65
    %p72 = scmp.eq.s32.totalorder %s10, 1
    %p73 = por %p71, %p72
    %p74 = scmp.ne.s32.totalorder %s66, %s69
    %p75 = scmp.eq.s32.totalorder %s10, 0
    %p76 = por %p74, %p75
    %p77 = scmp.ne.s32.totalorder %s66, %s69
    %p78 = scmp.eq.s32.totalorder %s15, 1
    %p79 = por %p77, %p78
    %p80 = scmp.ne.s32.totalorder %s69, %s70
    %p81 = scmp.eq.s32.totalorder %s15, 0
    %p82 = por %p80, %p81
    %p83 = scmp.ne.s32.totalorder %s69, %s70
    %p84 = scmp.eq.s32.totalorder %s16, 1
    %p85 = por %p83, %p84
    %p87 = scmp.ne.s32.totalorder %s70, %s86
    %p88 = scmp.eq.s32.totalorder %s16, 0
    %p89 = por %p87, %p88
    %s91 = sadd.s32 %s90, 1
    %p94 = scmp.eq.s32.totalorder %s10, 1
    %p95 = scmp.ne.s32.totalorder %s90, %s92
    %p96 = scmp.eq.s32.totalorder %s10, 0
    %p97 = por %p95, %p96
    %p98 = scmp.ne.s32.totalorder %s90, %s92
    %p99 = scmp.eq.s32.totalorder %s15, 1
    %p100 = por %p98, %p99
    %p101 = scmp.ne.s32.totalorder %s92, %s93
    %p102 = scmp.eq.s32.totalorder %s15, 0
    %p103 = por %p101, %p102
    %p104 = scmp.ne.s32.totalorder %s92, %s93
    %p105 = scmp.eq.s32.totalorder %s16, 1
    %p106 = por %p104, %p105
    %p108 = scmp.ne.s32.totalorder %s93, %s107
    %p109 = scmp.eq.s32.totalorder %s16, 0
    %p110 = por %p108, %p109
    %s112 = sadd.s32 %s111, 1
    %p115 = scmp.eq.s32.totalorder %s10, 1
    %p116 = scmp.ne.s32.totalorder %s111, %s113
    %p117 = scmp.eq.s32.totalorder %s10, 0
    %p118 = por %p116, %p117
    %p119 = scmp.ne.s32.totalorder %s111, %s113
    %p120 = scmp.eq.s32.totalorder %s15, 1
    %p121 = por %p119, %p120
    %p122 = scmp.ne.s32.totalorder %s113, %s114
    %p123 = scmp.eq.s32.totalorder %s15, 0
    %p124 = por %p122, %p123
    %p125 = scmp.ne.s32.totalorder %s113, %s114
    %p126 = scmp.eq.s32.totalorder %s16, 1
    %p127 = por %p125, %p126
    %p129 = scmp.ne.s32.totalorder %s114, %s128
    %p130 = scmp.eq.s32.totalorder %s16, 0
    %p131 = por %p129, %p130
    %s132 = ssub.s32 %s17, %s29
    %s133 = ssub.s32 %s18, %s25
    %s134 = sor.u32 %s132, %s133
    %p135 = scmp.eq.s32.totalorder %s134, 0
    %s137 = sadd.s32 %s136, 1
    %s138 = scalar_select %p135, %s136, %s137
    %p141 = pneg %p135
    %p142 = scmp.eq.s32.totalorder %s10, 1
    %p143 = por %p141, %p142
    %p144 = scmp.ne.s32.totalorder %s136, %s139
    %p145 = scmp.eq.s32.totalorder %s10, 0
    %p146 = por %p144, %p145
    %p147 = scmp.ne.s32.totalorder %s136, %s139
    %p148 = scmp.eq.s32.totalorder %s15, 1
    %p149 = por %p147, %p148
    %p150 = scmp.ne.s32.totalorder %s139, %s140
    %p151 = scmp.eq.s32.totalorder %s15, 0
    %p152 = por %p150, %p151
    %p153 = scmp.ne.s32.totalorder %s139, %s140
    %p154 = scmp.eq.s32.totalorder %s16, 1
    %p155 = por %p153, %p154
    %p157 = scmp.ne.s32.totalorder %s140, %s156
    %p158 = scmp.eq.s32.totalorder %s16, 0
    %p159 = por %p157, %p158
    %p160 = scmp.le.s32.totalorder 1, %s10
    %p161 = scmp.lt.s32.totalorder %s10, 3
    %p162 = pnand %p160, %p161
    %p163 = pneg %p162
    // Predicated region
    $region9: #{hyper_synthesis_forward.3} parent=5 // pred_check
      _
    $region10: #{hyper_synthesis_forward.3} parent=5 // pred_check_branch
      %165 = sbr.rel (%p162) target = $region12
    $region11: #{hyper_synthesis_forward.3} parent=5 // pred_region
      %s166 = ssub.s32 %s10, 1
      // Predicated region
      $region13: #{hyper_synthesis_forward.3} parent=11 // pred_check
        %p167 = pneg %p103
      $region14: #{hyper_synthesis_forward.3} parent=11 // pred_check_branch
        %169 = sbr.rel (%p167) target = $region16
      $region15: #{hyper_synthesis_forward.3} parent=11 // pred_region
        _
      $region16: #{hyper_synthesis_forward.3} parent=11 // pred_fallthru
        _
      // Predicated region
      $region17: #{hyper_synthesis_forward.3} parent=11 // pred_check
        %p170 = pneg %p124
      $region18: #{hyper_synthesis_forward.3} parent=11 // pred_check_branch
        %172 = sbr.rel (%p170) target = $region20
      $region19: #{hyper_synthesis_forward.3} parent=11 // pred_region
        _
      $region20: #{hyper_synthesis_forward.3} parent=11 // pred_fallthru
        _
    $region12: #{hyper_synthesis_forward.3} parent=5 // pred_fallthru
      _
    %p173 = scmp.lt.s32.totalorder %s10, 2
    // Predicated region
    $region21: #{hyper_synthesis_forward.3} parent=5 // pred_check
      %p174 = pneg %p173
    $region22: #{hyper_synthesis_forward.3} parent=5 // pred_check_branch
      %176 = sbr.rel (%p174) target = $region24
    $region23: #{hyper_synthesis_forward.3} parent=5 // pred_region
      // Predicated region
      $region25: #{hyper_synthesis_forward.3} parent=23 // pred_check
        %p177 = pneg %p44
      $region26: #{hyper_synthesis_forward.3} parent=23 // pred_check_branch
        %179 = sbr.rel (%p177) target = $region28
      $region27: #{hyper_synthesis_forward.3} parent=23 // pred_region
        %s180 = smul.u32 8, %s18
        %s181 = ssub.s32 9, %s180
        %p182 = scmp.lt.s32.totalorder %s181, 8
        %s183 = scalar_select %p182, %s181, 8
        %s184 = smul.u32 4, %s183
        %s185 = smul.u32 %s184, 2
        %p186 = scmp.lt.s32.totalorder %s17, 1
        %s187 = scalar_select %p186, %s17, 1
        %p188 = scmp.lt.s32.totalorder %s180, 8
        %s189 = scalar_select %p188, %s180, 8
        %s190 = smul.addr %s189, 2
        %s191 = smul.addr %s187, 18
        %s192 = sadd.s32 %s190, %s191
        %s193 = smul.addr %s192, 4
        %s194 = scalar_lea.vmem %s0, %s193
        %s195 = smul.u32 8, %s18
        %s196 = ssub.s32 9, %s195
        %p197 = scmp.lt.s32.totalorder %s196, 8
        %s198 = scalar_select %p197, %s196, 8
        %s199 = smul.u32 4, %s198
        %s200 = smul.u32 %s199, 2
      $region28: #{hyper_synthesis_forward.3} parent=23 // pred_fallthru
        _
      // Predicated region
      $region29: #{hyper_synthesis_forward.3} parent=23 // pred_check
        %p201 = pneg %p76
      $region30: #{hyper_synthesis_forward.3} parent=23 // pred_check_branch
        %203 = sbr.rel (%p201) target = $region32
      $region31: #{hyper_synthesis_forward.3} parent=23 // pred_region
        %s204 = sadd.s32 %s18, 1
        %s205 = smul.u32 %s204, 8
        %p206 = scmp.lt.s32.totalorder %s17, 1
        %s207 = scalar_select %p206, %s17, 1
        %p208 = scmp.lt.s32.totalorder %s205, 8
        %s209 = scalar_select %p208, %s205, 8
        %s210 = smul.addr %s209, 2
        %s211 = smul.addr %s207, 18
        %s212 = sadd.s32 %s210, %s211
        %s213 = smul.addr %s212, 4
        %s214 = scalar_lea.vmem %s1, %s213
        %s215 = sadd.s32 %s18, 1
        %s216 = smul.u32 %s215, 8
      $region32: #{hyper_synthesis_forward.3} parent=23 // pred_fallthru
        _
    $region24: #{hyper_synthesis_forward.3} parent=5 // pred_fallthru
      _
    %p217 = scmp.le.s32.totalorder 1, %s10
    %p218 = scmp.lt.s32.totalorder %s10, 3
    %p219 = pnand %p217, %p218
    %p220 = pneg %p219
    // Predicated region
    $region33: #{hyper_synthesis_forward.3} parent=5 // pred_check
      _
    $region34: #{hyper_synthesis_forward.3} parent=5 // pred_check_branch
      %222 = sbr.rel (%p219) target = $region36
    $region35: #{hyper_synthesis_forward.3} parent=5 // pred_region
      %s223 = ssub.s32 %s10, 1
      %s224 = smul.u32 8, %s20
      %s225 = ssub.s32 9, %s224
      %p226 = scmp.lt.s32.totalorder %s225, 8
      %s227 = scalar_select %p226, %s225, 8
      %s228 = smul.u32 4, %s227
      %s229 = smul.u32 %s228, 2
      %p230 = scmp.lt.s32.totalorder %s19, 1
      %s231 = scalar_select %p230, %s19, 1
      %p232 = scmp.lt.s32.totalorder %s224, 8
      %s233 = scalar_select %p232, %s224, 8
      %s234 = smul.addr %s233, 2
      %s235 = smul.addr %s231, 18
      %s236 = sadd.s32 %s234, %s235
      %s237 = smul.addr %s236, 4
      %s238 = scalar_lea.vmem %s0, %s237
      %p239 = pneg %p50
      %p240 = pneg %p47
      %s241 = sadd.s32 %s20, 1
      %s242 = smul.u32 %s241, 8
      %p243 = scmp.lt.s32.totalorder %s19, 1
      %s244 = scalar_select %p243, %s19, 1
      %p245 = scmp.lt.s32.totalorder %s242, 8
      %s246 = scalar_select %p245, %s242, 8
      %s247 = smul.addr %s246, 2
      %s248 = smul.addr %s244, 18
      %s249 = sadd.s32 %s247, %s248
      %s250 = smul.addr %s249, 4
      %s251 = scalar_lea.vmem %s1, %s250
      %p252 = pneg %p82
      %p253 = pneg %p79
      %p254 = pneg %p103
      %p255 = pneg %p100
      %p256 = pneg %p124
      %p257 = pneg %p121
      %p258 = pneg %p152
      %p259 = pneg %p149
      %s260 = smul.u32 8, %s20
      %p261 = scmp.lt.s32.totalorder %s19, 1
      %s262 = scalar_select %p261, %s19, 1
      %p263 = scmp.lt.s32.totalorder %s260, 7
      %s264 = scalar_select %p263, %s260, 7
      %s265 = smul.addr %s264, 2
      %s266 = smul.addr %s262, 16
      %s267 = sadd.s32 %s265, %s266
      %s268 = smul.addr %s267, 4
      %s269 = scalar_lea.vmem %s4, %s268
      %s270 = smul.u32 8, %s20
      %s271 = ssub.s32 9, %s270
      %p272 = scmp.lt.s32.totalorder %s271, 8
      %s273 = scalar_select %p272, %s271, 8
      %s274 = smul.u32 4, %s273
      %s275 = smul.u32 %s274, 2
      %p276 = scmp.lt.s32.totalorder %s19, 1
      %s277 = scalar_select %p276, %s19, 1
      %p278 = scmp.lt.s32.totalorder %s270, 8
      %s279 = scalar_select %p278, %s270, 8
      %s280 = smul.addr %s279, 2
      %s281 = smul.addr %s277, 18
      %s282 = sadd.s32 %s280, %s281
      %s283 = smul.addr %s282, 4
      %s284 = scalar_lea.vmem %s0, %s283
      %s285 = smul.u32 8, %s20
      %s286 = ssub.s32 9, %s285
      %p287 = scmp.lt.s32.totalorder %s286, 8
      %s288 = scalar_select %p287, %s286, 8
      %s289 = smul.u32 4, %s288
      %s290 = smul.u32 %s289, 2
      %s291 = sadd.s32 %s20, 1
      %s292 = smul.u32 %s291, 8
      %p293 = scmp.lt.s32.totalorder %s19, 1
      %s294 = scalar_select %p293, %s19, 1
      %p295 = scmp.lt.s32.totalorder %s292, 8
      %s296 = scalar_select %p295, %s292, 8
      %s297 = smul.addr %s296, 2
      %s298 = smul.addr %s294, 18
      %s299 = sadd.s32 %s297, %s298
      %s300 = smul.addr %s299, 4
      %s301 = scalar_lea.vmem %s1, %s300
      %s302 = sadd.s32 %s20, 1
      %s303 = smul.u32 %s302, 8
      %s304 = smul.u32 8, %s20
      %p305 = scmp.lt.s32.totalorder %s19, 1
      %s306 = scalar_select %p305, %s19, 1
      %p307 = scmp.lt.s32.totalorder %s304, 7
      %s308 = scalar_select %p307, %s304, 7
      %s309 = smul.addr %s308, 2
      %s310 = smul.addr %s306, 16
      %s311 = sadd.s32 %s309, %s310
      %s312 = smul.addr %s311, 4
      %s313 = scalar_lea.vmem %s4, %s312
      %s314 = smul.u32 8, %s20
      %v315 = vld [vmem:[%s284] sm:$0xf]
      %v316 = vld [vmem:[%s284 + $0x4] sm:$0x1]
      %v317 = vld [vmem:[%s284 + $0x8] sm:$0xf]
      %v318 = vld [vmem:[%s284 + $0xc] sm:$0x1]
      %v319 = vld [vmem:[%s284 + $0x10] sm:$0xf]
      %v320 = vld [vmem:[%s284 + $0x14] sm:$0x1]
      %v321 = vld [vmem:[%s284 + $0x18] sm:$0xf]
      %v322 = vld [vmem:[%s284 + $0x1c] sm:$0x1]
      %v323 = vld [vmem:[%s284 + $0x20] sm:$0xf]
      %v324 = vld [vmem:[%s284 + $0x24] sm:$0x1]
      %v325 = vld [vmem:[%s284 + $0x28] sm:$0xf]
      %v326 = vld [vmem:[%s284 + $0x2c] sm:$0x1]
      %v327 = vld [vmem:[%s284 + $0x30] sm:$0xf]
      %v328 = vld [vmem:[%s284 + $0x34] sm:$0x1]
      %v329 = vld [vmem:[%s284 + $0x38] sm:$0xf]
      %v330 = vld [vmem:[%s284 + $0x3c] sm:$0x1]
      %v331 = vld [vmem:[%s301] sm:$0xf]
      %v332 = vld [vmem:[%s301 + $0x4] sm:$0x1]
      %v349 = vunpack.c.l.b16 %v315
      %v350 = vunpack.c.l.b16 %v316
      %v351 = vunpack.c.l.b16 %v317
      %v352 = vunpack.c.l.b16 %v318
      %v353 = vunpack.c.l.b16 %v319
      %v354 = vunpack.c.l.b16 %v320
      %v355 = vunpack.c.l.b16 %v321
      %v356 = vunpack.c.l.b16 %v322
      %v357 = vunpack.c.l.b16 %v323
      %v358 = vunpack.c.l.b16 %v324
      %v359 = vunpack.c.l.b16 %v325
      %v360 = vunpack.c.l.b16 %v326
      %v361 = vunpack.c.l.b16 %v327
      %v362 = vunpack.c.l.b16 %v328
      %v363 = vunpack.c.l.b16 %v329
      %v364 = vunpack.c.l.b16 %v330
      %v365 = vpack.c.b16 %v350, %v349
      %v366 = vpack.c.b16 %v352, %v351
      %v367 = vpack.c.b16 %v354, %v353
      %v368 = vpack.c.b16 %v356, %v355
      %v369 = vpack.c.b16 %v358, %v357
      %v370 = vpack.c.b16 %v360, %v359
      %v371 = vpack.c.b16 %v362, %v361
      %v372 = vpack.c.b16 %v364, %v363
      %v374 = vshrl.u32 %v365, 16
      %v376 = vshll.u32 %v365, 16
      %v378 = vrot.slane %v376, 1
      %v379 = vor.u32 %v374, %v378
      %v381 = vshrl.u32 %v366, 16
      %v383 = vshll.u32 %v366, 16
      %v385 = vrot.slane %v383, 1
      %v386 = vor.u32 %v381, %v385
      %v388 = vshrl.u32 %v367, 16
      %v390 = vshll.u32 %v367, 16
      %v392 = vrot.slane %v390, 1
      %v393 = vor.u32 %v388, %v392
      %v395 = vshrl.u32 %v368, 16
      %v397 = vshll.u32 %v368, 16
      %v399 = vrot.slane %v397, 1
      %v400 = vor.u32 %v395, %v399
      %v402 = vshrl.u32 %v369, 16
      %v404 = vshll.u32 %v369, 16
      %v406 = vrot.slane %v404, 1
      %v407 = vor.u32 %v402, %v406
      %v409 = vshrl.u32 %v370, 16
      %v411 = vshll.u32 %v370, 16
      %v413 = vrot.slane %v411, 1
      %v414 = vor.u32 %v409, %v413
      %v416 = vshrl.u32 %v371, 16
      %v418 = vshll.u32 %v371, 16
      %v420 = vrot.slane %v418, 1
      %v421 = vor.u32 %v416, %v420
      %v423 = vshrl.u32 %v372, 16
      %v425 = vshll.u32 %v372, 16
      %v427 = vrot.slane %v425, 1
      %v428 = vor.u32 %v423, %v427
      %429 = vrot.lane.b32.xlu0 %v379, 32
      %v430 = vpop.permute.xlu0 %429
      %431 = vrot.lane.b32.xlu0 %v386, 32
      %v432 = vpop.permute.xlu0 %431
      %433 = vrot.lane.b32.xlu0 %v393, 32
      %v434 = vpop.permute.xlu0 %433
      %435 = vrot.lane.b32.xlu0 %v400, 32
      %v436 = vpop.permute.xlu0 %435
      %437 = vrot.lane.b32.xlu0 %v407, 32
      %v438 = vpop.permute.xlu0 %437
      %439 = vrot.lane.b32.xlu0 %v414, 32
      %v440 = vpop.permute.xlu0 %439
      %441 = vrot.lane.b32.xlu0 %v421, 32
      %v442 = vpop.permute.xlu0 %441
      %443 = vrot.lane.b32.xlu0 %v428, 32
      %v444 = vpop.permute.xlu0 %443
      %v446 = vunpack.c.l.b16 %v331
      %v447 = vpack.c.b16 %v351, %v351
      %v448 = vpack.c.b16 %v353, %v353
      %v449 = vpack.c.b16 %v355, %v355
      %v450 = vpack.c.b16 %v357, %v357
      %v451 = vpack.c.b16 %v359, %v359
      %v452 = vpack.c.b16 %v361, %v361
      %v453 = vpack.c.b16 %v363, %v363
      %v454 = vpack.c.b16 %v446, %v446
      %455 = vrot.lane.b32.xlu0 %v447, 64
      %v456 = vpop.permute.xlu0 %455
      %457 = vrot.lane.b32.xlu0 %v448, 64
      %v458 = vpop.permute.xlu0 %457
      %459 = vrot.lane.b32.xlu0 %v449, 64
      %v460 = vpop.permute.xlu0 %459
      %461 = vrot.lane.b32.xlu0 %v450, 64
      %v462 = vpop.permute.xlu0 %461
      %463 = vrot.lane.b32.xlu0 %v451, 64
      %v464 = vpop.permute.xlu0 %463
      %465 = vrot.lane.b32.xlu0 %v452, 64
      %v466 = vpop.permute.xlu0 %465
      %467 = vrot.lane.b32.xlu0 %v453, 64
      %v468 = vpop.permute.xlu0 %467
      %469 = vrot.lane.b32.xlu0 %v454, 64
      %v470 = vpop.permute.xlu0 %469
      %v472 = vunpack.c.l.b16 %v332
      %v473 = vpack.c.b16 %v472, %v446
      %v475 = vshrl.u32 %v473, 16
      %v477 = vshll.u32 %v473, 16
      %v479 = vrot.slane %v477, 1
      %v480 = vor.u32 %v475, %v479
      %481 = vrot.lane.b32.xlu0 %v386, 96
      %v482 = vpop.permute.xlu0 %481
      %483 = vrot.lane.b32.xlu0 %v393, 96
      %v484 = vpop.permute.xlu0 %483
      %485 = vrot.lane.b32.xlu0 %v400, 96
      %v486 = vpop.permute.xlu0 %485
      %487 = vrot.lane.b32.xlu0 %v407, 96
      %v488 = vpop.permute.xlu0 %487
      %489 = vrot.lane.b32.xlu0 %v414, 96
      %v490 = vpop.permute.xlu0 %489
      %491 = vrot.lane.b32.xlu0 %v421, 96
      %v492 = vpop.permute.xlu0 %491
      %493 = vrot.lane.b32.xlu0 %v428, 96
      %v494 = vpop.permute.xlu0 %493
      %495 = vrot.lane.b32.xlu0 %v480, 96
      %v496 = vpop.permute.xlu0 %495
      %vm497 = vcmask 261120
      %v500 = vsel %vm497, %v315, %v430
      %v503 = vsel %vm497, %v317, %v432
      %v506 = vsel %vm497, %v319, %v434
      %v509 = vsel %vm497, %v321, %v436
      %v512 = vsel %vm497, %v323, %v438
      %v515 = vsel %vm497, %v325, %v440
      %v518 = vsel %vm497, %v327, %v442
      %v521 = vsel %vm497, %v329, %v444
      %vm522 = vcmask 523264
      %v524 = vsel %vm522, %v500, %v456
      %v526 = vsel %vm522, %v503, %v458
      %v528 = vsel %vm522, %v506, %v460
      %v530 = vsel %vm522, %v509, %v462
      %v532 = vsel %vm522, %v512, %v464
      %v534 = vsel %vm522, %v515, %v466
      %v536 = vsel %vm522, %v518, %v468
      %v538 = vsel %vm522, %v521, %v470
      %vm539 = vcmask 785408
      %v541 = vsel %vm539, %v524, %v482
      %v543 = vsel %vm539, %v526, %v484
      %v545 = vsel %vm539, %v528, %v486
      %v547 = vsel %vm539, %v530, %v488
      %v549 = vsel %vm539, %v532, %v490
      %v551 = vsel %vm539, %v534, %v492
      %v553 = vsel %vm539, %v536, %v494
      %v555 = vsel %vm539, %v538, %v496
      %v556 = vld [vmem:[%s2] sm:$0xff]
      %v557 = vld [vmem:[%s2 + $0x8] sm:$0xff]
      %v558 = vld [vmem:[%s2 + $0x10] sm:$0xff]
      %v559 = vld [vmem:[%s2 + $0x18] sm:$0xff]
      %v560 = vld [vmem:[%s2 + $0x20] sm:$0xff]
      %v561 = vld [vmem:[%s2 + $0x28] sm:$0xff]
      %v562 = vld [vmem:[%s2 + $0x30] sm:$0xff]
      %v563 = vld [vmem:[%s2 + $0x38] sm:$0xff]
      %v564 = vld [vmem:[%s2 + $0x40] sm:$0xff]
      %v565 = vld [vmem:[%s2 + $0x48] sm:$0xff]
      %v566 = vld [vmem:[%s2 + $0x50] sm:$0xff]
      %v567 = vld [vmem:[%s2 + $0x58] sm:$0xff]
      %v568 = vld [vmem:[%s2 + $0x60] sm:$0xff]
      %v569 = vld [vmem:[%s2 + $0x68] sm:$0xff]
      %v570 = vld [vmem:[%s2 + $0x70] sm:$0xff]
      %v571 = vld [vmem:[%s2 + $0x78] sm:$0xff]
      %v572 = vld [vmem:[%s3] sm:$0x3]
      %v574 = vperm.slane %v572, 0
      %v575 = vperm.slane %v572, 1
      %v586 = vunpack.c.l.b16 %v541
      %v587 = vunpack.c.l.b16 %v543
      %v588 = vunpack.c.l.b16 %v545
      %v589 = vunpack.c.l.b16 %v547
      %v590 = vunpack.c.l.b16 %v549
      %v591 = vunpack.c.l.b16 %v551
      %v592 = vunpack.c.l.b16 %v553
      %v593 = vunpack.c.l.b16 %v555
      %v594 = vpack.c.b16 %v587, %v586
      %v595 = vpack.c.b16 %v589, %v588
      %v596 = vpack.c.b16 %v591, %v590
      %v597 = vpack.c.b16 %v593, %v592
      %v618 = vunpack.c.l.b16 %v556
      %v619 = vunpack.c.h.b16 %v556
      %v620 = vunpack.c.l.b16 %v557
      %v621 = vunpack.c.h.b16 %v557
      %v622 = vunpack.c.l.b16 %v558
      %v623 = vunpack.c.h.b16 %v558
      %v624 = vunpack.c.l.b16 %v559
      %v625 = vunpack.c.h.b16 %v559
      %v626 = vunpack.c.l.b16 %v560
      %v627 = vunpack.c.h.b16 %v560
      %v628 = vunpack.c.l.b16 %v561
      %v629 = vunpack.c.h.b16 %v561
      %v630 = vunpack.c.l.b16 %v562
      %v631 = vunpack.c.h.b16 %v562
      %v632 = vunpack.c.l.b16 %v563
      %v633 = vunpack.c.h.b16 %v563
      %v634 = vunpack.c.l.b16 %v564
      %v635 = vunpack.c.h.b16 %v564
      %v636 = vunpack.c.l.b16 %v565
      %v637 = vunpack.c.h.b16 %v565
      %v638 = vunpack.c.l.b16 %v566
      %v639 = vunpack.c.h.b16 %v566
      %v640 = vunpack.c.l.b16 %v567
      %v641 = vunpack.c.h.b16 %v567
      %v642 = vunpack.c.l.b16 %v568
      %v643 = vunpack.c.h.b16 %v568
      %v644 = vunpack.c.l.b16 %v569
      %v645 = vunpack.c.h.b16 %v569
      %v646 = vunpack.c.l.b16 %v570
      %v647 = vunpack.c.h.b16 %v570
      %v648 = vunpack.c.l.b16 %v571
      %v649 = vunpack.c.h.b16 %v571
      %v650 = vpack.c.b16 %v620, %v618
      %v651 = vpack.c.b16 %v621, %v619
      %v652 = vpack.c.b16 %v624, %v622
      %v653 = vpack.c.b16 %v625, %v623
      %v654 = vpack.c.b16 %v628, %v626
      %v655 = vpack.c.b16 %v629, %v627
      %v656 = vpack.c.b16 %v632, %v630
      %v657 = vpack.c.b16 %v633, %v631
      %v658 = vpack.c.b16 %v636, %v634
      %v659 = vpack.c.b16 %v637, %v635
      %v660 = vpack.c.b16 %v640, %v638
      %v661 = vpack.c.b16 %v641, %v639
      %v662 = vpack.c.b16 %v644, %v642
      %v663 = vpack.c.b16 %v645, %v643
      %v664 = vpack.c.b16 %v648, %v646
      %v665 = vpack.c.b16 %v649, %v647
      %682 = vmatpush.bf16.msra.mxu0 %v664
      %683 = vmatpush.bf16.msra.mxu0 %v662
      %684 = vmatpush.bf16.msra.mxu0 %v660
      %685 = vmatpush.bf16.msra.mxu0 %v658
      %686 = vmatpush.bf16.msra.mxu0 %v656
      %687 = vmatpush.bf16.msra.mxu0 %v654
      %688 = vmatpush.bf16.msra.mxu0 %v652
      %689 = vmatpush.bf16.msra.mxu0 %v650
      %690 = vmatmul.bf16.gmra.mxu0 %v594
      %v691 = vpop.f32.mrf.mxu0
      %v692 = vadd.f32 %v574, %v691
      %v693 = vpop.f32.mrf.mxu0
      %v694 = vadd.f32 %v574, %v693
      %695 = vmatmul.bf16.gmra.mxu0 %v595
      %v696 = vpop.f32.mrf.mxu0
      %v697 = vadd.f32 %v574, %v696
      %v698 = vpop.f32.mrf.mxu0
      %v699 = vadd.f32 %v574, %v698
      %700 = vmatmul.bf16.gmra.mxu0 %v596
      %v701 = vpop.f32.mrf.mxu0
      %v702 = vadd.f32 %v574, %v701
      %v703 = vpop.f32.mrf.mxu0
      %v704 = vadd.f32 %v574, %v703
      %705 = vmatmul.bf16.gmra.mxu0 %v597
      %v706 = vpop.f32.mrf.mxu0
      %v707 = vadd.f32 %v574, %v706
      %v708 = vpop.f32.mrf.mxu0
      %v709 = vadd.f32 %v574, %v708
      %710 = vdwg.mxu0
      %711 = vmatpush.bf16.msra.mxu0 %v665
      %712 = vmatpush.bf16.msra.mxu0 %v663
      %713 = vmatpush.bf16.msra.mxu0 %v661
      %714 = vmatpush.bf16.msra.mxu0 %v659
      %715 = vmatpush.bf16.msra.mxu0 %v657
      %716 = vmatpush.bf16.msra.mxu0 %v655
      %717 = vmatpush.bf16.msra.mxu0 %v653
      %718 = vmatpush.bf16.msra.mxu0 %v651
      %719 = vmatmul.bf16.gmra.mxu0 %v594
      %v720 = vpop.f32.mrf.mxu0
      %v721 = vadd.f32 %v575, %v720
      %v722 = vpop.f32.mrf.mxu0
      %v723 = vadd.f32 %v575, %v722
      %724 = vmatmul.bf16.gmra.mxu0 %v595
      %v725 = vpop.f32.mrf.mxu0
      %v726 = vadd.f32 %v575, %v725
      %v727 = vpop.f32.mrf.mxu0
      %v728 = vadd.f32 %v575, %v727
      %729 = vmatmul.bf16.gmra.mxu0 %v596
      %v730 = vpop.f32.mrf.mxu0
      %v731 = vadd.f32 %v575, %v730
      %v732 = vpop.f32.mrf.mxu0
      %v733 = vadd.f32 %v575, %v732
      %734 = vmatmul.bf16.gmra.mxu0 %v597
      %v735 = vpop.f32.mrf.mxu0
      %v736 = vadd.f32 %v575, %v735
      %v737 = vpop.f32.mrf.mxu0
      %v738 = vadd.f32 %v575, %v737
      %739 = vdwg.mxu0
      %v740 = vmax.f32 %v692, 0.0
      %v741 = vmax.f32 %v721, 0.0
      %v742 = vmax.f32 %v694, 0.0
      %v743 = vmax.f32 %v723, 0.0
      %v744 = vmax.f32 %v697, 0.0
      %v745 = vmax.f32 %v726, 0.0
      %v746 = vmax.f32 %v699, 0.0
      %v747 = vmax.f32 %v728, 0.0
      %v748 = vmax.f32 %v702, 0.0
      %v749 = vmax.f32 %v731, 0.0
      %v750 = vmax.f32 %v704, 0.0
      %v751 = vmax.f32 %v733, 0.0
      %v752 = vmax.f32 %v707, 0.0
      %v753 = vmax.f32 %v736, 0.0
      %v754 = vmax.f32 %v709, 0.0
      %v755 = vmax.f32 %v738, 0.0
      %v756 = vpack.c.bf16 %v740, %v740
      %v757 = vpack.c.bf16 %v742, %v742
      %v758 = vpack.c.bf16 %v744, %v744
      %v759 = vpack.c.bf16 %v746, %v746
      %v760 = vpack.c.bf16 %v748, %v748
      %v761 = vpack.c.bf16 %v750, %v750
      %v762 = vpack.c.bf16 %v752, %v752
      %v763 = vpack.c.bf16 %v754, %v754
      %764 = vst [vmem:[%s313] sm:$0xf] %v756
      %765 = vst [vmem:[%s313 + $0x8] sm:$0xf] %v757
      %766 = vst [vmem:[%s313 + $0x10] sm:$0xf] %v758
      %767 = vst [vmem:[%s313 + $0x18] sm:$0xf] %v759
      %768 = vst [vmem:[%s313 + $0x20] sm:$0xf] %v760
      %769 = vst [vmem:[%s313 + $0x28] sm:$0xf] %v761
      %770 = vst [vmem:[%s313 + $0x30] sm:$0xf] %v762
      %771 = vst [vmem:[%s313 + $0x38] sm:$0xf] %v763
      %v772 = vpack.c.bf16 %v741, %v741
      %v773 = vpack.c.bf16 %v743, %v743
      %v774 = vpack.c.bf16 %v745, %v745
      %v775 = vpack.c.bf16 %v747, %v747
      %v776 = vpack.c.bf16 %v749, %v749
      %v777 = vpack.c.bf16 %v751, %v751
      %v778 = vpack.c.bf16 %v753, %v753
      %v779 = vpack.c.bf16 %v755, %v755
      %780 = vst [vmem:[%s313 + $0x4] sm:$0xf] %v772
      %781 = vst [vmem:[%s313 + $0xc] sm:$0xf] %v773
      %782 = vst [vmem:[%s313 + $0x14] sm:$0xf] %v774
      %783 = vst [vmem:[%s313 + $0x1c] sm:$0xf] %v775
      %784 = vst [vmem:[%s313 + $0x24] sm:$0xf] %v776
      %785 = vst [vmem:[%s313 + $0x2c] sm:$0xf] %v777
      %786 = vst [vmem:[%s313 + $0x34] sm:$0xf] %v778
      %787 = vst [vmem:[%s313 + $0x3c] sm:$0xf] %v779
      %s788 = smul.u32 8, %s20
      %p789 = scmp.lt.s32.totalorder %s19, 1
      %s790 = scalar_select %p789, %s19, 1
      %p791 = scmp.lt.s32.totalorder %s788, 7
      %s792 = scalar_select %p791, %s788, 7
      %s793 = smul.addr %s792, 2
      %s794 = smul.addr %s790, 16
      %s795 = sadd.s32 %s793, %s794
      %s796 = smul.addr %s795, 4
      %s797 = scalar_lea.vmem %s4, %s796
      // Predicated region
      $region37: #{hyper_synthesis_forward.3} parent=35 // pred_check
        %p798 = pneg %p149
      $region38: #{hyper_synthesis_forward.3} parent=35 // pred_check_branch
        %800 = sbr.rel (%p798) target = $region40
      $region39: #{hyper_synthesis_forward.3} parent=35 // pred_region
        %s801 = smul.u32 8, %s20
      $region40: #{hyper_synthesis_forward.3} parent=35 // pred_fallthru
        _
    $region36: #{hyper_synthesis_forward.3} parent=5 // pred_fallthru
      _
    %p802 = scmp.le.s32.totalorder 2, %s10
    // Predicated region
    $region41: #{hyper_synthesis_forward.3} parent=5 // pred_check
      %p803 = pneg %p802
    $region42: #{hyper_synthesis_forward.3} parent=5 // pred_check_branch
      %805 = sbr.rel (%p803) target = $region44
    $region43: #{hyper_synthesis_forward.3} parent=5 // pred_region
      %s806 = ssub.s32 %s10, 2
      // Predicated region
      $region45: #{hyper_synthesis_forward.3} parent=43 // pred_check
        %p807 = pneg %p155
      $region46: #{hyper_synthesis_forward.3} parent=43 // pred_check_branch
        %809 = sbr.rel (%p807) target = $region48
      $region47: #{hyper_synthesis_forward.3} parent=43 // pred_region
        %s810 = smul.u32 8, %s22
        %p811 = scmp.lt.s32.totalorder %s21, 1
        %s812 = scalar_select %p811, %s21, 1
        %p813 = scmp.lt.s32.totalorder %s810, 7
        %s814 = scalar_select %p813, %s810, 7
        %s815 = smul.addr %s814, 2
        %s816 = smul.addr %s812, 16
        %s817 = sadd.s32 %s815, %s816
        %s818 = smul.addr %s817, 4
        %s819 = scalar_lea.vmem %s4, %s818
      $region48: #{hyper_synthesis_forward.3} parent=43 // pred_fallthru
        _
    $region44: #{hyper_synthesis_forward.3} parent=5 // pred_fallthru
      _
  $region6: #{hyper_synthesis_forward.3} parent=0 // loop_footer
    %s14 = sadd.s32 1, %s10
  $region7: #{hyper_synthesis_forward.3} parent=0 // loop_footer_branch
    %9 = sbr.rel target = $region3
  $region8: #{hyper_synthesis_forward.3} parent=0 // loop_exit
    _

// kernel: hyper_synthesis_forward.4
$region0: #{hyper_synthesis_forward.4}
  #allocation0 [shape = 'u32[]', space=smem, size = 0x4, offset = 0x4, fixed_abs, tag = 'smem constant byte address 0x4 - core index']
  #allocation1 [shape = 'u32[72,128]{1,0:T(1,128)}', space=vmem, size = 0x9000, scoped, tag = 'internal scratch']
  %s0 = inlined_call_operand.vmem [shape: bf16[2,17,17,64], index: 0, kind: input, shape index: {}, may-alias: {0,1}]
  %s1 = inlined_call_operand.vmem [shape: bf16[2,17,17,64], index: 1, kind: input, shape index: {}, may-alias: {0,1}]
  %s2 = inlined_call_operand.vmem [shape: bf16[256,256], index: 2, kind: input, shape index: {}]
  %s3 = inlined_call_operand.vmem [shape: f32[1,256], index: 3, kind: input, shape index: {}]
  %s4 = inlined_call_operand.vmem [shape: bf16[2,16,32,128], index: 4, kind: output, shape index: {}]
  %s5 = sld [smem:[#allocation0]]
  $region49: #{hyper_synthesis_forward.4} parent=0
    _
  %s7 = ssub.s32 1, %s5
  %s8 = scalar_select 0, %s7, %s5
  loop: start=0, step=1, limit=4
  $region2: #{hyper_synthesis_forward.4} parent=0 // loop_pre_header
    _
  $region3: #{hyper_synthesis_forward.4} parent=0 // loop_header
    %s10 = sphi 0, %s14
    %p11 = scmp.ge.s32.totalorder %s10, 4
    %s17 = sphi 0, %s29
    %s18 = sphi 0, %s25
    %s19 = sphi 0, %s17
    %s20 = sphi 0, %s18
    %s21 = sphi 0, %s19
    %s22 = sphi 0, %s20
    %s34 = sphi 0, %s36
    %s37 = sphi 0, %s34
    %s38 = sphi 0, %s37
    %s54 = sphi 0, %s38
    %s66 = sphi 0, %s68
    %s69 = sphi 0, %s66
    %s70 = sphi 0, %s69
    %s86 = sphi 0, %s70
    %s90 = sphi 0, %s90
    %s92 = sphi 0, %s90
    %s93 = sphi 0, %s92
    %s107 = sphi 0, %s93
    %s111 = sphi 0, %s111
    %s113 = sphi 0, %s111
    %s114 = sphi 0, %s113
    %s128 = sphi 0, %s114
    %s136 = sphi 0, %s138
    %s139 = sphi 0, %s136
    %s140 = sphi 0, %s139
    %s156 = sphi 0, %s140
  $region4: #{hyper_synthesis_forward.4} parent=0 // loop_header_branch
    %13 = sbr.rel (%p11) target = $region8
  $region5: #{hyper_synthesis_forward.4} parent=0 // loop_body
    %s15 = ssub.s32 %s10, 1
    %s16 = ssub.s32 %s10, 2
    %s23 = sadd.s32 1, %s18
    %p24 = scmp.ge.s32.totalorder %s23, 1
    %s25 = scalar_select %p24, 0, %s23
    %s26 = sadd.s32 1, %s17
    %s27 = scalar_select %p24, %s26, %s17
    %p28 = scmp.ge.s32.totalorder %s27, 2
    %s29 = scalar_select %p28, 0, %s27
    %s30 = ssub.s32 %s17, %s29
    %s31 = ssub.s32 %s18, %s25
    %s32 = sor.u32 %s30, %s31
    %p33 = scmp.eq.s32.totalorder %s32, 0
    %s35 = sadd.s32 %s34, 1
    %s36 = scalar_select %p33, %s34, %s35
    %p39 = pneg %p33
    %p40 = scmp.eq.s32.totalorder %s10, 1
    %p41 = por %p39, %p40
    %p42 = scmp.ne.s32.totalorder %s34, %s37
    %p43 = scmp.eq.s32.totalorder %s10, 0
    %p44 = por %p42, %p43
    %p45 = scmp.ne.s32.totalorder %s34, %s37
    %p46 = scmp.eq.s32.totalorder %s15, 1
    %p47 = por %p45, %p46
    %p48 = scmp.ne.s32.totalorder %s37, %s38
    %p49 = scmp.eq.s32.totalorder %s15, 0
    %p50 = por %p48, %p49
    %p51 = scmp.ne.s32.totalorder %s37, %s38
    %p52 = scmp.eq.s32.totalorder %s16, 1
    %p53 = por %p51, %p52
    %p55 = scmp.ne.s32.totalorder %s38, %s54
    %p56 = scmp.eq.s32.totalorder %s16, 0
    %p57 = por %p55, %p56
    %s58 = sadd.s32 %s18, 1
    %s59 = smul.u32 %s58, 16
    %s60 = sadd.s32 %s25, 1
    %s61 = smul.u32 %s60, 16
    %s62 = ssub.s32 %s17, %s29
    %s63 = ssub.s32 %s59, %s61
    %s64 = sor.u32 %s62, %s63
    %p65 = scmp.eq.s32.totalorder %s64, 0
    %s67 = sadd.s32 %s66, 1
    %s68 = scalar_select %p65, %s66, %s67
    %p71 = pneg %p65
    %p72 = scmp.eq.s32.totalorder %s10, 1
    %p73 = por %p71, %p72
    %p74 = scmp.ne.s32.totalorder %s66, %s69
    %p75 = scmp.eq.s32.totalorder %s10, 0
    %p76 = por %p74, %p75
    %p77 = scmp.ne.s32.totalorder %s66, %s69
    %p78 = scmp.eq.s32.totalorder %s15, 1
    %p79 = por %p77, %p78
    %p80 = scmp.ne.s32.totalorder %s69, %s70
    %p81 = scmp.eq.s32.totalorder %s15, 0
    %p82 = por %p80, %p81
    %p83 = scmp.ne.s32.totalorder %s69, %s70
    %p84 = scmp.eq.s32.totalorder %s16, 1
    %p85 = por %p83, %p84
    %p87 = scmp.ne.s32.totalorder %s70, %s86
    %p88 = scmp.eq.s32.totalorder %s16, 0
    %p89 = por %p87, %p88
    %s91 = sadd.s32 %s90, 1
    %p94 = scmp.eq.s32.totalorder %s10, 1
    %p95 = scmp.ne.s32.totalorder %s90, %s92
    %p96 = scmp.eq.s32.totalorder %s10, 0
    %p97 = por %p95, %p96
    %p98 = scmp.ne.s32.totalorder %s90, %s92
    %p99 = scmp.eq.s32.totalorder %s15, 1
    %p100 = por %p98, %p99
    %p101 = scmp.ne.s32.totalorder %s92, %s93
    %p102 = scmp.eq.s32.totalorder %s15, 0
    %p103 = por %p101, %p102
    %p104 = scmp.ne.s32.totalorder %s92, %s93
    %p105 = scmp.eq.s32.totalorder %s16, 1
    %p106 = por %p104, %p105
    %p108 = scmp.ne.s32.totalorder %s93, %s107
    %p109 = scmp.eq.s32.totalorder %s16, 0
    %p110 = por %p108, %p109
    %s112 = sadd.s32 %s111, 1
    %p115 = scmp.eq.s32.totalorder %s10, 1
    %p116 = scmp.ne.s32.totalorder %s111, %s113
    %p117 = scmp.eq.s32.totalorder %s10, 0
    %p118 = por %p116, %p117
    %p119 = scmp.ne.s32.totalorder %s111, %s113
    %p120 = scmp.eq.s32.totalorder %s15, 1
    %p121 = por %p119, %p120
    %p122 = scmp.ne.s32.totalorder %s113, %s114
    %p123 = scmp.eq.s32.totalorder %s15, 0
    %p124 = por %p122, %p123
    %p125 = scmp.ne.s32.totalorder %s113, %s114
    %p126 = scmp.eq.s32.totalorder %s16, 1
    %p127 = por %p125, %p126
    %p129 = scmp.ne.s32.totalorder %s114, %s128
    %p130 = scmp.eq.s32.totalorder %s16, 0
    %p131 = por %p129, %p130
    %s132 = ssub.s32 %s17, %s29
    %s133 = ssub.s32 %s18, %s25
    %s134 = sor.u32 %s132, %s133
    %p135 = scmp.eq.s32.totalorder %s134, 0
    %s137 = sadd.s32 %s136, 1
    %s138 = scalar_select %p135, %s136, %s137
    %p141 = pneg %p135
    %p142 = scmp.eq.s32.totalorder %s10, 1
    %p143 = por %p141, %p142
    %p144 = scmp.ne.s32.totalorder %s136, %s139
    %p145 = scmp.eq.s32.totalorder %s10, 0
    %p146 = por %p144, %p145
    %p147 = scmp.ne.s32.totalorder %s136, %s139
    %p148 = scmp.eq.s32.totalorder %s15, 1
    %p149 = por %p147, %p148
    %p150 = scmp.ne.s32.totalorder %s139, %s140
    %p151 = scmp.eq.s32.totalorder %s15, 0
    %p152 = por %p150, %p151
    %p153 = scmp.ne.s32.totalorder %s139, %s140
    %p154 = scmp.eq.s32.totalorder %s16, 1
    %p155 = por %p153, %p154
    %p157 = scmp.ne.s32.totalorder %s140, %s156
    %p158 = scmp.eq.s32.totalorder %s16, 0
    %p159 = por %p157, %p158
    %p160 = scmp.le.s32.totalorder 1, %s10
    %p161 = scmp.lt.s32.totalorder %s10, 3
    %p162 = pnand %p160, %p161
    %p163 = pneg %p162
    // Predicated region
    $region9: #{hyper_synthesis_forward.4} parent=5 // pred_check
      _
    $region10: #{hyper_synthesis_forward.4} parent=5 // pred_check_branch
      %165 = sbr.rel (%p162) target = $region12
    $region11: #{hyper_synthesis_forward.4} parent=5 // pred_region
      %s166 = ssub.s32 %s10, 1
      // Predicated region
      $region13: #{hyper_synthesis_forward.4} parent=11 // pred_check
        %p167 = pneg %p103
      $region14: #{hyper_synthesis_forward.4} parent=11 // pred_check_branch
        %169 = sbr.rel (%p167) target = $region16
      $region15: #{hyper_synthesis_forward.4} parent=11 // pred_region
        _
      $region16: #{hyper_synthesis_forward.4} parent=11 // pred_fallthru
        _
      // Predicated region
      $region17: #{hyper_synthesis_forward.4} parent=11 // pred_check
        %p170 = pneg %p124
      $region18: #{hyper_synthesis_forward.4} parent=11 // pred_check_branch
        %172 = sbr.rel (%p170) target = $region20
      $region19: #{hyper_synthesis_forward.4} parent=11 // pred_region
        _
      $region20: #{hyper_synthesis_forward.4} parent=11 // pred_fallthru
        _
    $region12: #{hyper_synthesis_forward.4} parent=5 // pred_fallthru
      _
    %p173 = scmp.lt.s32.totalorder %s10, 2
    // Predicated region
    $region21: #{hyper_synthesis_forward.4} parent=5 // pred_check
      %p174 = pneg %p173
    $region22: #{hyper_synthesis_forward.4} parent=5 // pred_check_branch
      %176 = sbr.rel (%p174) target = $region24
    $region23: #{hyper_synthesis_forward.4} parent=5 // pred_region
      // Predicated region
      $region25: #{hyper_synthesis_forward.4} parent=23 // pred_check
        %p177 = pneg %p44
      $region26: #{hyper_synthesis_forward.4} parent=23 // pred_check_branch
        %179 = sbr.rel (%p177) target = $region28
      $region27: #{hyper_synthesis_forward.4} parent=23 // pred_region
        %s180 = smul.u32 16, %s18
        %s181 = ssub.s32 17, %s180
        %p182 = scmp.lt.s32.totalorder %s181, 16
        %s183 = scalar_select %p182, %s181, 16
        %s184 = smul.u32 4, %s183
        %s185 = smul.u32 %s184, 3
        %p186 = scmp.lt.s32.totalorder %s17, 1
        %s187 = scalar_select %p186, %s17, 1
        %p188 = scmp.lt.s32.totalorder %s180, 16
        %s189 = scalar_select %p188, %s180, 16
        %s190 = smul.addr %s189, 3
        %s191 = smul.addr %s187, 51
        %s192 = sadd.s32 %s190, %s191
        %s193 = smul.addr %s192, 4
        %s194 = scalar_lea.vmem %s0, %s193
        %s195 = smul.u32 16, %s18
        %s196 = ssub.s32 17, %s195
        %p197 = scmp.lt.s32.totalorder %s196, 16
        %s198 = scalar_select %p197, %s196, 16
        %s199 = smul.u32 4, %s198
        %s200 = smul.u32 %s199, 3
      $region28: #{hyper_synthesis_forward.4} parent=23 // pred_fallthru
        _
      // Predicated region
      $region29: #{hyper_synthesis_forward.4} parent=23 // pred_check
        %p201 = pneg %p76
      $region30: #{hyper_synthesis_forward.4} parent=23 // pred_check_branch
        %203 = sbr.rel (%p201) target = $region32
      $region31: #{hyper_synthesis_forward.4} parent=23 // pred_region
        %s204 = sadd.s32 %s18, 1
        %s205 = smul.u32 %s204, 16
        %p206 = scmp.lt.s32.totalorder %s17, 1
        %s207 = scalar_select %p206, %s17, 1
        %p208 = scmp.lt.s32.totalorder %s205, 16
        %s209 = scalar_select %p208, %s205, 16
        %s210 = smul.addr %s209, 3
        %s211 = smul.addr %s207, 51
        %s212 = sadd.s32 %s210, %s211
        %s213 = smul.addr %s212, 4
        %s214 = scalar_lea.vmem %s1, %s213
        %s215 = sadd.s32 %s18, 1
        %s216 = smul.u32 %s215, 16
      $region32: #{hyper_synthesis_forward.4} parent=23 // pred_fallthru
        _
    $region24: #{hyper_synthesis_forward.4} parent=5 // pred_fallthru
      _
    %p217 = scmp.le.s32.totalorder 1, %s10
    %p218 = scmp.lt.s32.totalorder %s10, 3
    %p219 = pnand %p217, %p218
    %p220 = pneg %p219
    // Predicated region
    $region33: #{hyper_synthesis_forward.4} parent=5 // pred_check
      _
    $region34: #{hyper_synthesis_forward.4} parent=5 // pred_check_branch
      %222 = sbr.rel (%p219) target = $region36
    $region35: #{hyper_synthesis_forward.4} parent=5 // pred_region
      %s223 = ssub.s32 %s10, 1
      %s224 = smul.u32 16, %s20
      %s225 = ssub.s32 17, %s224
      %p226 = scmp.lt.s32.totalorder %s225, 16
      %s227 = scalar_select %p226, %s225, 16
      %s228 = smul.u32 4, %s227
      %s229 = smul.u32 %s228, 3
      %p230 = scmp.lt.s32.totalorder %s19, 1
      %s231 = scalar_select %p230, %s19, 1
      %p232 = scmp.lt.s32.totalorder %s224, 16
      %s233 = scalar_select %p232, %s224, 16
      %s234 = smul.addr %s233, 3
      %s235 = smul.addr %s231, 51
      %s236 = sadd.s32 %s234, %s235
      %s237 = smul.addr %s236, 4
      %s238 = scalar_lea.vmem %s0, %s237
      %p239 = pneg %p50
      %p240 = pneg %p47
      %s241 = sadd.s32 %s20, 1
      %s242 = smul.u32 %s241, 16
      %p243 = scmp.lt.s32.totalorder %s19, 1
      %s244 = scalar_select %p243, %s19, 1
      %p245 = scmp.lt.s32.totalorder %s242, 16
      %s246 = scalar_select %p245, %s242, 16
      %s247 = smul.addr %s246, 3
      %s248 = smul.addr %s244, 51
      %s249 = sadd.s32 %s247, %s248
      %s250 = smul.addr %s249, 4
      %s251 = scalar_lea.vmem %s1, %s250
      %p252 = pneg %p82
      %p253 = pneg %p79
      %p254 = pneg %p103
      %p255 = pneg %p100
      %p256 = pneg %p124
      %p257 = pneg %p121
      %p258 = pneg %p152
      %p259 = pneg %p149
      %s260 = smul.u32 16, %s20
      %p261 = scmp.lt.s32.totalorder %s19, 1
      %s262 = scalar_select %p261, %s19, 1
      %p263 = scmp.lt.s32.totalorder %s260, 15
      %s264 = scalar_select %p263, %s260, 15
      %s265 = smul.addr %s264, 4
      %s266 = smul.addr %s262, 64
      %s267 = sadd.s32 %s265, %s266
      %s268 = smul.addr %s267, 4
      %s269 = scalar_lea.vmem %s4, %s268
      %s270 = smul.u32 16, %s20
      %s271 = ssub.s32 17, %s270
      %p272 = scmp.lt.s32.totalorder %s271, 16
      %s273 = scalar_select %p272, %s271, 16
      %s274 = smul.u32 4, %s273
      %s275 = smul.u32 %s274, 3
      %p276 = scmp.lt.s32.totalorder %s19, 1
      %s277 = scalar_select %p276, %s19, 1
      %p278 = scmp.lt.s32.totalorder %s270, 16
      %s279 = scalar_select %p278, %s270, 16
      %s280 = smul.addr %s279, 3
      %s281 = smul.addr %s277, 51
      %s282 = sadd.s32 %s280, %s281
      %s283 = smul.addr %s282, 4
      %s284 = scalar_lea.vmem %s0, %s283
      %s285 = smul.u32 16, %s20
      %s286 = ssub.s32 17, %s285
      %p287 = scmp.lt.s32.totalorder %s286, 16
      %s288 = scalar_select %p287, %s286, 16
      %s289 = smul.u32 4, %s288
      %s290 = smul.u32 %s289, 3
      %s291 = sadd.s32 %s20, 1
      %s292 = smul.u32 %s291, 16
      %p293 = scmp.lt.s32.totalorder %s19, 1
      %s294 = scalar_select %p293, %s19, 1
      %p295 = scmp.lt.s32.totalorder %s292, 16
      %s296 = scalar_select %p295, %s292, 16
      %s297 = smul.addr %s296, 3
      %s298 = smul.addr %s294, 51
      %s299 = sadd.s32 %s297, %s298
      %s300 = smul.addr %s299, 4
      %s301 = scalar_lea.vmem %s1, %s300
      %s302 = sadd.s32 %s20, 1
      %s303 = smul.u32 %s302, 16
      %s304 = smul.u32 16, %s20
      %p305 = scmp.lt.s32.totalorder %s19, 1
      %s306 = scalar_select %p305, %s19, 1
      %p307 = scmp.lt.s32.totalorder %s304, 15
      %s308 = scalar_select %p307, %s304, 15
      %s309 = smul.addr %s308, 4
      %s310 = smul.addr %s306, 64
      %s311 = sadd.s32 %s309, %s310
      %s312 = smul.addr %s311, 4
      %s313 = scalar_lea.vmem %s4, %s312
      %s314 = smul.u32 16, %s20
      %v315 = vld [vmem:[%s284] sm:$0xf]
      %v316 = vld [vmem:[%s284 + $0x4] sm:$0xf]
      %v317 = vld [vmem:[%s284 + $0x8] sm:$0x1]
      %v318 = vld [vmem:[%s284 + $0xc] sm:$0xf]
      %v319 = vld [vmem:[%s284 + $0x10] sm:$0xf]
      %v320 = vld [vmem:[%s284 + $0x14] sm:$0x1]
      %v321 = vld [vmem:[%s284 + $0x18] sm:$0xf]
      %v322 = vld [vmem:[%s284 + $0x1c] sm:$0xf]
      %v323 = vld [vmem:[%s284 + $0x20] sm:$0x1]
      %v324 = vld [vmem:[%s284 + $0x24] sm:$0xf]
      %v325 = vld [vmem:[%s284 + $0x28] sm:$0xf]
      %v326 = vld [vmem:[%s284 + $0x2c] sm:$0x1]
      %v327 = vld [vmem:[%s284 + $0x30] sm:$0xf]
      %v328 = vld [vmem:[%s284 + $0x34] sm:$0xf]
      %v329 = vld [vmem:[%s284 + $0x38] sm:$0x1]
      %v330 = vld [vmem:[%s284 + $0x3c] sm:$0xf]
      %v331 = vld [vmem:[%s284 + $0x40] sm:$0xf]
      %v332 = vld [vmem:[%s284 + $0x44] sm:$0x1]
      %v333 = vld [vmem:[%s284 + $0x48] sm:$0xf]
      %v334 = vld [vmem:[%s284 + $0x4c] sm:$0xf]
      %v335 = vld [vmem:[%s284 + $0x50] sm:$0x1]
      %v336 = vld [vmem:[%s284 + $0x54] sm:$0xf]
      %v337 = vld [vmem:[%s284 + $0x58] sm:$0xf]
      %v338 = vld [vmem:[%s284 + $0x5c] sm:$0x1]
      %v339 = vld [vmem:[%s284 + $0x60] sm:$0xf]
      %v340 = vld [vmem:[%s284 + $0x64] sm:$0xf]
      %v341 = vld [vmem:[%s284 + $0x68] sm:$0x1]
      %v342 = vld [vmem:[%s284 + $0x6c] sm:$0xf]
      %v343 = vld [vmem:[%s284 + $0x70] sm:$0xf]
      %v344 = vld [vmem:[%s284 + $0x74] sm:$0x1]
      %v345 = vld [vmem:[%s284 + $0x78] sm:$0xf]
      %v346 = vld [vmem:[%s284 + $0x7c] sm:$0xf]
      %v347 = vld [vmem:[%s284 + $0x80] sm:$0x1]
      %v348 = vld [vmem:[%s284 + $0x84] sm:$0xf]
      %v349 = vld [vmem:[%s284 + $0x88] sm:$0xf]
      %v350 = vld [vmem:[%s284 + $0x8c] sm:$0x1]
      %v351 = vld [vmem:[%s284 + $0x90] sm:$0xf]
      %v352 = vld [vmem:[%s284 + $0x94] sm:$0xf]
      %v353 = vld [vmem:[%s284 + $0x98] sm:$0x1]
      %v354 = vld [vmem:[%s284 + $0x9c] sm:$0xf]
      %v355 = vld [vmem:[%s284 + $0xa0] sm:$0xf]
      %v356 = vld [vmem:[%s284 + $0xa4] sm:$0x1]
      %v357 = vld [vmem:[%s284 + $0xa8] sm:$0xf]
      %v358 = vld [vmem:[%s284 + $0xac] sm:$0xf]
      %v359 = vld [vmem:[%s284 + $0xb0] sm:$0x1]
      %v360 = vld [vmem:[%s284 + $0xb4] sm:$0xf]
      %v361 = vld [vmem:[%s284 + $0xb8] sm:$0xf]
      %v362 = vld [vmem:[%s284 + $0xbc] sm:$0x1]
      %v363 = vld [vmem:[%s301] sm:$0xf]
      %v364 = vld [vmem:[%s301 + $0x4] sm:$0xf]
      %v365 = vld [vmem:[%s301 + $0x8] sm:$0x1]
      %v398 = vunpack.c.l.b16 %v315
      %v399 = vunpack.c.l.b16 %v316
      %v400 = vunpack.c.l.b16 %v318
      %v401 = vunpack.c.l.b16 %v319
      %v402 = vunpack.c.l.b16 %v321
      %v403 = vunpack.c.l.b16 %v322
      %v404 = vunpack.c.l.b16 %v324
      %v405 = vunpack.c.l.b16 %v325
      %v406 = vunpack.c.l.b16 %v327
      %v407 = vunpack.c.l.b16 %v328
      %v408 = vunpack.c.l.b16 %v330
      %v409 = vunpack.c.l.b16 %v331
      %v410 = vunpack.c.l.b16 %v333
      %v411 = vunpack.c.l.b16 %v334
      %v412 = vunpack.c.l.b16 %v336
      %v413 = vunpack.c.l.b16 %v337
      %v414 = vunpack.c.l.b16 %v339
      %v415 = vunpack.c.l.b16 %v340
      %v416 = vunpack.c.l.b16 %v342
      %v417 = vunpack.c.l.b16 %v343
      %v418 = vunpack.c.l.b16 %v345
      %v419 = vunpack.c.l.b16 %v346
      %v420 = vunpack.c.l.b16 %v348
      %v421 = vunpack.c.l.b16 %v349
      %v422 = vunpack.c.l.b16 %v351
      %v423 = vunpack.c.l.b16 %v352
      %v424 = vunpack.c.l.b16 %v354
      %v425 = vunpack.c.l.b16 %v355
      %v426 = vunpack.c.l.b16 %v357
      %v427 = vunpack.c.l.b16 %v358
      %v428 = vunpack.c.l.b16 %v360
      %v429 = vunpack.c.l.b16 %v361
      %v430 = vpack.c.b16 %v399, %v398
      %v431 = vpack.c.b16 %v401, %v400
      %v432 = vpack.c.b16 %v403, %v402
      %v433 = vpack.c.b16 %v405, %v404
      %v434 = vpack.c.b16 %v407, %v406
      %v435 = vpack.c.b16 %v409, %v408
      %v436 = vpack.c.b16 %v411, %v410
      %v437 = vpack.c.b16 %v413, %v412
      %v438 = vpack.c.b16 %v415, %v414
      %v439 = vpack.c.b16 %v417, %v416
      %v440 = vpack.c.b16 %v419, %v418
      %v441 = vpack.c.b16 %v421, %v420
      %v442 = vpack.c.b16 %v423, %v422
      %v443 = vpack.c.b16 %v425, %v424
      %v444 = vpack.c.b16 %v427, %v426
      %v445 = vpack.c.b16 %v429, %v428
      %v462 = vunpack.c.l.b16 %v317
      %v463 = vunpack.c.l.b16 %v320
      %v464 = vunpack.c.l.b16 %v323
      %v465 = vunpack.c.l.b16 %v326
      %v466 = vunpack.c.l.b16 %v329
      %v467 = vunpack.c.l.b16 %v332
      %v468 = vunpack.c.l.b16 %v335
      %v469 = vunpack.c.l.b16 %v338
      %v470 = vunpack.c.l.b16 %v341
      %v471 = vunpack.c.l.b16 %v344
      %v472 = vunpack.c.l.b16 %v347
      %v473 = vunpack.c.l.b16 %v350
      %v474 = vunpack.c.l.b16 %v353
      %v475 = vunpack.c.l.b16 %v356
      %v476 = vunpack.c.l.b16 %v359
      %v477 = vunpack.c.l.b16 %v362
      %v478 = vpack.c.b16 %v462, %v462
      %v479 = vpack.c.b16 %v463, %v463
      %v480 = vpack.c.b16 %v464, %v464
      %v481 = vpack.c.b16 %v465, %v465
      %v482 = vpack.c.b16 %v466, %v466
      %v483 = vpack.c.b16 %v467, %v467
      %v484 = vpack.c.b16 %v468, %v468
      %v485 = vpack.c.b16 %v469, %v469
      %v486 = vpack.c.b16 %v470, %v470
      %v487 = vpack.c.b16 %v471, %v471
      %v488 = vpack.c.b16 %v472, %v472
      %v489 = vpack.c.b16 %v473, %v473
      %v490 = vpack.c.b16 %v474, %v474
      %v491 = vpack.c.b16 %v475, %v475
      %v492 = vpack.c.b16 %v476, %v476
      %v493 = vpack.c.b16 %v477, %v477
      %vm494 = vsmask.f32 7424
      %v496 = vshrl.u32 %v430, 16
      %v498 = vshll.u32 %v430, 16
      %v500 = vrot.slane %v498, 1
      %v501 = vor.u32 %v496, %v500
      %v503 = vshll.u32 %v478, 16
      %v505 = vrot.slane %v503, 1
      %v506 = vsel %vm494, %v501, %v505
      %v508 = vshrl.u32 %v431, 16
      %v510 = vshll.u32 %v431, 16
      %v512 = vrot.slane %v510, 1
      %v513 = vor.u32 %v508, %v512
      %v515 = vshll.u32 %v479, 16
      %v517 = vrot.slane %v515, 1
      %v518 = vsel %vm494, %v513, %v517
      %v520 = vshrl.u32 %v432, 16
      %v522 = vshll.u32 %v432, 16
      %v524 = vrot.slane %v522, 1
      %v525 = vor.u32 %v520, %v524
      %v527 = vshll.u32 %v480, 16
      %v529 = vrot.slane %v527, 1
      %v530 = vsel %vm494, %v525, %v529
      %v532 = vshrl.u32 %v433, 16
      %v534 = vshll.u32 %v433, 16
      %v536 = vrot.slane %v534, 1
      %v537 = vor.u32 %v532, %v536
      %v539 = vshll.u32 %v481, 16
      %v541 = vrot.slane %v539, 1
      %v542 = vsel %vm494, %v537, %v541
      %v544 = vshrl.u32 %v434, 16
      %v546 = vshll.u32 %v434, 16
      %v548 = vrot.slane %v546, 1
      %v549 = vor.u32 %v544, %v548
      %v551 = vshll.u32 %v482, 16
      %v553 = vrot.slane %v551, 1
      %v554 = vsel %vm494, %v549, %v553
      %v556 = vshrl.u32 %v435, 16
      %v558 = vshll.u32 %v435, 16
      %v560 = vrot.slane %v558, 1
      %v561 = vor.u32 %v556, %v560
      %v563 = vshll.u32 %v483, 16
      %v565 = vrot.slane %v563, 1
      %v566 = vsel %vm494, %v561, %v565
      %v568 = vshrl.u32 %v436, 16
      %v570 = vshll.u32 %v436, 16
      %v572 = vrot.slane %v570, 1
      %v573 = vor.u32 %v568, %v572
      %v575 = vshll.u32 %v484, 16
      %v577 = vrot.slane %v575, 1
      %v578 = vsel %vm494, %v573, %v577
      %v580 = vshrl.u32 %v437, 16
      %v582 = vshll.u32 %v437, 16
      %v584 = vrot.slane %v582, 1
      %v585 = vor.u32 %v580, %v584
      %v587 = vshll.u32 %v485, 16
      %v589 = vrot.slane %v587, 1
      %v590 = vsel %vm494, %v585, %v589
      %v592 = vshrl.u32 %v438, 16
      %v594 = vshll.u32 %v438, 16
      %v596 = vrot.slane %v594, 1
      %v597 = vor.u32 %v592, %v596
      %v599 = vshll.u32 %v486, 16
      %v601 = vrot.slane %v599, 1
      %v602 = vsel %vm494, %v597, %v601
      %v604 = vshrl.u32 %v439, 16
      %v606 = vshll.u32 %v439, 16
      %v608 = vrot.slane %v606, 1
      %v609 = vor.u32 %v604, %v608
      %v611 = vshll.u32 %v487, 16
      %v613 = vrot.slane %v611, 1
      %v614 = vsel %vm494, %v609, %v613
      %v616 = vshrl.u32 %v440, 16
      %v618 = vshll.u32 %v440, 16
      %v620 = vrot.slane %v618, 1
      %v621 = vor.u32 %v616, %v620
      %v623 = vshll.u32 %v488, 16
      %v625 = vrot.slane %v623, 1
      %v626 = vsel %vm494, %v621, %v625
      %v628 = vshrl.u32 %v441, 16
      %v630 = vshll.u32 %v441, 16
      %v632 = vrot.slane %v630, 1
      %v633 = vor.u32 %v628, %v632
      %v635 = vshll.u32 %v489, 16
      %v637 = vrot.slane %v635, 1
      %v638 = vsel %vm494, %v633, %v637
      %v640 = vshrl.u32 %v442, 16
      %v642 = vshll.u32 %v442, 16
      %v644 = vrot.slane %v642, 1
      %v645 = vor.u32 %v640, %v644
      %v647 = vshll.u32 %v490, 16
      %v649 = vrot.slane %v647, 1
      %v650 = vsel %vm494, %v645, %v649
      %v652 = vshrl.u32 %v443, 16
      %v654 = vshll.u32 %v443, 16
      %v656 = vrot.slane %v654, 1
      %v657 = vor.u32 %v652, %v656
      %v659 = vshll.u32 %v491, 16
      %v661 = vrot.slane %v659, 1
      %v662 = vsel %vm494, %v657, %v661
      %v664 = vshrl.u32 %v444, 16
      %v666 = vshll.u32 %v444, 16
      %v668 = vrot.slane %v666, 1
      %v669 = vor.u32 %v664, %v668
      %v671 = vshll.u32 %v492, 16
      %v673 = vrot.slane %v671, 1
      %v674 = vsel %vm494, %v669, %v673
      %v676 = vshrl.u32 %v445, 16
      %v678 = vshll.u32 %v445, 16
      %v680 = vrot.slane %v678, 1
      %v681 = vor.u32 %v676, %v680
      %v683 = vshll.u32 %v493, 16
      %v685 = vrot.slane %v683, 1
      %v686 = vsel %vm494, %v681, %v685
      %687 = vrot.lane.b32.xlu0 %v506, 64
      %v688 = vpop.permute.xlu0 %687
      %689 = vrot.lane.b32.xlu0 %v518, 64
      %v690 = vpop.permute.xlu0 %689
      %691 = vrot.lane.b32.xlu0 %v530, 64
      %v692 = vpop.permute.xlu0 %691
      %693 = vrot.lane.b32.xlu0 %v542, 64
      %v694 = vpop.permute.xlu0 %693
      %695 = vrot.lane.b32.xlu0 %v554, 64
      %v696 = vpop.permute.xlu0 %695
      %697 = vrot.lane.b32.xlu0 %v566, 64
      %v698 = vpop.permute.xlu0 %697
      %699 = vrot.lane.b32.xlu0 %v578, 64
      %v700 = vpop.permute.xlu0 %699
      %701 = vrot.lane.b32.xlu0 %v590, 64
      %v702 = vpop.permute.xlu0 %701
      %703 = vrot.lane.b32.xlu0 %v602, 64
      %v704 = vpop.permute.xlu0 %703
      %705 = vrot.lane.b32.xlu0 %v614, 64
      %v706 = vpop.permute.xlu0 %705
      %707 = vrot.lane.b32.xlu0 %v626, 64
      %v708 = vpop.permute.xlu0 %707
      %709 = vrot.lane.b32.xlu0 %v638, 64
      %v710 = vpop.permute.xlu0 %709
      %711 = vrot.lane.b32.xlu0 %v650, 64
      %v712 = vpop.permute.xlu0 %711
      %713 = vrot.lane.b32.xlu0 %v662, 64
      %v714 = vpop.permute.xlu0 %713
      %715 = vrot.lane.b32.xlu0 %v674, 64
      %v716 = vpop.permute.xlu0 %715
      %717 = vrot.lane.b32.xlu0 %v686, 64
      %v718 = vpop.permute.xlu0 %717
      %v721 = vunpack.c.l.b16 %v363
      %v722 = vunpack.c.l.b16 %v364
      %v723 = vpack.c.b16 %v722, %v721
      %v725 = vunpack.c.l.b16 %v365
      %v726 = vpack.c.b16 %v725, %v725
      %v728 = vshrl.u32 %v723, 16
      %v730 = vshll.u32 %v723, 16
      %v732 = vrot.slane %v730, 1
      %v733 = vor.u32 %v728, %v732
      %v735 = vshll.u32 %v726, 16
      %v737 = vrot.slane %v735, 1
      %v738 = vsel %vm494, %v733, %v737
      %739 = vrot.lane.b32.xlu0 %v738, 64
      %v740 = vpop.permute.xlu0 %739
      %vm741 = vcmask 523264
      %v743 = vsel %vm741, %v430, %v688
      %v746 = vsel %vm741, %v431, %v690
      %v749 = vsel %vm741, %v432, %v692
      %v752 = vsel %vm741, %v433, %v694
      %v755 = vsel %vm741, %v434, %v696
      %v758 = vsel %vm741, %v435, %v698
      %v761 = vsel %vm741, %v436, %v700
      %v764 = vsel %vm741, %v437, %v702
      %v767 = vsel %vm741, %v438, %v704
      %v770 = vsel %vm741, %v439, %v706
      %v773 = vsel %vm741, %v440, %v708
      %v776 = vsel %vm741, %v441, %v710
      %v779 = vsel %vm741, %v442, %v712
      %v782 = vsel %vm741, %v443, %v714
      %v785 = vsel %vm741, %v444, %v716
      %v788 = vsel %vm741, %v445, %v718
      %v791 = vsel %vm741, %v723, %v740
      %v793 = vld [vmem:[%s2] sm:$0xff]
      %v794 = vld [vmem:[%s2 + $0x8] sm:$0xff]
      %v795 = vld [vmem:[%s2 + $0x10] sm:$0xff]
      %v796 = vld [vmem:[%s2 + $0x18] sm:$0xff]
      %v797 = vld [vmem:[%s2 + $0x20] sm:$0xff]
      %v798 = vld [vmem:[%s2 + $0x28] sm:$0xff]
      %v799 = vld [vmem:[%s2 + $0x30] sm:$0xff]
      %v800 = vld [vmem:[%s2 + $0x38] sm:$0xff]
      %v801 = vld [vmem:[%s2 + $0x40] sm:$0xff]
      %v802 = vld [vmem:[%s2 + $0x48] sm:$0xff]
      %v803 = vld [vmem:[%s2 + $0x50] sm:$0xff]
      %v804 = vld [vmem:[%s2 + $0x58] sm:$0xff]
      %v805 = vld [vmem:[%s2 + $0x60] sm:$0xff]
      %v806 = vld [vmem:[%s2 + $0x68] sm:$0xff]
      %v807 = vld [vmem:[%s2 + $0x70] sm:$0xff]
      %v808 = vld [vmem:[%s2 + $0x78] sm:$0xff]
      %v809 = vld [vmem:[%s2 + $0x80] sm:$0xff]
      %v810 = vld [vmem:[%s2 + $0x88] sm:$0xff]
      %v811 = vld [vmem:[%s2 + $0x90] sm:$0xff]
      %v812 = vld [vmem:[%s2 + $0x98] sm:$0xff]
      %v813 = vld [vmem:[%s2 + $0xa0] sm:$0xff]
      %v814 = vld [vmem:[%s2 + $0xa8] sm:$0xff]
      %v815 = vld [vmem:[%s2 + $0xb0] sm:$0xff]
      %v816 = vld [vmem:[%s2 + $0xb8] sm:$0xff]
      %v817 = vld [vmem:[%s2 + $0xc0] sm:$0xff]
      %v818 = vld [vmem:[%s2 + $0xc8] sm:$0xff]
      %v819 = vld [vmem:[%s2 + $0xd0] sm:$0xff]
      %v820 = vld [vmem:[%s2 + $0xd8] sm:$0xff]
      %v821 = vld [vmem:[%s2 + $0xe0] sm:$0xff]
      %v822 = vld [vmem:[%s2 + $0xe8] sm:$0xff]
      %v823 = vld [vmem:[%s2 + $0xf0] sm:$0xff]
      %v824 = vld [vmem:[%s2 + $0xf8] sm:$0xff]
      %v825 = vld [vmem:[%s3] sm:$0x3]
      %v827 = vperm.slane %v825, 0
      %v828 = vperm.slane %v825, 1
      %v863 = vunpack.c.l.b16 %v793
      %v864 = vunpack.c.h.b16 %v793
      %v865 = vunpack.c.l.b16 %v794
      %v866 = vunpack.c.h.b16 %v794
      %v867 = vunpack.c.l.b16 %v795
      %v868 = vunpack.c.h.b16 %v795
      %v869 = vunpack.c.l.b16 %v796
      %v870 = vunpack.c.h.b16 %v796
      %v871 = vunpack.c.l.b16 %v797
      %v872 = vunpack.c.h.b16 %v797
      %v873 = vunpack.c.l.b16 %v798
      %v874 = vunpack.c.h.b16 %v798
      %v875 = vunpack.c.l.b16 %v799
      %v876 = vunpack.c.h.b16 %v799
      %v877 = vunpack.c.l.b16 %v800
      %v878 = vunpack.c.h.b16 %v800
      %v879 = vunpack.c.l.b16 %v801
      %v880 = vunpack.c.h.b16 %v801
      %v881 = vunpack.c.l.b16 %v802
      %v882 = vunpack.c.h.b16 %v802
      %v883 = vunpack.c.l.b16 %v803
      %v884 = vunpack.c.h.b16 %v803
      %v885 = vunpack.c.l.b16 %v804
      %v886 = vunpack.c.h.b16 %v804
      %v887 = vunpack.c.l.b16 %v805
      %v888 = vunpack.c.h.b16 %v805
      %v889 = vunpack.c.l.b16 %v806
      %v890 = vunpack.c.h.b16 %v806
      %v891 = vunpack.c.l.b16 %v807
      %v892 = vunpack.c.h.b16 %v807
      %v893 = vunpack.c.l.b16 %v808
      %v894 = vunpack.c.h.b16 %v808
      %v895 = vunpack.c.l.b16 %v809
      %v896 = vunpack.c.h.b16 %v809
      %v897 = vunpack.c.l.b16 %v810
      %v898 = vunpack.c.h.b16 %v810
      %v899 = vunpack.c.l.b16 %v811
      %v900 = vunpack.c.h.b16 %v811
      %v901 = vunpack.c.l.b16 %v812
      %v902 = vunpack.c.h.b16 %v812
      %v903 = vunpack.c.l.b16 %v813
      %v904 = vunpack.c.h.b16 %v813
      %v905 = vunpack.c.l.b16 %v814
      %v906 = vunpack.c.h.b16 %v814
      %v907 = vunpack.c.l.b16 %v815
      %v908 = vunpack.c.h.b16 %v815
      %v909 = vunpack.c.l.b16 %v816
      %v910 = vunpack.c.h.b16 %v816
      %v911 = vunpack.c.l.b16 %v817
      %v912 = vunpack.c.h.b16 %v817
      %v913 = vunpack.c.l.b16 %v818
      %v914 = vunpack.c.h.b16 %v818
      %v915 = vunpack.c.l.b16 %v819
      %v916 = vunpack.c.h.b16 %v819
      %v917 = vunpack.c.l.b16 %v820
      %v918 = vunpack.c.h.b16 %v820
      %v919 = vunpack.c.l.b16 %v821
      %v920 = vunpack.c.h.b16 %v821
      %v921 = vunpack.c.l.b16 %v822
      %v922 = vunpack.c.h.b16 %v822
      %v923 = vunpack.c.l.b16 %v823
      %v924 = vunpack.c.h.b16 %v823
      %v925 = vunpack.c.l.b16 %v824
      %v926 = vunpack.c.h.b16 %v824
      %v927 = vpack.c.b16 %v865, %v863
      %v928 = vpack.c.b16 %v866, %v864
      %v929 = vpack.c.b16 %v869, %v867
      %v930 = vpack.c.b16 %v870, %v868
      %v931 = vpack.c.b16 %v873, %v871
      %v932 = vpack.c.b16 %v874, %v872
      %v933 = vpack.c.b16 %v877, %v875
      %v934 = vpack.c.b16 %v878, %v876
      %v935 = vpack.c.b16 %v881, %v879
      %v936 = vpack.c.b16 %v882, %v880
      %v937 = vpack.c.b16 %v885, %v883
      %v938 = vpack.c.b16 %v886, %v884
      %v939 = vpack.c.b16 %v889, %v887
      %v940 = vpack.c.b16 %v890, %v888
      %v941 = vpack.c.b16 %v893, %v891
      %v942 = vpack.c.b16 %v894, %v892
      %v943 = vpack.c.b16 %v897, %v895
      %v944 = vpack.c.b16 %v898, %v896
      %v945 = vpack.c.b16 %v901, %v899
      %v946 = vpack.c.b16 %v902, %v900
      %v947 = vpack.c.b16 %v905, %v903
      %v948 = vpack.c.b16 %v906, %v904
      %v949 = vpack.c.b16 %v909, %v907
      %v950 = vpack.c.b16 %v910, %v908
      %v951 = vpack.c.b16 %v913, %v911
      %v952 = vpack.c.b16 %v914, %v912
      %v953 = vpack.c.b16 %v917, %v915
      %v954 = vpack.c.b16 %v918, %v916
      %v955 = vpack.c.b16 %v921, %v919
      %v956 = vpack.c.b16 %v922, %v920
      %v957 = vpack.c.b16 %v925, %v923
      %v958 = vpack.c.b16 %v926, %v924
      %991 = vmatpush.bf16.msra.mxu0 %v941
      %992 = vmatpush.bf16.msra.mxu0 %v939
      %993 = vmatpush.bf16.msra.mxu0 %v937
      %994 = vmatpush.bf16.msra.mxu0 %v935
      %995 = vmatpush.bf16.msra.mxu0 %v933
      %996 = vmatpush.bf16.msra.mxu0 %v931
      %997 = vmatpush.bf16.msra.mxu0 %v929
      %998 = vmatpush.bf16.msra.mxu0 %v927
      %999 = vmatmul.bf16.gmra.mxu0 %v743
      %v1000 = vpop.f32.mrf.mxu0
      %v1001 = vadd.f32 %v827, %v1000
      %v1002 = vpop.f32.mrf.mxu0
      %v1003 = vadd.f32 %v827, %v1002
      %1004 = vmatmul.bf16.gmra.mxu0 %v746
      %v1005 = vpop.f32.mrf.mxu0
      %v1006 = vadd.f32 %v827, %v1005
      %v1007 = vpop.f32.mrf.mxu0
      %v1008 = vadd.f32 %v827, %v1007
      %1009 = vmatmul.bf16.gmra.mxu0 %v749
      %v1010 = vpop.f32.mrf.mxu0
      %v1011 = vadd.f32 %v827, %v1010
      %v1012 = vpop.f32.mrf.mxu0
      %v1013 = vadd.f32 %v827, %v1012
      %1014 = vmatmul.bf16.gmra.mxu0 %v752
      %v1015 = vpop.f32.mrf.mxu0
      %v1016 = vadd.f32 %v827, %v1015
      %v1017 = vpop.f32.mrf.mxu0
      %v1018 = vadd.f32 %v827, %v1017
      %1019 = vmatmul.bf16.gmra.mxu0 %v755
      %v1020 = vpop.f32.mrf.mxu0
      %v1021 = vadd.f32 %v827, %v1020
      %v1022 = vpop.f32.mrf.mxu0
      %v1023 = vadd.f32 %v827, %v1022
      %1024 = vmatmul.bf16.gmra.mxu0 %v758
      %v1025 = vpop.f32.mrf.mxu0
      %v1026 = vadd.f32 %v827, %v1025
      %v1027 = vpop.f32.mrf.mxu0
      %v1028 = vadd.f32 %v827, %v1027
      %1029 = vmatmul.bf16.gmra.mxu0 %v761
      %v1030 = vpop.f32.mrf.mxu0
      %v1031 = vadd.f32 %v827, %v1030
      %v1032 = vpop.f32.mrf.mxu0
      %v1033 = vadd.f32 %v827, %v1032
      %1034 = vmatmul.bf16.gmra.mxu0 %v764
      %v1035 = vpop.f32.mrf.mxu0
      %v1036 = vadd.f32 %v827, %v1035
      %v1037 = vpop.f32.mrf.mxu0
      %v1038 = vadd.f32 %v827, %v1037
      %1039 = vmatmul.bf16.gmra.mxu0 %v767
      %v1040 = vpop.f32.mrf.mxu0
      %v1041 = vadd.f32 %v827, %v1040
      %v1042 = vpop.f32.mrf.mxu0
      %v1043 = vadd.f32 %v827, %v1042
      %1044 = vmatmul.bf16.gmra.mxu0 %v770
      %v1045 = vpop.f32.mrf.mxu0
      %v1046 = vadd.f32 %v827, %v1045
      %v1047 = vpop.f32.mrf.mxu0
      %v1048 = vadd.f32 %v827, %v1047
      %1049 = vmatmul.bf16.gmra.mxu0 %v773
      %v1050 = vpop.f32.mrf.mxu0
      %v1051 = vadd.f32 %v827, %v1050
      %v1052 = vpop.f32.mrf.mxu0
      %v1053 = vadd.f32 %v827, %v1052
      %1054 = vmatmul.bf16.gmra.mxu0 %v776
      %v1055 = vpop.f32.mrf.mxu0
      %v1056 = vadd.f32 %v827, %v1055
      %v1057 = vpop.f32.mrf.mxu0
      %v1058 = vadd.f32 %v827, %v1057
      %1059 = vmatmul.bf16.gmra.mxu0 %v779
      %v1060 = vpop.f32.mrf.mxu0
      %v1061 = vadd.f32 %v827, %v1060
      %v1062 = vpop.f32.mrf.mxu0
      %v1063 = vadd.f32 %v827, %v1062
      %1064 = vmatmul.bf16.gmra.mxu0 %v782
      %v1065 = vpop.f32.mrf.mxu0
      %v1066 = vadd.f32 %v827, %v1065
      %v1067 = vpop.f32.mrf.mxu0
      %v1068 = vadd.f32 %v827, %v1067
      %1069 = vmatmul.bf16.gmra.mxu0 %v785
      %v1070 = vpop.f32.mrf.mxu0
      %v1071 = vadd.f32 %v827, %v1070
      %v1072 = vpop.f32.mrf.mxu0
      %v1073 = vadd.f32 %v827, %v1072
      %1074 = vmatmul.bf16.gmra.mxu0 %v788
      %v1075 = vpop.f32.mrf.mxu0
      %v1076 = vadd.f32 %v827, %v1075
      %v1077 = vpop.f32.mrf.mxu0
      %v1078 = vadd.f32 %v827, %v1077
      %1079 = vdwg.mxu0
      %1080 = vmatpush.bf16.msra.mxu0 %v957
      %1081 = vmatpush.bf16.msra.mxu0 %v955
      %1082 = vmatpush.bf16.msra.mxu0 %v953
      %1083 = vmatpush.bf16.msra.mxu0 %v951
      %1084 = vmatpush.bf16.msra.mxu0 %v949
      %1085 = vmatpush.bf16.msra.mxu0 %v947
      %1086 = vmatpush.bf16.msra.mxu0 %v945
      %1087 = vmatpush.bf16.msra.mxu0 %v943
      %1088 = vmatmul.bf16.gmra.mxu0 %v746
      %v1089 = vpop.f32.mrf.mxu0
      %v1090 = vadd.f32 %v1001, %v1089
      %v1091 = vpop.f32.mrf.mxu0
      %v1092 = vadd.f32 %v1003, %v1091
      %1093 = vmatmul.bf16.gmra.mxu0 %v749
      %v1094 = vpop.f32.mrf.mxu0
      %v1095 = vadd.f32 %v1006, %v1094
      %v1096 = vpop.f32.mrf.mxu0
      %v1097 = vadd.f32 %v1008, %v1096
      %1098 = vmatmul.bf16.gmra.mxu0 %v752
      %v1099 = vpop.f32.mrf.mxu0
      %v1100 = vadd.f32 %v1011, %v1099
      %v1101 = vpop.f32.mrf.mxu0
      %v1102 = vadd.f32 %v1013, %v1101
      %1103 = vmatmul.bf16.gmra.mxu0 %v755
      %v1104 = vpop.f32.mrf.mxu0
      %v1105 = vadd.f32 %v1016, %v1104
      %v1106 = vpop.f32.mrf.mxu0
      %v1107 = vadd.f32 %v1018, %v1106
      %1108 = vmatmul.bf16.gmra.mxu0 %v758
      %v1109 = vpop.f32.mrf.mxu0
      %v1110 = vadd.f32 %v1021, %v1109
      %v1111 = vpop.f32.mrf.mxu0
      %v1112 = vadd.f32 %v1023, %v1111
      %1113 = vmatmul.bf16.gmra.mxu0 %v761
      %v1114 = vpop.f32.mrf.mxu0
      %v1115 = vadd.f32 %v1026, %v1114
      %v1116 = vpop.f32.mrf.mxu0
      %v1117 = vadd.f32 %v1028, %v1116
      %1118 = vmatmul.bf16.gmra.mxu0 %v764
      %v1119 = vpop.f32.mrf.mxu0
      %v1120 = vadd.f32 %v1031, %v1119
      %v1121 = vpop.f32.mrf.mxu0
      %v1122 = vadd.f32 %v1033, %v1121
      %1123 = vmatmul.bf16.gmra.mxu0 %v767
      %v1124 = vpop.f32.mrf.mxu0
      %v1125 = vadd.f32 %v1036, %v1124
      %v1126 = vpop.f32.mrf.mxu0
      %v1127 = vadd.f32 %v1038, %v1126
      %1128 = vmatmul.bf16.gmra.mxu0 %v770
      %v1129 = vpop.f32.mrf.mxu0
      %v1130 = vadd.f32 %v1041, %v1129
      %v1131 = vpop.f32.mrf.mxu0
      %v1132 = vadd.f32 %v1043, %v1131
      %1133 = vmatmul.bf16.gmra.mxu0 %v773
      %v1134 = vpop.f32.mrf.mxu0
      %v1135 = vadd.f32 %v1046, %v1134
      %v1136 = vpop.f32.mrf.mxu0
      %v1137 = vadd.f32 %v1048, %v1136
      %1138 = vmatmul.bf16.gmra.mxu0 %v776
      %v1139 = vpop.f32.mrf.mxu0
      %v1140 = vadd.f32 %v1051, %v1139
      %v1141 = vpop.f32.mrf.mxu0
      %v1142 = vadd.f32 %v1053, %v1141
      %1143 = vmatmul.bf16.gmra.mxu0 %v779
      %v1144 = vpop.f32.mrf.mxu0
      %v1145 = vadd.f32 %v1056, %v1144
      %v1146 = vpop.f32.mrf.mxu0
      %v1147 = vadd.f32 %v1058, %v1146
      %1148 = vmatmul.bf16.gmra.mxu0 %v782
      %v1149 = vpop.f32.mrf.mxu0
      %v1150 = vadd.f32 %v1061, %v1149
      %v1151 = vpop.f32.mrf.mxu0
      %v1152 = vadd.f32 %v1063, %v1151
      %1153 = vmatmul.bf16.gmra.mxu0 %v785
      %v1154 = vpop.f32.mrf.mxu0
      %v1155 = vadd.f32 %v1066, %v1154
      %v1156 = vpop.f32.mrf.mxu0
      %v1157 = vadd.f32 %v1068, %v1156
      %1158 = vmatmul.bf16.gmra.mxu0 %v788
      %v1159 = vpop.f32.mrf.mxu0
      %v1160 = vadd.f32 %v1071, %v1159
      %v1161 = vpop.f32.mrf.mxu0
      %v1162 = vadd.f32 %v1073, %v1161
      %1163 = vmatmul.bf16.gmra.mxu0 %v791
      %v1164 = vpop.f32.mrf.mxu0
      %v1165 = vadd.f32 %v1076, %v1164
      %v1166 = vpop.f32.mrf.mxu0
      %v1167 = vadd.f32 %v1078, %v1166
      %1168 = vdwg.mxu0
      %1169 = vmatpush.bf16.msra.mxu0 %v942
      %1170 = vmatpush.bf16.msra.mxu0 %v940
      %1171 = vmatpush.bf16.msra.mxu0 %v938
      %1172 = vmatpush.bf16.msra.mxu0 %v936
      %1173 = vmatpush.bf16.msra.mxu0 %v934
      %1174 = vmatpush.bf16.msra.mxu0 %v932
      %1175 = vmatpush.bf16.msra.mxu0 %v930
      %1176 = vmatpush.bf16.msra.mxu0 %v928
      %1177 = vmatmul.bf16.gmra.mxu0 %v743
      %v1178 = vpop.f32.mrf.mxu0
      %v1179 = vadd.f32 %v828, %v1178
      %v1180 = vpop.f32.mrf.mxu0
      %v1181 = vadd.f32 %v828, %v1180
      %1182 = vmatmul.bf16.gmra.mxu0 %v746
      %v1183 = vpop.f32.mrf.mxu0
      %v1184 = vadd.f32 %v828, %v1183
      %v1185 = vpop.f32.mrf.mxu0
      %v1186 = vadd.f32 %v828, %v1185
      %1187 = vmatmul.bf16.gmra.mxu0 %v749
      %v1188 = vpop.f32.mrf.mxu0
      %v1189 = vadd.f32 %v828, %v1188
      %v1190 = vpop.f32.mrf.mxu0
      %v1191 = vadd.f32 %v828, %v1190
      %1192 = vmatmul.bf16.gmra.mxu0 %v752
      %v1193 = vpop.f32.mrf.mxu0
      %v1194 = vadd.f32 %v828, %v1193
      %v1195 = vpop.f32.mrf.mxu0
      %v1196 = vadd.f32 %v828, %v1195
      %1197 = vmatmul.bf16.gmra.mxu0 %v755
      %v1198 = vpop.f32.mrf.mxu0
      %v1199 = vadd.f32 %v828, %v1198
      %v1200 = vpop.f32.mrf.mxu0
      %v1201 = vadd.f32 %v828, %v1200
      %1202 = vmatmul.bf16.gmra.mxu0 %v758
      %v1203 = vpop.f32.mrf.mxu0
      %v1204 = vadd.f32 %v828, %v1203
      %v1205 = vpop.f32.mrf.mxu0
      %v1206 = vadd.f32 %v828, %v1205
      %1207 = vmatmul.bf16.gmra.mxu0 %v761
      %v1208 = vpop.f32.mrf.mxu0
      %v1209 = vadd.f32 %v828, %v1208
      %v1210 = vpop.f32.mrf.mxu0
      %v1211 = vadd.f32 %v828, %v1210
      %1212 = vmatmul.bf16.gmra.mxu0 %v764
      %v1213 = vpop.f32.mrf.mxu0
      %v1214 = vadd.f32 %v828, %v1213
      %v1215 = vpop.f32.mrf.mxu0
      %v1216 = vadd.f32 %v828, %v1215
      %1217 = vmatmul.bf16.gmra.mxu0 %v767
      %v1218 = vpop.f32.mrf.mxu0
      %v1219 = vadd.f32 %v828, %v1218
      %v1220 = vpop.f32.mrf.mxu0
      %v1221 = vadd.f32 %v828, %v1220
      %1222 = vmatmul.bf16.gmra.mxu0 %v770
      %v1223 = vpop.f32.mrf.mxu0
      %v1224 = vadd.f32 %v828, %v1223
      %v1225 = vpop.f32.mrf.mxu0
      %v1226 = vadd.f32 %v828, %v1225
      %1227 = vmatmul.bf16.gmra.mxu0 %v773
      %v1228 = vpop.f32.mrf.mxu0
      %v1229 = vadd.f32 %v828, %v1228
      %v1230 = vpop.f32.mrf.mxu0
      %v1231 = vadd.f32 %v828, %v1230
      %1232 = vmatmul.bf16.gmra.mxu0 %v776
      %v1233 = vpop.f32.mrf.mxu0
      %v1234 = vadd.f32 %v828, %v1233
      %v1235 = vpop.f32.mrf.mxu0
      %v1236 = vadd.f32 %v828, %v1235
      %1237 = vmatmul.bf16.gmra.mxu0 %v779
      %v1238 = vpop.f32.mrf.mxu0
      %v1239 = vadd.f32 %v828, %v1238
      %v1240 = vpop.f32.mrf.mxu0
      %v1241 = vadd.f32 %v828, %v1240
      %1242 = vmatmul.bf16.gmra.mxu0 %v782
      %v1243 = vpop.f32.mrf.mxu0
      %v1244 = vadd.f32 %v828, %v1243
      %v1245 = vpop.f32.mrf.mxu0
      %v1246 = vadd.f32 %v828, %v1245
      %1247 = vmatmul.bf16.gmra.mxu0 %v785
      %v1248 = vpop.f32.mrf.mxu0
      %v1249 = vadd.f32 %v828, %v1248
      %v1250 = vpop.f32.mrf.mxu0
      %v1251 = vadd.f32 %v828, %v1250
      %1252 = vmatmul.bf16.gmra.mxu0 %v788
      %v1253 = vpop.f32.mrf.mxu0
      %v1254 = vadd.f32 %v828, %v1253
      %v1255 = vpop.f32.mrf.mxu0
      %v1256 = vadd.f32 %v828, %v1255
      %1257 = vdwg.mxu0
      %1258 = vmatpush.bf16.msra.mxu0 %v958
      %1259 = vmatpush.bf16.msra.mxu0 %v956
      %1260 = vmatpush.bf16.msra.mxu0 %v954
      %1261 = vmatpush.bf16.msra.mxu0 %v952
      %1262 = vmatpush.bf16.msra.mxu0 %v950
      %1263 = vmatpush.bf16.msra.mxu0 %v948
      %1264 = vmatpush.bf16.msra.mxu0 %v946
      %1265 = vmatpush.bf16.msra.mxu0 %v944
      %1266 = vmatmul.bf16.gmra.mxu0 %v746
      %v1267 = vpop.f32.mrf.mxu0
      %v1268 = vadd.f32 %v1179, %v1267
      %v1269 = vpop.f32.mrf.mxu0
      %v1270 = vadd.f32 %v1181, %v1269
      %1271 = vmatmul.bf16.gmra.mxu0 %v749
      %v1272 = vpop.f32.mrf.mxu0
      %v1273 = vadd.f32 %v1184, %v1272
      %v1274 = vpop.f32.mrf.mxu0
      %v1275 = vadd.f32 %v1186, %v1274
      %1276 = vmatmul.bf16.gmra.mxu0 %v752
      %v1277 = vpop.f32.mrf.mxu0
      %v1278 = vadd.f32 %v1189, %v1277
      %v1279 = vpop.f32.mrf.mxu0
      %v1280 = vadd.f32 %v1191, %v1279
      %1281 = vmatmul.bf16.gmra.mxu0 %v755
      %v1282 = vpop.f32.mrf.mxu0
      %v1283 = vadd.f32 %v1194, %v1282
      %v1284 = vpop.f32.mrf.mxu0
      %v1285 = vadd.f32 %v1196, %v1284
      %1286 = vmatmul.bf16.gmra.mxu0 %v758
      %v1287 = vpop.f32.mrf.mxu0
      %v1288 = vadd.f32 %v1199, %v1287
      %v1289 = vpop.f32.mrf.mxu0
      %v1290 = vadd.f32 %v1201, %v1289
      %1291 = vmatmul.bf16.gmra.mxu0 %v761
      %v1292 = vpop.f32.mrf.mxu0
      %v1293 = vadd.f32 %v1204, %v1292
      %v1294 = vpop.f32.mrf.mxu0
      %v1295 = vadd.f32 %v1206, %v1294
      %1296 = vmatmul.bf16.gmra.mxu0 %v764
      %v1297 = vpop.f32.mrf.mxu0
      %v1298 = vadd.f32 %v1209, %v1297
      %v1299 = vpop.f32.mrf.mxu0
      %v1300 = vadd.f32 %v1211, %v1299
      %1301 = vmatmul.bf16.gmra.mxu0 %v767
      %v1302 = vpop.f32.mrf.mxu0
      %v1303 = vadd.f32 %v1214, %v1302
      %v1304 = vpop.f32.mrf.mxu0
      %v1305 = vadd.f32 %v1216, %v1304
      %1306 = vmatmul.bf16.gmra.mxu0 %v770
      %v1307 = vpop.f32.mrf.mxu0
      %v1308 = vadd.f32 %v1219, %v1307
      %v1309 = vpop.f32.mrf.mxu0
      %v1310 = vadd.f32 %v1221, %v1309
      %1311 = vmatmul.bf16.gmra.mxu0 %v773
      %v1312 = vpop.f32.mrf.mxu0
      %v1313 = vadd.f32 %v1224, %v1312
      %v1314 = vpop.f32.mrf.mxu0
      %v1315 = vadd.f32 %v1226, %v1314
      %1316 = vmatmul.bf16.gmra.mxu0 %v776
      %v1317 = vpop.f32.mrf.mxu0
      %v1318 = vadd.f32 %v1229, %v1317
      %v1319 = vpop.f32.mrf.mxu0
      %v1320 = vadd.f32 %v1231, %v1319
      %1321 = vmatmul.bf16.gmra.mxu0 %v779
      %v1322 = vpop.f32.mrf.mxu0
      %v1323 = vadd.f32 %v1234, %v1322
      %v1324 = vpop.f32.mrf.mxu0
      %v1325 = vadd.f32 %v1236, %v1324
      %1326 = vmatmul.bf16.gmra.mxu0 %v782
      %v1327 = vpop.f32.mrf.mxu0
      %v1328 = vadd.f32 %v1239, %v1327
      %v1329 = vpop.f32.mrf.mxu0
      %v1330 = vadd.f32 %v1241, %v1329
      %1331 = vmatmul.bf16.gmra.mxu0 %v785
      %v1332 = vpop.f32.mrf.mxu0
      %v1333 = vadd.f32 %v1244, %v1332
      %v1334 = vpop.f32.mrf.mxu0
      %v1335 = vadd.f32 %v1246, %v1334
      %1336 = vmatmul.bf16.gmra.mxu0 %v788
      %v1337 = vpop.f32.mrf.mxu0
      %v1338 = vadd.f32 %v1249, %v1337
      %v1339 = vpop.f32.mrf.mxu0
      %v1340 = vadd.f32 %v1251, %v1339
      %1341 = vmatmul.bf16.gmra.mxu0 %v791
      %v1342 = vpop.f32.mrf.mxu0
      %v1343 = vadd.f32 %v1254, %v1342
      %v1344 = vpop.f32.mrf.mxu0
      %v1345 = vadd.f32 %v1256, %v1344
      %1346 = vdwg.mxu0
      %v1347 = vmax.f32 %v1090, 0.0
      %v1348 = vmax.f32 %v1268, 0.0
      %v1349 = vmax.f32 %v1092, 0.0
      %v1350 = vmax.f32 %v1270, 0.0
      %v1351 = vmax.f32 %v1095, 0.0
      %v1352 = vmax.f32 %v1273, 0.0
      %v1353 = vmax.f32 %v1097, 0.0
      %v1354 = vmax.f32 %v1275, 0.0
      %v1355 = vmax.f32 %v1100, 0.0
      %v1356 = vmax.f32 %v1278, 0.0
      %v1357 = vmax.f32 %v1102, 0.0
      %v1358 = vmax.f32 %v1280, 0.0
      %v1359 = vmax.f32 %v1105, 0.0
      %v1360 = vmax.f32 %v1283, 0.0
      %v1361 = vmax.f32 %v1107, 0.0
      %v1362 = vmax.f32 %v1285, 0.0
      %v1363 = vmax.f32 %v1110, 0.0
      %v1364 = vmax.f32 %v1288, 0.0
      %v1365 = vmax.f32 %v1112, 0.0
      %v1366 = vmax.f32 %v1290, 0.0
      %v1367 = vmax.f32 %v1115, 0.0
      %v1368 = vmax.f32 %v1293, 0.0
      %v1369 = vmax.f32 %v1117, 0.0
      %v1370 = vmax.f32 %v1295, 0.0
      %v1371 = vmax.f32 %v1120, 0.0
      %v1372 = vmax.f32 %v1298, 0.0
      %v1373 = vmax.f32 %v1122, 0.0
      %v1374 = vmax.f32 %v1300, 0.0
      %v1375 = vmax.f32 %v1125, 0.0
      %v1376 = vmax.f32 %v1303, 0.0
      %v1377 = vmax.f32 %v1127, 0.0
      %v1378 = vmax.f32 %v1305, 0.0
      %v1379 = vmax.f32 %v1130, 0.0
      %v1380 = vmax.f32 %v1308, 0.0
      %v1381 = vmax.f32 %v1132, 0.0
      %v1382 = vmax.f32 %v1310, 0.0
      %v1383 = vmax.f32 %v1135, 0.0
      %v1384 = vmax.f32 %v1313, 0.0
      %v1385 = vmax.f32 %v1137, 0.0
      %v1386 = vmax.f32 %v1315, 0.0
      %v1387 = vmax.f32 %v1140, 0.0
      %v1388 = vmax.f32 %v1318, 0.0
      %v1389 = vmax.f32 %v1142, 0.0
      %v1390 = vmax.f32 %v1320, 0.0
      %v1391 = vmax.f32 %v1145, 0.0
      %v1392 = vmax.f32 %v1323, 0.0
      %v1393 = vmax.f32 %v1147, 0.0
      %v1394 = vmax.f32 %v1325, 0.0
      %v1395 = vmax.f32 %v1150, 0.0
      %v1396 = vmax.f32 %v1328, 0.0
      %v1397 = vmax.f32 %v1152, 0.0
      %v1398 = vmax.f32 %v1330, 0.0
      %v1399 = vmax.f32 %v1155, 0.0
      %v1400 = vmax.f32 %v1333, 0.0
      %v1401 = vmax.f32 %v1157, 0.0
      %v1402 = vmax.f32 %v1335, 0.0
      %v1403 = vmax.f32 %v1160, 0.0
      %v1404 = vmax.f32 %v1338, 0.0
      %v1405 = vmax.f32 %v1162, 0.0
      %v1406 = vmax.f32 %v1340, 0.0
      %v1407 = vmax.f32 %v1165, 0.0
      %v1408 = vmax.f32 %v1343, 0.0
      %v1409 = vmax.f32 %v1167, 0.0
      %v1410 = vmax.f32 %v1345, 0.0
      %v1411 = vpack.c.bf16 %v1347, %v1347
      %v1412 = vpack.c.bf16 %v1349, %v1349
      %v1413 = vpack.c.bf16 %v1351, %v1351
      %v1414 = vpack.c.bf16 %v1353, %v1353
      %v1415 = vpack.c.bf16 %v1355, %v1355
      %v1416 = vpack.c.bf16 %v1357, %v1357
      %v1417 = vpack.c.bf16 %v1359, %v1359
      %v1418 = vpack.c.bf16 %v1361, %v1361
      %v1419 = vpack.c.bf16 %v1363, %v1363
      %v1420 = vpack.c.bf16 %v1365, %v1365
      %v1421 = vpack.c.bf16 %v1367, %v1367
      %v1422 = vpack.c.bf16 %v1369, %v1369
      %v1423 = vpack.c.bf16 %v1371, %v1371
      %v1424 = vpack.c.bf16 %v1373, %v1373
      %v1425 = vpack.c.bf16 %v1375, %v1375
      %v1426 = vpack.c.bf16 %v1377, %v1377
      %v1427 = vpack.c.bf16 %v1379, %v1379
      %v1428 = vpack.c.bf16 %v1381, %v1381
      %v1429 = vpack.c.bf16 %v1383, %v1383
      %v1430 = vpack.c.bf16 %v1385, %v1385
      %v1431 = vpack.c.bf16 %v1387, %v1387
      %v1432 = vpack.c.bf16 %v1389, %v1389
      %v1433 = vpack.c.bf16 %v1391, %v1391
      %v1434 = vpack.c.bf16 %v1393, %v1393
      %v1435 = vpack.c.bf16 %v1395, %v1395
      %v1436 = vpack.c.bf16 %v1397, %v1397
      %v1437 = vpack.c.bf16 %v1399, %v1399
      %v1438 = vpack.c.bf16 %v1401, %v1401
      %v1439 = vpack.c.bf16 %v1403, %v1403
      %v1440 = vpack.c.bf16 %v1405, %v1405
      %v1441 = vpack.c.bf16 %v1407, %v1407
      %v1442 = vpack.c.bf16 %v1409, %v1409
      %1443 = vst [vmem:[%s313] sm:$0xf] %v1411
      %1444 = vst [vmem:[%s313 + $0x4] sm:$0xf] %v1412
      %1445 = vst [vmem:[%s313 + $0x10] sm:$0xf] %v1413
      %1446 = vst [vmem:[%s313 + $0x14] sm:$0xf] %v1414
      %1447 = vst [vmem:[%s313 + $0x20] sm:$0xf] %v1415
      %1448 = vst [vmem:[%s313 + $0x24] sm:$0xf] %v1416
      %1449 = vst [vmem:[%s313 + $0x30] sm:$0xf] %v1417
      %1450 = vst [vmem:[%s313 + $0x34] sm:$0xf] %v1418
      %1451 = vst [vmem:[%s313 + $0x40] sm:$0xf] %v1419
      %1452 = vst [vmem:[%s313 + $0x44] sm:$0xf] %v1420
      %1453 = vst [vmem:[%s313 + $0x50] sm:$0xf] %v1421
      %1454 = vst [vmem:[%s313 + $0x54] sm:$0xf] %v1422
      %1455 = vst [vmem:[%s313 + $0x60] sm:$0xf] %v1423
      %1456 = vst [vmem:[%s313 + $0x64] sm:$0xf] %v1424
      %1457 = vst [vmem:[%s313 + $0x70] sm:$0xf] %v1425
      %1458 = vst [vmem:[%s313 + $0x74] sm:$0xf] %v1426
      %1459 = vst [vmem:[%s313 + $0x80] sm:$0xf] %v1427
      %1460 = vst [vmem:[%s313 + $0x84] sm:$0xf] %v1428
      %1461 = vst [vmem:[%s313 + $0x90] sm:$0xf] %v1429
      %1462 = vst [vmem:[%s313 + $0x94] sm:$0xf] %v1430
      %1463 = vst [vmem:[%s313 + $0xa0] sm:$0xf] %v1431
      %1464 = vst [vmem:[%s313 + $0xa4] sm:$0xf] %v1432
      %1465 = vst [vmem:[%s313 + $0xb0] sm:$0xf] %v1433
      %1466 = vst [vmem:[%s313 + $0xb4] sm:$0xf] %v1434
      %1467 = vst [vmem:[%s313 + $0xc0] sm:$0xf] %v1435
      %1468 = vst [vmem:[%s313 + $0xc4] sm:$0xf] %v1436
      %1469 = vst [vmem:[%s313 + $0xd0] sm:$0xf] %v1437
      %1470 = vst [vmem:[%s313 + $0xd4] sm:$0xf] %v1438
      %1471 = vst [vmem:[%s313 + $0xe0] sm:$0xf] %v1439
      %1472 = vst [vmem:[%s313 + $0xe4] sm:$0xf] %v1440
      %1473 = vst [vmem:[%s313 + $0xf0] sm:$0xf] %v1441
      %1474 = vst [vmem:[%s313 + $0xf4] sm:$0xf] %v1442
      %v1475 = vpack.c.bf16 %v1348, %v1348
      %v1476 = vpack.c.bf16 %v1350, %v1350
      %v1477 = vpack.c.bf16 %v1352, %v1352
      %v1478 = vpack.c.bf16 %v1354, %v1354
      %v1479 = vpack.c.bf16 %v1356, %v1356
      %v1480 = vpack.c.bf16 %v1358, %v1358
      %v1481 = vpack.c.bf16 %v1360, %v1360
      %v1482 = vpack.c.bf16 %v1362, %v1362
      %v1483 = vpack.c.bf16 %v1364, %v1364
      %v1484 = vpack.c.bf16 %v1366, %v1366
      %v1485 = vpack.c.bf16 %v1368, %v1368
      %v1486 = vpack.c.bf16 %v1370, %v1370
      %v1487 = vpack.c.bf16 %v1372, %v1372
      %v1488 = vpack.c.bf16 %v1374, %v1374
      %v1489 = vpack.c.bf16 %v1376, %v1376
      %v1490 = vpack.c.bf16 %v1378, %v1378
      %v1491 = vpack.c.bf16 %v1380, %v1380
      %v1492 = vpack.c.bf16 %v1382, %v1382
      %v1493 = vpack.c.bf16 %v1384, %v1384
      %v1494 = vpack.c.bf16 %v1386, %v1386
      %v1495 = vpack.c.bf16 %v1388, %v1388
      %v1496 = vpack.c.bf16 %v1390, %v1390
      %v1497 = vpack.c.bf16 %v1392, %v1392
      %v1498 = vpack.c.bf16 %v1394, %v1394
      %v1499 = vpack.c.bf16 %v1396, %v1396
      %v1500 = vpack.c.bf16 %v1398, %v1398
      %v1501 = vpack.c.bf16 %v1400, %v1400
      %v1502 = vpack.c.bf16 %v1402, %v1402
      %v1503 = vpack.c.bf16 %v1404, %v1404
      %v1504 = vpack.c.bf16 %v1406, %v1406
      %v1505 = vpack.c.bf16 %v1408, %v1408
      %v1506 = vpack.c.bf16 %v1410, %v1410
      %1507 = vst [vmem:[%s313 + $0x8] sm:$0xf] %v1475
      %1508 = vst [vmem:[%s313 + $0xc] sm:$0xf] %v1476
      %1509 = vst [vmem:[%s313 + $0x18] sm:$0xf] %v1477
      %1510 = vst [vmem:[%s313 + $0x1c] sm:$0xf] %v1478
      %1511 = vst [vmem:[%s313 + $0x28] sm:$0xf] %v1479
      %1512 = vst [vmem:[%s313 + $0x2c] sm:$0xf] %v1480
      %1513 = vst [vmem:[%s313 + $0x38] sm:$0xf] %v1481
      %1514 = vst [vmem:[%s313 + $0x3c] sm:$0xf] %v1482
      %1515 = vst [vmem:[%s313 + $0x48] sm:$0xf] %v1483
      %1516 = vst [vmem:[%s313 + $0x4c] sm:$0xf] %v1484
      %1517 = vst [vmem:[%s313 + $0x58] sm:$0xf] %v1485
      %1518 = vst [vmem:[%s313 + $0x5c] sm:$0xf] %v1486
      %1519 = vst [vmem:[%s313 + $0x68] sm:$0xf] %v1487
      %1520 = vst [vmem:[%s313 + $0x6c] sm:$0xf] %v1488
      %1521 = vst [vmem:[%s313 + $0x78] sm:$0xf] %v1489
      %1522 = vst [vmem:[%s313 + $0x7c] sm:$0xf] %v1490
      %1523 = vst [vmem:[%s313 + $0x88] sm:$0xf] %v1491
      %1524 = vst [vmem:[%s313 + $0x8c] sm:$0xf] %v1492
      %1525 = vst [vmem:[%s313 + $0x98] sm:$0xf] %v1493
      %1526 = vst [vmem:[%s313 + $0x9c] sm:$0xf] %v1494
      %1527 = vst [vmem:[%s313 + $0xa8] sm:$0xf] %v1495
      %1528 = vst [vmem:[%s313 + $0xac] sm:$0xf] %v1496
      %1529 = vst [vmem:[%s313 + $0xb8] sm:$0xf] %v1497
      %1530 = vst [vmem:[%s313 + $0xbc] sm:$0xf] %v1498
      %1531 = vst [vmem:[%s313 + $0xc8] sm:$0xf] %v1499
      %1532 = vst [vmem:[%s313 + $0xcc] sm:$0xf] %v1500
      %1533 = vst [vmem:[%s313 + $0xd8] sm:$0xf] %v1501
      %1534 = vst [vmem:[%s313 + $0xdc] sm:$0xf] %v1502
      %1535 = vst [vmem:[%s313 + $0xe8] sm:$0xf] %v1503
      %1536 = vst [vmem:[%s313 + $0xec] sm:$0xf] %v1504
      %1537 = vst [vmem:[%s313 + $0xf8] sm:$0xf] %v1505
      %1538 = vst [vmem:[%s313 + $0xfc] sm:$0xf] %v1506
      %s1539 = smul.u32 16, %s20
      %p1540 = scmp.lt.s32.totalorder %s19, 1
      %s1541 = scalar_select %p1540, %s19, 1
      %p1542 = scmp.lt.s32.totalorder %s1539, 15
      %s1543 = scalar_select %p1542, %s1539, 15
      %s1544 = smul.addr %s1543, 4
      %s1545 = smul.addr %s1541, 64
      %s1546 = sadd.s32 %s1544, %s1545
      %s1547 = smul.addr %s1546, 4
      %s1548 = scalar_lea.vmem %s4, %s1547
      // Predicated region
      $region37: #{hyper_synthesis_forward.4} parent=35 // pred_check
        %p1549 = pneg %p149
      $region38: #{hyper_synthesis_forward.4} parent=35 // pred_check_branch
        %1551 = sbr.rel (%p1549) target = $region40
      $region39: #{hyper_synthesis_forward.4} parent=35 // pred_region
        %s1552 = smul.u32 16, %s20
      $region40: #{hyper_synthesis_forward.4} parent=35 // pred_fallthru
        _
    $region36: #{hyper_synthesis_forward.4} parent=5 // pred_fallthru
      _
    %p1553 = scmp.le.s32.totalorder 2, %s10
    // Predicated region
    $region41: #{hyper_synthesis_forward.4} parent=5 // pred_check
      %p1554 = pneg %p1553
    $region42: #{hyper_synthesis_forward.4} parent=5 // pred_check_branch
      %1556 = sbr.rel (%p1554) target = $region44
    $region43: #{hyper_synthesis_forward.4} parent=5 // pred_region
      %s1557 = ssub.s32 %s10, 2
      // Predicated region
      $region45: #{hyper_synthesis_forward.4} parent=43 // pred_check
        %p1558 = pneg %p155
      $region46: #{hyper_synthesis_forward.4} parent=43 // pred_check_branch
        %1560 = sbr.rel (%p1558) target = $region48
      $region47: #{hyper_synthesis_forward.4} parent=43 // pred_region
        %s1561 = smul.u32 16, %s22
        %p1562 = scmp.lt.s32.totalorder %s21, 1
        %s1563 = scalar_select %p1562, %s21, 1
        %p1564 = scmp.lt.s32.totalorder %s1561, 15
        %s1565 = scalar_select %p1564, %s1561, 15
        %s1566 = smul.addr %s1565, 4
        %s1567 = smul.addr %s1563, 64
        %s1568 = sadd.s32 %s1566, %s1567
        %s1569 = smul.addr %s1568, 4
        %s1570 = scalar_lea.vmem %s4, %s1569
      $region48: #{hyper_synthesis_forward.4} parent=43 // pred_fallthru
        _
    $region44: #{hyper_synthesis_forward.4} parent=5 // pred_fallthru
      _
  $region6: #{hyper_synthesis_forward.4} parent=0 // loop_footer
    %s14 = sadd.s32 1, %s10
  $region7: #{hyper_synthesis_forward.4} parent=0 // loop_footer_branch
    %9 = sbr.rel target = $region3
  $region8: #{hyper_synthesis_forward.4} parent=0 // loop_exit
    _

// kernel: hyper_synthesis_forward.5
$region0: #{hyper_synthesis_forward.5}
  #allocation0 [shape = 'u32[]', space=smem, size = 0x4, offset = 0x4, fixed_abs, tag = 'smem constant byte address 0x4 - core index']
  #allocation1 [shape = 'u32[72,128]{1,0:T(1,128)}', space=vmem, size = 0x9000, scoped, tag = 'internal scratch']
  %s0 = inlined_call_operand.vmem [shape: bf16[2,34,34,64], index: 0, kind: input, shape index: {}, may-alias: {0,1,2}]
  %s1 = inlined_call_operand.vmem [shape: bf16[2,34,34,64], index: 1, kind: input, shape index: {}, may-alias: {0,1,2}]
  %s2 = inlined_call_operand.vmem [shape: bf16[2,34,34,64], index: 2, kind: input, shape index: {}, may-alias: {0,1,2}]
  %s3 = inlined_call_operand.vmem [shape: bf16[3,192,128], index: 3, kind: input, shape index: {}]
  %s4 = inlined_call_operand.vmem [shape: f32[1,128], index: 4, kind: input, shape index: {}]
  %s5 = inlined_call_operand.hbm [shape: f32[2,32,32,128], index: 5, kind: output, shape index: {}]
  %s6 = sld [smem:[#allocation0]]
  $region53: #{hyper_synthesis_forward.5} parent=0
    _
  %s8 = ssub.s32 1, %s6
  %s9 = scalar_select 0, %s8, %s6
  $region1: #{hyper_synthesis_forward.5} parent=0
    #allocation2 [shape = 'u8[524288]{0}', space=vmem, size = 0x80000, scoped, tag = 'output window, operand 0']
    #allocation3 [shape = 's32[2]{0}', space=sflag, size = 0x8, scoped, tag = 'scoped memory for hyper_synthesis_forward.5']
    %10 = vsyncpa [#allocation3], 0
    %s11 = scalar_lea.sflag [#allocation3], 1
    %12 = vsyncpa %s11, 0
    loop: start=0, step=1, limit=6
    $region2: #{hyper_synthesis_forward.5} parent=1 // loop_pre_header
      _
    $region3: #{hyper_synthesis_forward.5} parent=1 // loop_header
      %s14 = sphi 0, %s18
      %p15 = scmp.ge.s32.totalorder %s14, 6
      %s21 = sphi 0, %s33
      %s22 = sphi 0, %s29
      %s23 = sphi 0, %s21
      %s24 = sphi 0, %s22
      %s25 = sphi 0, %s23
      %s26 = sphi 0, %s24
      %s38 = sphi 0, %s40
      %s41 = sphi 0, %s38
      %s42 = sphi 0, %s41
      %s58 = sphi 0, %s42
      %s70 = sphi 0, %s72
      %s73 = sphi 0, %s70
      %s74 = sphi 0, %s73
      %s90 = sphi 0, %s74
      %s104 = sphi 0, %s106
      %s107 = sphi 0, %s104
      %s108 = sphi 0, %s107
      %s124 = sphi 0, %s108
      %s128 = sphi 0, %s128
      %s130 = sphi 0, %s128
      %s131 = sphi 0, %s130
      %s145 = sphi 0, %s131
      %s149 = sphi 0, %s149
      %s151 = sphi 0, %s149
      %s152 = sphi 0, %s151
      %s166 = sphi 0, %s152
      %s174 = sphi 0, %s176
      %s177 = sphi 0, %s174
      %s178 = sphi 0, %s177
      %s194 = sphi 0, %s178
    $region4: #{hyper_synthesis_forward.5} parent=1 // loop_header_branch
      %17 = sbr.rel (%p15) target = $region8
    $region5: #{hyper_synthesis_forward.5} parent=1 // loop_body
      %s19 = ssub.s32 %s14, 1
      %s20 = ssub.s32 %s14, 2
      %s27 = sadd.s32 1, %s22
      %p28 = scmp.ge.s32.totalorder %s27, 2
      %s29 = scalar_select %p28, 0, %s27
      %s30 = sadd.s32 1, %s21
      %s31 = scalar_select %p28, %s30, %s21
      %p32 = scmp.ge.s32.totalorder %s31, 2
      %s33 = scalar_select %p32, 0, %s31
      %s34 = ssub.s32 %s21, %s33
      %s35 = ssub.s32 %s22, %s29
      %s36 = sor.u32 %s34, %s35
      %p37 = scmp.eq.s32.totalorder %s36, 0
      %s39 = sadd.s32 %s38, 1
      %s40 = scalar_select %p37, %s38, %s39
      %p43 = pneg %p37
      %p44 = scmp.eq.s32.totalorder %s14, 3
      %p45 = por %p43, %p44
      %p46 = scmp.ne.s32.totalorder %s38, %s41
      %p47 = scmp.eq.s32.totalorder %s14, 0
      %p48 = por %p46, %p47
      %p49 = scmp.ne.s32.totalorder %s38, %s41
      %p50 = scmp.eq.s32.totalorder %s19, 3
      %p51 = por %p49, %p50
      %p52 = scmp.ne.s32.totalorder %s41, %s42
      %p53 = scmp.eq.s32.totalorder %s19, 0
      %p54 = por %p52, %p53
      %p55 = scmp.ne.s32.totalorder %s41, %s42
      %p56 = scmp.eq.s32.totalorder %s20, 3
      %p57 = por %p55, %p56
      %p59 = scmp.ne.s32.totalorder %s42, %s58
      %p60 = scmp.eq.s32.totalorder %s20, 0
      %p61 = por %p59, %p60
      %s62 = sadd.s32 %s22, 1
      %s63 = smul.u32 %s62, 16
      %s64 = sadd.s32 %s29, 1
      %s65 = smul.u32 %s64, 16
      %s66 = ssub.s32 %s21, %s33
      %s67 = ssub.s32 %s63, %s65
      %s68 = sor.u32 %s66, %s67
      %p69 = scmp.eq.s32.totalorder %s68, 0
      %s71 = sadd.s32 %s70, 1
      %s72 = scalar_select %p69, %s70, %s71
      %p75 = pneg %p69
      %p76 = scmp.eq.s32.totalorder %s14, 3
      %p77 = por %p75, %p76
      %p78 = scmp.ne.s32.totalorder %s70, %s73
      %p79 = scmp.eq.s32.totalorder %s14, 0
      %p80 = por %p78, %p79
      %p81 = scmp.ne.s32.totalorder %s70, %s73
      %p82 = scmp.eq.s32.totalorder %s19, 3
      %p83 = por %p81, %p82
      %p84 = scmp.ne.s32.totalorder %s73, %s74
      %p85 = scmp.eq.s32.totalorder %s19, 0
      %p86 = por %p84, %p85
      %p87 = scmp.ne.s32.totalorder %s73, %s74
      %p88 = scmp.eq.s32.totalorder %s20, 3
      %p89 = por %p87, %p88
      %p91 = scmp.ne.s32.totalorder %s74, %s90
      %p92 = scmp.eq.s32.totalorder %s20, 0
      %p93 = por %p91, %p92
      %s94 = sadd.s32 %s22, 1
      %s95 = smul.u32 %s94, 16
      %s96 = sadd.s32 %s95, 1
      %s97 = sadd.s32 %s29, 1
      %s98 = smul.u32 %s97, 16
      %s99 = sadd.s32 %s98, 1
      %s100 = ssub.s32 %s21, %s33
      %s101 = ssub.s32 %s96, %s99
      %s102 = sor.u32 %s100, %s101
      %p103 = scmp.eq.s32.totalorder %s102, 0
      %s105 = sadd.s32 %s104, 1
      %s106 = scalar_select %p103, %s104, %s105
      %p109 = pneg %p103
      %p110 = scmp.eq.s32.totalorder %s14, 3
      %p111 = por %p109, %p110
      %p112 = scmp.ne.s32.totalorder %s104, %s107
      %p113 = scmp.eq.s32.totalorder %s14, 0
      %p114 = por %p112, %p113
      %p115 = scmp.ne.s32.totalorder %s104, %s107
      %p116 = scmp.eq.s32.totalorder %s19, 3
      %p117 = por %p115, %p116
      %p118 = scmp.ne.s32.totalorder %s107, %s108
      %p119 = scmp.eq.s32.totalorder %s19, 0
      %p120 = por %p118, %p119
      %p121 = scmp.ne.s32.totalorder %s107, %s108
      %p122 = scmp.eq.s32.totalorder %s20, 3
      %p123 = por %p121, %p122
      %p125 = scmp.ne.s32.totalorder %s108, %s124
      %p126 = scmp.eq.s32.totalorder %s20, 0
      %p127 = por %p125, %p126
      %s129 = sadd.s32 %s128, 1
      %p132 = scmp.eq.s32.totalorder %s14, 3
      %p133 = scmp.ne.s32.totalorder %s128, %s130
      %p134 = scmp.eq.s32.totalorder %s14, 0
      %p135 = por %p133, %p134
      %p136 = scmp.ne.s32.totalorder %s128, %s130
      %p137 = scmp.eq.s32.totalorder %s19, 3
      %p138 = por %p136, %p137
      %p139 = scmp.ne.s32.totalorder %s130, %s131
      %p140 = scmp.eq.s32.totalorder %s19, 0
      %p141 = por %p139, %p140
      %p142 = scmp.ne.s32.totalorder %s130, %s131
      %p143 = scmp.eq.s32.totalorder %s20, 3
      %p144 = por %p142, %p143
      %p146 = scmp.ne.s32.totalorder %s131, %s145
      %p147 = scmp.eq.s32.totalorder %s20, 0
      %p148 = por %p146, %p147
      %s150 = sadd.s32 %s149, 1
      %p153 = scmp.eq.s32.totalorder %s14, 3
      %p154 = scmp.ne.s32.totalorder %s149, %s151
      %p155 = scmp.eq.s32.totalorder %s14, 0
      %p156 = por %p154, %p155
      %p157 = scmp.ne.s32.totalorder %s149, %s151
      %p158 = scmp.eq.s32.totalorder %s19, 3
      %p159 = por %p157, %p158
      %p160 = scmp.ne.s32.totalorder %s151, %s152
      %p161 = scmp.eq.s32.totalorder %s19, 0
      %p162 = por %p160, %p161
      %p163 = scmp.ne.s32.totalorder %s151, %s152
      %p164 = scmp.eq.s32.totalorder %s20, 3
      %p165 = por %p163, %p164
      %p167 = scmp.ne.s32.totalorder %s152, %s166
      %p168 = scmp.eq.s32.totalorder %s20, 0
      %p169 = por %p167, %p168
      %s170 = ssub.s32 %s21, %s33
      %s171 = ssub.s32 %s22, %s29
      %s172 = sor.u32 %s170, %s171
      %p173 = scmp.eq.s32.totalorder %s172, 0
      %s175 = sadd.s32 %s174, 1
      %s176 = scalar_select %p173, %s174, %s175
      %p179 = pneg %p173
      %p180 = scmp.eq.s32.totalorder %s14, 3
      %p181 = por %p179, %p180
      %p182 = scmp.ne.s32.totalorder %s174, %s177
      %p183 = scmp.eq.s32.totalorder %s14, 0
      %p184 = por %p182, %p183
      %p185 = scmp.ne.s32.totalorder %s174, %s177
      %p186 = scmp.eq.s32.totalorder %s19, 3
      %p187 = por %p185, %p186
      %p188 = scmp.ne.s32.totalorder %s177, %s178
      %p189 = scmp.eq.s32.totalorder %s19, 0
      %p190 = por %p188, %p189
      %p191 = scmp.ne.s32.totalorder %s177, %s178
      %p192 = scmp.eq.s32.totalorder %s20, 3
      %p193 = por %p191, %p192
      %p195 = scmp.ne.s32.totalorder %s178, %s194
      %p196 = scmp.eq.s32.totalorder %s20, 0
      %p197 = por %p195, %p196
      %p198 = scmp.le.s32.totalorder 1, %s14
      %p199 = scmp.lt.s32.totalorder %s14, 5
      %p200 = pnand %p198, %p199
      %p201 = pneg %p200
      // Predicated region
      $region9: #{hyper_synthesis_forward.5} parent=5 // pred_check
        _
      $region10: #{hyper_synthesis_forward.5} parent=5 // pred_check_branch
        %203 = sbr.rel (%p200) target = $region12
      $region11: #{hyper_synthesis_forward.5} parent=5 // pred_region
        %s204 = ssub.s32 %s14, 1
        // Predicated region
        $region13: #{hyper_synthesis_forward.5} parent=11 // pred_check
          %p205 = pneg %p141
        $region14: #{hyper_synthesis_forward.5} parent=11 // pred_check_branch
          %207 = sbr.rel (%p205) target = $region16
        $region15: #{hyper_synthesis_forward.5} parent=11 // pred_region
          _
        $region16: #{hyper_synthesis_forward.5} parent=11 // pred_fallthru
          _
        // Predicated region
        $region17: #{hyper_synthesis_forward.5} parent=11 // pred_check
          %p208 = pneg %p162
        $region18: #{hyper_synthesis_forward.5} parent=11 // pred_check_branch
          %210 = sbr.rel (%p208) target = $region20
        $region19: #{hyper_synthesis_forward.5} parent=11 // pred_region
          _
        $region20: #{hyper_synthesis_forward.5} parent=11 // pred_fallthru
          _
      $region12: #{hyper_synthesis_forward.5} parent=5 // pred_fallthru
        _
      %p211 = scmp.lt.s32.totalorder %s14, 4
      // Predicated region
      $region21: #{hyper_synthesis_forward.5} parent=5 // pred_check
        %p212 = pneg %p211
      $region22: #{hyper_synthesis_forward.5} parent=5 // pred_check_branch
        %214 = sbr.rel (%p212) target = $region24
      $region23: #{hyper_synthesis_forward.5} parent=5 // pred_region
        // Predicated region
        $region25: #{hyper_synthesis_forward.5} parent=23 // pred_check
          %p215 = pneg %p48
        $region26: #{hyper_synthesis_forward.5} parent=23 // pred_check_branch
          %217 = sbr.rel (%p215) target = $region28
        $region27: #{hyper_synthesis_forward.5} parent=23 // pred_region
          %s218 = smul.u32 16, %s22
          %s219 = ssub.s32 34, %s218
          %p220 = scmp.lt.s32.totalorder %s219, 16
          %s221 = scalar_select %p220, %s219, 16
          %s222 = smul.u32 4, %s221
          %s223 = smul.u32 %s222, 5
          %p224 = scmp.lt.s32.totalorder %s21, 1
          %s225 = scalar_select %p224, %s21, 1
          %p226 = scmp.lt.s32.totalorder %s218, 33
          %s227 = scalar_select %p226, %s218, 33
          %s228 = smul.addr %s227, 5
          %s229 = smul.addr %s225, 170
          %s230 = sadd.s32 %s228, %s229
          %s231 = smul.addr %s230, 4
          %s232 = scalar_lea.vmem %s0, %s231
          %s233 = smul.u32 16, %s22
          %s234 = ssub.s32 34, %s233
          %p235 = scmp.lt.s32.totalorder %s234, 16
          %s236 = scalar_select %p235, %s234, 16
          %s237 = smul.u32 4, %s236
          %s238 = smul.u32 %s237, 5
        $region28: #{hyper_synthesis_forward.5} parent=23 // pred_fallthru
          _
        // Predicated region
        $region29: #{hyper_synthesis_forward.5} parent=23 // pred_check
          %p239 = pneg %p80
        $region30: #{hyper_synthesis_forward.5} parent=23 // pred_check_branch
          %241 = sbr.rel (%p239) target = $region32
        $region31: #{hyper_synthesis_forward.5} parent=23 // pred_region
          %s242 = sadd.s32 %s22, 1
          %s243 = smul.u32 %s242, 16
          %p244 = scmp.lt.s32.totalorder %s21, 1
          %s245 = scalar_select %p244, %s21, 1
          %p246 = scmp.lt.s32.totalorder %s243, 33
          %s247 = scalar_select %p246, %s243, 33
          %s248 = smul.addr %s247, 5
          %s249 = smul.addr %s245, 170
          %s250 = sadd.s32 %s248, %s249
          %s251 = smul.addr %s250, 4
          %s252 = scalar_lea.vmem %s1, %s251
          %s253 = sadd.s32 %s22, 1
          %s254 = smul.u32 %s253, 16
        $region32: #{hyper_synthesis_forward.5} parent=23 // pred_fallthru
          _
        // Predicated region
        $region33: #{hyper_synthesis_forward.5} parent=23 // pred_check
          %p255 = pneg %p114
        $region34: #{hyper_synthesis_forward.5} parent=23 // pred_check_branch
          %257 = sbr.rel (%p255) target = $region36
        $region35: #{hyper_synthesis_forward.5} parent=23 // pred_region
          %s258 = sadd.s32 %s22, 1
          %s259 = smul.u32 %s258, 16
          %s260 = sadd.s32 %s259, 1
          %p261 = scmp.lt.s32.totalorder %s21, 1
          %s262 = scalar_select %p261, %s21, 1
          %p263 = scmp.lt.s32.totalorder %s260, 33
          %s264 = scalar_select %p263, %s260, 33
          %s265 = smul.addr %s264, 5
          %s266 = smul.addr %s262, 170
          %s267 = sadd.s32 %s265, %s266
          %s268 = smul.addr %s267, 4
          %s269 = scalar_lea.vmem %s2, %s268
          %s270 = sadd.s32 %s22, 1
          %s271 = smul.u32 %s270, 16
          %s272 = sadd.s32 %s271, 1
        $region36: #{hyper_synthesis_forward.5} parent=23 // pred_fallthru
          _
      $region24: #{hyper_synthesis_forward.5} parent=5 // pred_fallthru
        _
      %p273 = scmp.le.s32.totalorder 1, %s14
      %p274 = scmp.lt.s32.totalorder %s14, 5
      %p275 = pnand %p273, %p274
      %p276 = pneg %p275
      // Predicated region
      $region37: #{hyper_synthesis_forward.5} parent=5 // pred_check
        _
      $region38: #{hyper_synthesis_forward.5} parent=5 // pred_check_branch
        %278 = sbr.rel (%p275) target = $region40
      $region39: #{hyper_synthesis_forward.5} parent=5 // pred_region
        %s279 = ssub.s32 %s14, 1
        %s280 = smul.u32 16, %s24
        %s281 = ssub.s32 34, %s280
        %p282 = scmp.lt.s32.totalorder %s281, 16
        %s283 = scalar_select %p282, %s281, 16
        %s284 = smul.u32 4, %s283
        %s285 = smul.u32 %s284, 5
        %p286 = scmp.lt.s32.totalorder %s23, 1
        %s287 = scalar_select %p286, %s23, 1
        %p288 = scmp.lt.s32.totalorder %s280, 33
        %s289 = scalar_select %p288, %s280, 33
        %s290 = smul.addr %s289, 5
        %s291 = smul.addr %s287, 170
        %s292 = sadd.s32 %s290, %s291
        %s293 = smul.addr %s292, 4
        %s294 = scalar_lea.vmem %s0, %s293
        %p295 = pneg %p54
        %p296 = pneg %p51
        %s297 = sadd.s32 %s24, 1
        %s298 = smul.u32 %s297, 16
        %p299 = scmp.lt.s32.totalorder %s23, 1
        %s300 = scalar_select %p299, %s23, 1
        %p301 = scmp.lt.s32.totalorder %s298, 33
        %s302 = scalar_select %p301, %s298, 33
        %s303 = smul.addr %s302, 5
        %s304 = smul.addr %s300, 170
        %s305 = sadd.s32 %s303, %s304
        %s306 = smul.addr %s305, 4
        %s307 = scalar_lea.vmem %s1, %s306
        %p308 = pneg %p86
        %p309 = pneg %p83
        %s310 = sadd.s32 %s24, 1
        %s311 = smul.u32 %s310, 16
        %s312 = sadd.s32 %s311, 1
        %p313 = scmp.lt.s32.totalorder %s23, 1
        %s314 = scalar_select %p313, %s23, 1
        %p315 = scmp.lt.s32.totalorder %s312, 33
        %s316 = scalar_select %p315, %s312, 33
        %s317 = smul.addr %s316, 5
        %s318 = smul.addr %s314, 170
        %s319 = sadd.s32 %s317, %s318
        %s320 = smul.addr %s319, 4
        %s321 = scalar_lea.vmem %s2, %s320
        %p322 = pneg %p120
        %p323 = pneg %p117
        %p324 = pneg %p141
        %p325 = pneg %p138
        %p326 = pneg %p162
        %p327 = pneg %p159
        %p328 = pneg %p190
        %p329 = pneg %p187
        %s330 = sand.u32 %s177, 1
        %s331 = scalar_lea.sflag [#allocation3], %s330
        %s332 = sand.u32 %s177, 1
        %s333 = smul.addr %s332, 512
        %s334 = scalar_lea.vmem [#allocation2], %s333
        %s335 = smul.u32 16, %s24
        %s336 = ssub.s32 34, %s335
        %p337 = scmp.lt.s32.totalorder %s336, 16
        %s338 = scalar_select %p337, %s336, 16
        %s339 = smul.u32 4, %s338
        %s340 = smul.u32 %s339, 5
        %p341 = scmp.lt.s32.totalorder %s23, 1
        %s342 = scalar_select %p341, %s23, 1
        %p343 = scmp.lt.s32.totalorder %s335, 33
        %s344 = scalar_select %p343, %s335, 33
        %s345 = smul.addr %s344, 5
        %s346 = smul.addr %s342, 170
        %s347 = sadd.s32 %s345, %s346
        %s348 = smul.addr %s347, 4
        %s349 = scalar_lea.vmem %s0, %s348
        %s350 = smul.u32 16, %s24
        %s351 = ssub.s32 34, %s350
        %p352 = scmp.lt.s32.totalorder %s351, 16
        %s353 = scalar_select %p352, %s351, 16
        %s354 = smul.u32 4, %s353
        %s355 = smul.u32 %s354, 5
        %s356 = sadd.s32 %s24, 1
        %s357 = smul.u32 %s356, 16
        %p358 = scmp.lt.s32.totalorder %s23, 1
        %s359 = scalar_select %p358, %s23, 1
        %p360 = scmp.lt.s32.totalorder %s357, 33
        %s361 = scalar_select %p360, %s357, 33
        %s362 = smul.addr %s361, 5
        %s363 = smul.addr %s359, 170
        %s364 = sadd.s32 %s362, %s363
        %s365 = smul.addr %s364, 4
        %s366 = scalar_lea.vmem %s1, %s365
        %s367 = sadd.s32 %s24, 1
        %s368 = smul.u32 %s367, 16
        %s369 = sadd.s32 %s24, 1
        %s370 = smul.u32 %s369, 16
        %s371 = sadd.s32 %s370, 1
        %p372 = scmp.lt.s32.totalorder %s23, 1
        %s373 = scalar_select %p372, %s23, 1
        %p374 = scmp.lt.s32.totalorder %s371, 33
        %s375 = scalar_select %p374, %s371, 33
        %s376 = smul.addr %s375, 5
        %s377 = smul.addr %s373, 170
        %s378 = sadd.s32 %s376, %s377
        %s379 = smul.addr %s378, 4
        %s380 = scalar_lea.vmem %s2, %s379
        %s381 = sadd.s32 %s24, 1
        %s382 = smul.u32 %s381, 16
        %s383 = sadd.s32 %s382, 1
        %s384 = smul.u32 16, %s24
        %v386 = vld [vmem:[%s349] sm:$0xf]
        %v387 = vld [vmem:[%s349 + $0x4] sm:$0xf]
        %v388 = vld [vmem:[%s349 + $0x8] sm:$0xf]
        %v389 = vld [vmem:[%s349 + $0xc] sm:$0xf]
        %v390 = vld [vmem:[%s349 + $0x10] sm:$0x1]
        %v391 = vld [vmem:[%s349 + $0x14] sm:$0xf]
        %v392 = vld [vmem:[%s349 + $0x18] sm:$0xf]
        %v393 = vld [vmem:[%s349 + $0x1c] sm:$0xf]
        %v394 = vld [vmem:[%s349 + $0x20] sm:$0xf]
        %v395 = vld [vmem:[%s349 + $0x24] sm:$0x1]
        %v396 = vld [vmem:[%s349 + $0x28] sm:$0xf]
        %v397 = vld [vmem:[%s349 + $0x2c] sm:$0xf]
        %v398 = vld [vmem:[%s349 + $0x30] sm:$0xf]
        %v399 = vld [vmem:[%s349 + $0x34] sm:$0xf]
        %v400 = vld [vmem:[%s349 + $0x38] sm:$0x1]
        %v401 = vld [vmem:[%s349 + $0x3c] sm:$0xf]
        %v402 = vld [vmem:[%s349 + $0x40] sm:$0xf]
        %v403 = vld [vmem:[%s349 + $0x44] sm:$0xf]
        %v404 = vld [vmem:[%s349 + $0x48] sm:$0xf]
        %v405 = vld [vmem:[%s349 + $0x4c] sm:$0x1]
        %v406 = vld [vmem:[%s349 + $0x50] sm:$0xf]
        %v407 = vld [vmem:[%s349 + $0x54] sm:$0xf]
        %v408 = vld [vmem:[%s349 + $0x58] sm:$0xf]
        %v409 = vld [vmem:[%s349 + $0x5c] sm:$0xf]
        %v410 = vld [vmem:[%s349 + $0x60] sm:$0x1]
        %v411 = vld [vmem:[%s349 + $0x64] sm:$0xf]
        %v412 = vld [vmem:[%s349 + $0x68] sm:$0xf]
        %v413 = vld [vmem:[%s349 + $0x6c] sm:$0xf]
        %v414 = vld [vmem:[%s349 + $0x70] sm:$0xf]
        %v415 = vld [vmem:[%s349 + $0x74] sm:$0x1]
        %v416 = vld [vmem:[%s349 + $0x78] sm:$0xf]
        %v417 = vld [vmem:[%s349 + $0x7c] sm:$0xf]
        %v418 = vld [vmem:[%s349 + $0x80] sm:$0xf]
        %v419 = vld [vmem:[%s349 + $0x84] sm:$0xf]
        %v420 = vld [vmem:[%s349 + $0x88] sm:$0x1]
        %v421 = vld [vmem:[%s349 + $0x8c] sm:$0xf]
        %v422 = vld [vmem:[%s349 + $0x90] sm:$0xf]
        %v423 = vld [vmem:[%s349 + $0x94] sm:$0xf]
        %v424 = vld [vmem:[%s349 + $0x98] sm:$0xf]
        %v425 = vld [vmem:[%s349 + $0x9c] sm:$0x1]
        %v426 = vld [vmem:[%s349 + $0xa0] sm:$0xf]
        %v427 = vld [vmem:[%s349 + $0xa4] sm:$0xf]
        %v428 = vld [vmem:[%s349 + $0xa8] sm:$0xf]
        %v429 = vld [vmem:[%s349 + $0xac] sm:$0xf]
        %v430 = vld [vmem:[%s349 + $0xb0] sm:$0x1]
        %v431 = vld [vmem:[%s349 + $0xb4] sm:$0xf]
        %v432 = vld [vmem:[%s349 + $0xb8] sm:$0xf]
        %v433 = vld [vmem:[%s349 + $0xbc] sm:$0xf]
        %v434 = vld [vmem:[%s349 + $0xc0] sm:$0xf]
        %v435 = vld [vmem:[%s349 + $0xc4] sm:$0x1]
        %v436 = vld [vmem:[%s349 + $0xc8] sm:$0xf]
        %v437 = vld [vmem:[%s349 + $0xcc] sm:$0xf]
        %v438 = vld [vmem:[%s349 + $0xd0] sm:$0xf]
        %v439 = vld [vmem:[%s349 + $0xd4] sm:$0xf]
        %v440 = vld [vmem:[%s349 + $0xd8] sm:$0x1]
        %v441 = vld [vmem:[%s349 + $0xdc] sm:$0xf]
        %v442 = vld [vmem:[%s349 + $0xe0] sm:$0xf]
        %v443 = vld [vmem:[%s349 + $0xe4] sm:$0xf]
        %v444 = vld [vmem:[%s349 + $0xe8] sm:$0xf]
        %v445 = vld [vmem:[%s349 + $0xec] sm:$0x1]
        %v446 = vld [vmem:[%s349 + $0xf0] sm:$0xf]
        %v447 = vld [vmem:[%s349 + $0xf4] sm:$0xf]
        %v448 = vld [vmem:[%s349 + $0xf8] sm:$0xf]
        %v449 = vld [vmem:[%s349 + $0xfc] sm:$0xf]
        %v450 = vld [vmem:[%s349 + $0x100] sm:$0x1]
        %v451 = vld [vmem:[%s349 + $0x104] sm:$0xf]
        %v452 = vld [vmem:[%s349 + $0x108] sm:$0xf]
        %v453 = vld [vmem:[%s349 + $0x10c] sm:$0xf]
        %v454 = vld [vmem:[%s349 + $0x110] sm:$0xf]
        %v455 = vld [vmem:[%s349 + $0x114] sm:$0x1]
        %v456 = vld [vmem:[%s349 + $0x118] sm:$0xf]
        %v457 = vld [vmem:[%s349 + $0x11c] sm:$0xf]
        %v458 = vld [vmem:[%s349 + $0x120] sm:$0xf]
        %v459 = vld [vmem:[%s349 + $0x124] sm:$0xf]
        %v460 = vld [vmem:[%s349 + $0x128] sm:$0x1]
        %v461 = vld [vmem:[%s349 + $0x12c] sm:$0xf]
        %v462 = vld [vmem:[%s349 + $0x130] sm:$0xf]
        %v463 = vld [vmem:[%s349 + $0x134] sm:$0xf]
        %v464 = vld [vmem:[%s349 + $0x138] sm:$0xf]
        %v465 = vld [vmem:[%s349 + $0x13c] sm:$0x1]
        %v466 = vld [vmem:[%s366] sm:$0xf]
        %v467 = vld [vmem:[%s366 + $0x4] sm:$0xf]
        %v468 = vld [vmem:[%s366 + $0x8] sm:$0xf]
        %v469 = vld [vmem:[%s366 + $0xc] sm:$0xf]
        %v470 = vld [vmem:[%s366 + $0x10] sm:$0x1]
        %v471 = vld [vmem:[%s380] sm:$0xf]
        %v472 = vld [vmem:[%s380 + $0x4] sm:$0xf]
        %v473 = vld [vmem:[%s380 + $0x8] sm:$0xf]
        %v474 = vld [vmem:[%s380 + $0xc] sm:$0xf]
        %v475 = vld [vmem:[%s380 + $0x10] sm:$0x1]
        %v540 = vunpack.c.l.b16 %v386
        %v541 = vunpack.c.l.b16 %v387
        %v542 = vunpack.c.l.b16 %v388
        %v543 = vunpack.c.l.b16 %v389
        %v544 = vunpack.c.l.b16 %v391
        %v545 = vunpack.c.l.b16 %v392
        %v546 = vunpack.c.l.b16 %v393
        %v547 = vunpack.c.l.b16 %v394
        %v548 = vunpack.c.l.b16 %v396
        %v549 = vunpack.c.l.b16 %v397
        %v550 = vunpack.c.l.b16 %v398
        %v551 = vunpack.c.l.b16 %v399
        %v552 = vunpack.c.l.b16 %v401
        %v553 = vunpack.c.l.b16 %v402
        %v554 = vunpack.c.l.b16 %v403
        %v555 = vunpack.c.l.b16 %v404
        %v556 = vunpack.c.l.b16 %v406
        %v557 = vunpack.c.l.b16 %v407
        %v558 = vunpack.c.l.b16 %v408
        %v559 = vunpack.c.l.b16 %v409
        %v560 = vunpack.c.l.b16 %v411
        %v561 = vunpack.c.l.b16 %v412
        %v562 = vunpack.c.l.b16 %v413
        %v563 = vunpack.c.l.b16 %v414
        %v564 = vunpack.c.l.b16 %v416
        %v565 = vunpack.c.l.b16 %v417
        %v566 = vunpack.c.l.b16 %v418
        %v567 = vunpack.c.l.b16 %v419
        %v568 = vunpack.c.l.b16 %v421
        %v569 = vunpack.c.l.b16 %v422
        %v570 = vunpack.c.l.b16 %v423
        %v571 = vunpack.c.l.b16 %v424
        %v572 = vunpack.c.l.b16 %v426
        %v573 = vunpack.c.l.b16 %v427
        %v574 = vunpack.c.l.b16 %v428
        %v575 = vunpack.c.l.b16 %v429
        %v576 = vunpack.c.l.b16 %v431
        %v577 = vunpack.c.l.b16 %v432
        %v578 = vunpack.c.l.b16 %v433
        %v579 = vunpack.c.l.b16 %v434
        %v580 = vunpack.c.l.b16 %v436
        %v581 = vunpack.c.l.b16 %v437
        %v582 = vunpack.c.l.b16 %v438
        %v583 = vunpack.c.l.b16 %v439
        %v584 = vunpack.c.l.b16 %v441
        %v585 = vunpack.c.l.b16 %v442
        %v586 = vunpack.c.l.b16 %v443
        %v587 = vunpack.c.l.b16 %v444
        %v588 = vunpack.c.l.b16 %v446
        %v589 = vunpack.c.l.b16 %v447
        %v590 = vunpack.c.l.b16 %v448
        %v591 = vunpack.c.l.b16 %v449
        %v592 = vunpack.c.l.b16 %v451
        %v593 = vunpack.c.l.b16 %v452
        %v594 = vunpack.c.l.b16 %v453
        %v595 = vunpack.c.l.b16 %v454
        %v596 = vunpack.c.l.b16 %v456
        %v597 = vunpack.c.l.b16 %v457
        %v598 = vunpack.c.l.b16 %v458
        %v599 = vunpack.c.l.b16 %v459
        %v600 = vunpack.c.l.b16 %v461
        %v601 = vunpack.c.l.b16 %v462
        %v602 = vunpack.c.l.b16 %v463
        %v603 = vunpack.c.l.b16 %v464
        %v604 = vpack.c.b16 %v541, %v540
        %v605 = vpack.c.b16 %v543, %v542
        %v606 = vpack.c.b16 %v545, %v544
        %v607 = vpack.c.b16 %v547, %v546
        %v608 = vpack.c.b16 %v549, %v548
        %v609 = vpack.c.b16 %v551, %v550
        %v610 = vpack.c.b16 %v553, %v552
        %v611 = vpack.c.b16 %v555, %v554
        %v612 = vpack.c.b16 %v557, %v556
        %v613 = vpack.c.b16 %v559, %v558
        %v614 = vpack.c.b16 %v561, %v560
        %v615 = vpack.c.b16 %v563, %v562
        %v616 = vpack.c.b16 %v565, %v564
        %v617 = vpack.c.b16 %v567, %v566
        %v618 = vpack.c.b16 %v569, %v568
        %v619 = vpack.c.b16 %v571, %v570
        %v620 = vpack.c.b16 %v573, %v572
        %v621 = vpack.c.b16 %v575, %v574
        %v622 = vpack.c.b16 %v577, %v576
        %v623 = vpack.c.b16 %v579, %v578
        %v624 = vpack.c.b16 %v581, %v580
        %v625 = vpack.c.b16 %v583, %v582
        %v626 = vpack.c.b16 %v585, %v584
        %v627 = vpack.c.b16 %v587, %v586
        %v628 = vpack.c.b16 %v589, %v588
        %v629 = vpack.c.b16 %v591, %v590
        %v630 = vpack.c.b16 %v593, %v592
        %v631 = vpack.c.b16 %v595, %v594
        %v632 = vpack.c.b16 %v597, %v596
        %v633 = vpack.c.b16 %v599, %v598
        %v634 = vpack.c.b16 %v601, %v600
        %v635 = vpack.c.b16 %v603, %v602
        %v652 = vunpack.c.l.b16 %v390
        %v653 = vunpack.c.l.b16 %v395
        %v654 = vunpack.c.l.b16 %v400
        %v655 = vunpack.c.l.b16 %v405
        %v656 = vunpack.c.l.b16 %v410
        %v657 = vunpack.c.l.b16 %v415
        %v658 = vunpack.c.l.b16 %v420
        %v659 = vunpack.c.l.b16 %v425
        %v660 = vunpack.c.l.b16 %v430
        %v661 = vunpack.c.l.b16 %v435
        %v662 = vunpack.c.l.b16 %v440
        %v663 = vunpack.c.l.b16 %v445
        %v664 = vunpack.c.l.b16 %v450
        %v665 = vunpack.c.l.b16 %v455
        %v666 = vunpack.c.l.b16 %v460
        %v667 = vunpack.c.l.b16 %v465
        %v668 = vpack.c.b16 %v652, %v652
        %v669 = vpack.c.b16 %v653, %v653
        %v670 = vpack.c.b16 %v654, %v654
        %v671 = vpack.c.b16 %v655, %v655
        %v672 = vpack.c.b16 %v656, %v656
        %v673 = vpack.c.b16 %v657, %v657
        %v674 = vpack.c.b16 %v658, %v658
        %v675 = vpack.c.b16 %v659, %v659
        %v676 = vpack.c.b16 %v660, %v660
        %v677 = vpack.c.b16 %v661, %v661
        %v678 = vpack.c.b16 %v662, %v662
        %v679 = vpack.c.b16 %v663, %v663
        %v680 = vpack.c.b16 %v664, %v664
        %v681 = vpack.c.b16 %v665, %v665
        %v682 = vpack.c.b16 %v666, %v666
        %v683 = vpack.c.b16 %v667, %v667
        %vm684 = vsmask.f32 7424
        %v686 = vshrl.u32 %v604, 16
        %v688 = vshll.u32 %v604, 16
        %v690 = vrot.slane %v688, 1
        %v691 = vor.u32 %v686, %v690
        %v693 = vshll.u32 %v605, 16
        %v695 = vrot.slane %v693, 1
        %v696 = vsel %vm684, %v691, %v695
        %v697 = vshrl.u32 %v605, 16
        %v699 = vor.u32 %v697, %v695
        %v701 = vshll.u32 %v668, 16
        %v703 = vrot.slane %v701, 1
        %v704 = vsel %vm684, %v699, %v703
        %v706 = vshrl.u32 %v606, 16
        %v708 = vshll.u32 %v606, 16
        %v710 = vrot.slane %v708, 1
        %v711 = vor.u32 %v706, %v710
        %v713 = vshll.u32 %v607, 16
        %v715 = vrot.slane %v713, 1
        %v716 = vsel %vm684, %v711, %v715
        %v717 = vshrl.u32 %v607, 16
        %v719 = vor.u32 %v717, %v715
        %v721 = vshll.u32 %v669, 16
        %v723 = vrot.slane %v721, 1
        %v724 = vsel %vm684, %v719, %v723
        %v726 = vshrl.u32 %v608, 16
        %v728 = vshll.u32 %v608, 16
        %v730 = vrot.slane %v728, 1
        %v731 = vor.u32 %v726, %v730
        %v733 = vshll.u32 %v609, 16
        %v735 = vrot.slane %v733, 1
        %v736 = vsel %vm684, %v731, %v735
        %v737 = vshrl.u32 %v609, 16
        %v739 = vor.u32 %v737, %v735
        %v741 = vshll.u32 %v670, 16
        %v743 = vrot.slane %v741, 1
        %v744 = vsel %vm684, %v739, %v743
        %v746 = vshrl.u32 %v610, 16
        %v748 = vshll.u32 %v610, 16
        %v750 = vrot.slane %v748, 1
        %v751 = vor.u32 %v746, %v750
        %v753 = vshll.u32 %v611, 16
        %v755 = vrot.slane %v753, 1
        %v756 = vsel %vm684, %v751, %v755
        %v757 = vshrl.u32 %v611, 16
        %v759 = vor.u32 %v757, %v755
        %v761 = vshll.u32 %v671, 16
        %v763 = vrot.slane %v761, 1
        %v764 = vsel %vm684, %v759, %v763
        %v766 = vshrl.u32 %v612, 16
        %v768 = vshll.u32 %v612, 16
        %v770 = vrot.slane %v768, 1
        %v771 = vor.u32 %v766, %v770
        %v773 = vshll.u32 %v613, 16
        %v775 = vrot.slane %v773, 1
        %v776 = vsel %vm684, %v771, %v775
        %v777 = vshrl.u32 %v613, 16
        %v779 = vor.u32 %v777, %v775
        %v781 = vshll.u32 %v672, 16
        %v783 = vrot.slane %v781, 1
        %v784 = vsel %vm684, %v779, %v783
        %v786 = vshrl.u32 %v614, 16
        %v788 = vshll.u32 %v614, 16
        %v790 = vrot.slane %v788, 1
        %v791 = vor.u32 %v786, %v790
        %v793 = vshll.u32 %v615, 16
        %v795 = vrot.slane %v793, 1
        %v796 = vsel %vm684, %v791, %v795
        %v797 = vshrl.u32 %v615, 16
        %v799 = vor.u32 %v797, %v795
        %v801 = vshll.u32 %v673, 16
        %v803 = vrot.slane %v801, 1
        %v804 = vsel %vm684, %v799, %v803
        %v806 = vshrl.u32 %v616, 16
        %v808 = vshll.u32 %v616, 16
        %v810 = vrot.slane %v808, 1
        %v811 = vor.u32 %v806, %v810
        %v813 = vshll.u32 %v617, 16
        %v815 = vrot.slane %v813, 1
        %v816 = vsel %vm684, %v811, %v815
        %v817 = vshrl.u32 %v617, 16
        %v819 = vor.u32 %v817, %v815
        %v821 = vshll.u32 %v674, 16
        %v823 = vrot.slane %v821, 1
        %v824 = vsel %vm684, %v819, %v823
        %v826 = vshrl.u32 %v618, 16
        %v828 = vshll.u32 %v618, 16
        %v830 = vrot.slane %v828, 1
        %v831 = vor.u32 %v826, %v830
        %v833 = vshll.u32 %v619, 16
        %v835 = vrot.slane %v833, 1
        %v836 = vsel %vm684, %v831, %v835
        %v837 = vshrl.u32 %v619, 16
        %v839 = vor.u32 %v837, %v835
        %v841 = vshll.u32 %v675, 16
        %v843 = vrot.slane %v841, 1
        %v844 = vsel %vm684, %v839, %v843
        %v846 = vshrl.u32 %v620, 16
        %v848 = vshll.u32 %v620, 16
        %v850 = vrot.slane %v848, 1
        %v851 = vor.u32 %v846, %v850
        %v853 = vshll.u32 %v621, 16
        %v855 = vrot.slane %v853, 1
        %v856 = vsel %vm684, %v851, %v855
        %v857 = vshrl.u32 %v621, 16
        %v859 = vor.u32 %v857, %v855
        %v861 = vshll.u32 %v676, 16
        %v863 = vrot.slane %v861, 1
        %v864 = vsel %vm684, %v859, %v863
        %v866 = vshrl.u32 %v622, 16
        %v868 = vshll.u32 %v622, 16
        %v870 = vrot.slane %v868, 1
        %v871 = vor.u32 %v866, %v870
        %v873 = vshll.u32 %v623, 16
        %v875 = vrot.slane %v873, 1
        %v876 = vsel %vm684, %v871, %v875
        %v877 = vshrl.u32 %v623, 16
        %v879 = vor.u32 %v877, %v875
        %v881 = vshll.u32 %v677, 16
        %v883 = vrot.slane %v881, 1
        %v884 = vsel %vm684, %v879, %v883
        %v886 = vshrl.u32 %v624, 16
        %v888 = vshll.u32 %v624, 16
        %v890 = vrot.slane %v888, 1
        %v891 = vor.u32 %v886, %v890
        %v893 = vshll.u32 %v625, 16
        %v895 = vrot.slane %v893, 1
        %v896 = vsel %vm684, %v891, %v895
        %v897 = vshrl.u32 %v625, 16
        %v899 = vor.u32 %v897, %v895
        %v901 = vshll.u32 %v678, 16
        %v903 = vrot.slane %v901, 1
        %v904 = vsel %vm684, %v899, %v903
        %v906 = vshrl.u32 %v626, 16
        %v908 = vshll.u32 %v626, 16
        %v910 = vrot.slane %v908, 1
        %v911 = vor.u32 %v906, %v910
        %v913 = vshll.u32 %v627, 16
        %v915 = vrot.slane %v913, 1
        %v916 = vsel %vm684, %v911, %v915
        %v917 = vshrl.u32 %v627, 16
        %v919 = vor.u32 %v917, %v915
        %v921 = vshll.u32 %v679, 16
        %v923 = vrot.slane %v921, 1
        %v924 = vsel %vm684, %v919, %v923
        %v926 = vshrl.u32 %v628, 16
        %v928 = vshll.u32 %v628, 16
        %v930 = vrot.slane %v928, 1
        %v931 = vor.u32 %v926, %v930
        %v933 = vshll.u32 %v629, 16
        %v935 = vrot.slane %v933, 1
        %v936 = vsel %vm684, %v931, %v935
        %v937 = vshrl.u32 %v629, 16
        %v939 = vor.u32 %v937, %v935
        %v941 = vshll.u32 %v680, 16
        %v943 = vrot.slane %v941, 1
        %v944 = vsel %vm684, %v939, %v943
        %v946 = vshrl.u32 %v630, 16
        %v948 = vshll.u32 %v630, 16
        %v950 = vrot.slane %v948, 1
        %v951 = vor.u32 %v946, %v950
        %v953 = vshll.u32 %v631, 16
        %v955 = vrot.slane %v953, 1
        %v956 = vsel %vm684, %v951, %v955
        %v957 = vshrl.u32 %v631, 16
        %v959 = vor.u32 %v957, %v955
        %v961 = vshll.u32 %v681, 16
        %v963 = vrot.slane %v961, 1
        %v964 = vsel %vm684, %v959, %v963
        %v966 = vshrl.u32 %v632, 16
        %v968 = vshll.u32 %v632, 16
        %v970 = vrot.slane %v968, 1
        %v971 = vor.u32 %v966, %v970
        %v973 = vshll.u32 %v633, 16
        %v975 = vrot.slane %v973, 1
        %v976 = vsel %vm684, %v971, %v975
        %v977 = vshrl.u32 %v633, 16
        %v979 = vor.u32 %v977, %v975
        %v981 = vshll.u32 %v682, 16
        %v983 = vrot.slane %v981, 1
        %v984 = vsel %vm684, %v979, %v983
        %v986 = vshrl.u32 %v634, 16
        %v988 = vshll.u32 %v634, 16
        %v990 = vrot.slane %v988, 1
        %v991 = vor.u32 %v986, %v990
        %v993 = vshll.u32 %v635, 16
        %v995 = vrot.slane %v993, 1
        %v996 = vsel %vm684, %v991, %v995
        %v997 = vshrl.u32 %v635, 16
        %v999 = vor.u32 %v997, %v995
        %v1001 = vshll.u32 %v683, 16
        %v1003 = vrot.slane %v1001, 1
        %v1004 = vsel %vm684, %v999, %v1003
        %1005 = vrot.lane.b32.xlu0 %v696, 64
        %v1006 = vpop.permute.xlu0 %1005
        %1007 = vrot.lane.b32.xlu0 %v704, 64
        %v1008 = vpop.permute.xlu0 %1007
        %1009 = vrot.lane.b32.xlu0 %v716, 64
        %v1010 = vpop.permute.xlu0 %1009
        %1011 = vrot.lane.b32.xlu0 %v724, 64
        %v1012 = vpop.permute.xlu0 %1011
        %1013 = vrot.lane.b32.xlu0 %v736, 64
        %v1014 = vpop.permute.xlu0 %1013
        %1015 = vrot.lane.b32.xlu0 %v744, 64
        %v1016 = vpop.permute.xlu0 %1015
        %1017 = vrot.lane.b32.xlu0 %v756, 64
        %v1018 = vpop.permute.xlu0 %1017
        %1019 = vrot.lane.b32.xlu0 %v764, 64
        %v1020 = vpop.permute.xlu0 %1019
        %1021 = vrot.lane.b32.xlu0 %v776, 64
        %v1022 = vpop.permute.xlu0 %1021
        %1023 = vrot.lane.b32.xlu0 %v784, 64
        %v1024 = vpop.permute.xlu0 %1023
        %1025 = vrot.lane.b32.xlu0 %v796, 64
        %v1026 = vpop.permute.xlu0 %1025
        %1027 = vrot.lane.b32.xlu0 %v804, 64
        %v1028 = vpop.permute.xlu0 %1027
        %1029 = vrot.lane.b32.xlu0 %v816, 64
        %v1030 = vpop.permute.xlu0 %1029
        %1031 = vrot.lane.b32.xlu0 %v824, 64
        %v1032 = vpop.permute.xlu0 %1031
        %1033 = vrot.lane.b32.xlu0 %v836, 64
        %v1034 = vpop.permute.xlu0 %1033
        %1035 = vrot.lane.b32.xlu0 %v844, 64
        %v1036 = vpop.permute.xlu0 %1035
        %1037 = vrot.lane.b32.xlu0 %v856, 64
        %v1038 = vpop.permute.xlu0 %1037
        %1039 = vrot.lane.b32.xlu0 %v864, 64
        %v1040 = vpop.permute.xlu0 %1039
        %1041 = vrot.lane.b32.xlu0 %v876, 64
        %v1042 = vpop.permute.xlu0 %1041
        %1043 = vrot.lane.b32.xlu0 %v884, 64
        %v1044 = vpop.permute.xlu0 %1043
        %1045 = vrot.lane.b32.xlu0 %v896, 64
        %v1046 = vpop.permute.xlu0 %1045
        %1047 = vrot.lane.b32.xlu0 %v904, 64
        %v1048 = vpop.permute.xlu0 %1047
        %1049 = vrot.lane.b32.xlu0 %v916, 64
        %v1050 = vpop.permute.xlu0 %1049
        %1051 = vrot.lane.b32.xlu0 %v924, 64
        %v1052 = vpop.permute.xlu0 %1051
        %1053 = vrot.lane.b32.xlu0 %v936, 64
        %v1054 = vpop.permute.xlu0 %1053
        %1055 = vrot.lane.b32.xlu0 %v944, 64
        %v1056 = vpop.permute.xlu0 %1055
        %1057 = vrot.lane.b32.xlu0 %v956, 64
        %v1058 = vpop.permute.xlu0 %1057
        %1059 = vrot.lane.b32.xlu0 %v964, 64
        %v1060 = vpop.permute.xlu0 %1059
        %1061 = vrot.lane.b32.xlu0 %v976, 64
        %v1062 = vpop.permute.xlu0 %1061
        %1063 = vrot.lane.b32.xlu0 %v984, 64
        %v1064 = vpop.permute.xlu0 %1063
        %1065 = vrot.lane.b32.xlu0 %v996, 64
        %v1066 = vpop.permute.xlu0 %1065
        %1067 = vrot.lane.b32.xlu0 %v1004, 64
        %v1068 = vpop.permute.xlu0 %1067
        %vm1069 = vcmask 1046528
        %v1070 = vrot.slane %v604, 1
        %v1071 = vrot.slane %v605, 1
        %v1072 = vsel %vm1069, %v1070, %v1071
        %v1073 = vrot.slane %v668, 1
        %v1074 = vsel %vm1069, %v1071, %v1073
        %v1075 = vrot.slane %v606, 1
        %v1076 = vrot.slane %v607, 1
        %v1077 = vsel %vm1069, %v1075, %v1076
        %v1078 = vrot.slane %v669, 1
        %v1079 = vsel %vm1069, %v1076, %v1078
        %v1080 = vrot.slane %v608, 1
        %v1081 = vrot.slane %v609, 1
        %v1082 = vsel %vm1069, %v1080, %v1081
        %v1083 = vrot.slane %v670, 1
        %v1084 = vsel %vm1069, %v1081, %v1083
        %v1085 = vrot.slane %v610, 1
        %v1086 = vrot.slane %v611, 1
        %v1087 = vsel %vm1069, %v1085, %v1086
        %v1088 = vrot.slane %v671, 1
        %v1089 = vsel %vm1069, %v1086, %v1088
        %v1090 = vrot.slane %v612, 1
        %v1091 = vrot.slane %v613, 1
        %v1092 = vsel %vm1069, %v1090, %v1091
        %v1093 = vrot.slane %v672, 1
        %v1094 = vsel %vm1069, %v1091, %v1093
        %v1095 = vrot.slane %v614, 1
        %v1096 = vrot.slane %v615, 1
        %v1097 = vsel %vm1069, %v1095, %v1096
        %v1098 = vrot.slane %v673, 1
        %v1099 = vsel %vm1069, %v1096, %v1098
        %v1100 = vrot.slane %v616, 1
        %v1101 = vrot.slane %v617, 1
        %v1102 = vsel %vm1069, %v1100, %v1101
        %v1103 = vrot.slane %v674, 1
        %v1104 = vsel %vm1069, %v1101, %v1103
        %v1105 = vrot.slane %v618, 1
        %v1106 = vrot.slane %v619, 1
        %v1107 = vsel %vm1069, %v1105, %v1106
        %v1108 = vrot.slane %v675, 1
        %v1109 = vsel %vm1069, %v1106, %v1108
        %v1110 = vrot.slane %v620, 1
        %v1111 = vrot.slane %v621, 1
        %v1112 = vsel %vm1069, %v1110, %v1111
        %v1113 = vrot.slane %v676, 1
        %v1114 = vsel %vm1069, %v1111, %v1113
        %v1115 = vrot.slane %v622, 1
        %v1116 = vrot.slane %v623, 1
        %v1117 = vsel %vm1069, %v1115, %v1116
        %v1118 = vrot.slane %v677, 1
        %v1119 = vsel %vm1069, %v1116, %v1118
        %v1120 = vrot.slane %v624, 1
        %v1121 = vrot.slane %v625, 1
        %v1122 = vsel %vm1069, %v1120, %v1121
        %v1123 = vrot.slane %v678, 1
        %v1124 = vsel %vm1069, %v1121, %v1123
        %v1125 = vrot.slane %v626, 1
        %v1126 = vrot.slane %v627, 1
        %v1127 = vsel %vm1069, %v1125, %v1126
        %v1128 = vrot.slane %v679, 1
        %v1129 = vsel %vm1069, %v1126, %v1128
        %v1130 = vrot.slane %v628, 1
        %v1131 = vrot.slane %v629, 1
        %v1132 = vsel %vm1069, %v1130, %v1131
        %v1133 = vrot.slane %v680, 1
        %v1134 = vsel %vm1069, %v1131, %v1133
        %v1135 = vrot.slane %v630, 1
        %v1136 = vrot.slane %v631, 1
        %v1137 = vsel %vm1069, %v1135, %v1136
        %v1138 = vrot.slane %v681, 1
        %v1139 = vsel %vm1069, %v1136, %v1138
        %v1140 = vrot.slane %v632, 1
        %v1141 = vrot.slane %v633, 1
        %v1142 = vsel %vm1069, %v1140, %v1141
        %v1143 = vrot.slane %v682, 1
        %v1144 = vsel %vm1069, %v1141, %v1143
        %v1145 = vrot.slane %v634, 1
        %v1146 = vrot.slane %v635, 1
        %v1147 = vsel %vm1069, %v1145, %v1146
        %v1148 = vrot.slane %v683, 1
        %v1149 = vsel %vm1069, %v1146, %v1148
        %vm1150 = vcmask 523264
        %v1152 = vsel %vm1150, %v604, %v1006
        %v1155 = vsel %vm1150, %v605, %v1008
        %v1158 = vsel %vm1150, %v606, %v1010
        %v1161 = vsel %vm1150, %v607, %v1012
        %v1164 = vsel %vm1150, %v608, %v1014
        %v1167 = vsel %vm1150, %v609, %v1016
        %v1170 = vsel %vm1150, %v610, %v1018
        %v1173 = vsel %vm1150, %v611, %v1020
        %v1176 = vsel %vm1150, %v612, %v1022
        %v1179 = vsel %vm1150, %v613, %v1024
        %v1182 = vsel %vm1150, %v614, %v1026
        %v1185 = vsel %vm1150, %v615, %v1028
        %v1188 = vsel %vm1150, %v616, %v1030
        %v1191 = vsel %vm1150, %v617, %v1032
        %v1194 = vsel %vm1150, %v618, %v1034
        %v1197 = vsel %vm1150, %v619, %v1036
        %v1200 = vsel %vm1150, %v620, %v1038
        %v1203 = vsel %vm1150, %v621, %v1040
        %v1206 = vsel %vm1150, %v622, %v1042
        %v1209 = vsel %vm1150, %v623, %v1044
        %v1212 = vsel %vm1150, %v624, %v1046
        %v1215 = vsel %vm1150, %v625, %v1048
        %v1218 = vsel %vm1150, %v626, %v1050
        %v1221 = vsel %vm1150, %v627, %v1052
        %v1224 = vsel %vm1150, %v628, %v1054
        %v1227 = vsel %vm1150, %v629, %v1056
        %v1230 = vsel %vm1150, %v630, %v1058
        %v1233 = vsel %vm1150, %v631, %v1060
        %v1236 = vsel %vm1150, %v632, %v1062
        %v1239 = vsel %vm1150, %v633, %v1064
        %v1242 = vsel %vm1150, %v634, %v1066
        %v1245 = vsel %vm1150, %v635, %v1068
        %v1247 = vld [vmem:[%s3] sm:$0xf]
        %v1248 = vld [vmem:[%s3 + $0x4] sm:$0xf]
        %v1249 = vld [vmem:[%s3 + $0x8] sm:$0xf]
        %v1250 = vld [vmem:[%s3 + $0xc] sm:$0xf]
        %v1251 = vld [vmem:[%s3 + $0x10] sm:$0xf]
        %v1252 = vld [vmem:[%s3 + $0x14] sm:$0xf]
        %v1253 = vld [vmem:[%s3 + $0x18] sm:$0xf]
        %v1254 = vld [vmem:[%s3 + $0x1c] sm:$0xf]
        %v1255 = vld [vmem:[%s3 + $0x20] sm:$0xf]
        %v1256 = vld [vmem:[%s3 + $0x24] sm:$0xf]
        %v1257 = vld [vmem:[%s3 + $0x28] sm:$0xf]
        %v1258 = vld [vmem:[%s3 + $0x2c] sm:$0xf]
        %v1259 = vld [vmem:[%s3 + $0x30] sm:$0xf]
        %v1260 = vld [vmem:[%s3 + $0x34] sm:$0xf]
        %v1261 = vld [vmem:[%s3 + $0x38] sm:$0xf]
        %v1262 = vld [vmem:[%s3 + $0x3c] sm:$0xf]
        %v1263 = vld [vmem:[%s3 + $0x40] sm:$0xf]
        %v1264 = vld [vmem:[%s3 + $0x44] sm:$0xf]
        %v1265 = vld [vmem:[%s3 + $0x48] sm:$0xf]
        %v1266 = vld [vmem:[%s3 + $0x4c] sm:$0xf]
        %v1267 = vld [vmem:[%s3 + $0x50] sm:$0xf]
        %v1268 = vld [vmem:[%s3 + $0x54] sm:$0xf]
        %v1269 = vld [vmem:[%s3 + $0x58] sm:$0xf]
        %v1270 = vld [vmem:[%s3 + $0x5c] sm:$0xf]
        %v1275 = vunpack.c.l.b16 %v466
        %v1276 = vunpack.c.l.b16 %v467
        %v1277 = vunpack.c.l.b16 %v468
        %v1278 = vunpack.c.l.b16 %v469
        %v1279 = vpack.c.b16 %v1276, %v1275
        %v1280 = vpack.c.b16 %v1278, %v1277
        %v1282 = vunpack.c.l.b16 %v470
        %v1283 = vpack.c.b16 %v1282, %v1282
        %v1285 = vshrl.u32 %v1279, 16
        %v1287 = vshll.u32 %v1279, 16
        %v1289 = vrot.slane %v1287, 1
        %v1290 = vor.u32 %v1285, %v1289
        %v1292 = vshll.u32 %v1280, 16
        %v1294 = vrot.slane %v1292, 1
        %v1295 = vsel %vm684, %v1290, %v1294
        %v1296 = vshrl.u32 %v1280, 16
        %v1298 = vor.u32 %v1296, %v1294
        %v1300 = vshll.u32 %v1283, 16
        %v1302 = vrot.slane %v1300, 1
        %v1303 = vsel %vm684, %v1298, %v1302
        %1304 = vrot.lane.b32.xlu0 %v1295, 64
        %v1305 = vpop.permute.xlu0 %1304
        %1306 = vrot.lane.b32.xlu0 %v1303, 64
        %v1307 = vpop.permute.xlu0 %1306
        %v1308 = vrot.slane %v1279, 1
        %v1309 = vrot.slane %v1280, 1
        %v1310 = vsel %vm1069, %v1308, %v1309
        %v1311 = vrot.slane %v1283, 1
        %v1312 = vsel %vm1069, %v1309, %v1311
        %v1314 = vsel %vm1150, %v1279, %v1305
        %v1317 = vsel %vm1150, %v1280, %v1307
        %s1319 = scalar_lea.vmem %s3, 96
        %v1320 = vld [vmem:[%s1319] sm:$0xf]
        %v1321 = vld [vmem:[%s1319 + $0x4] sm:$0xf]
        %v1322 = vld [vmem:[%s1319 + $0x8] sm:$0xf]
        %v1323 = vld [vmem:[%s1319 + $0xc] sm:$0xf]
        %v1324 = vld [vmem:[%s1319 + $0x10] sm:$0xf]
        %v1325 = vld [vmem:[%s1319 + $0x14] sm:$0xf]
        %v1326 = vld [vmem:[%s1319 + $0x18] sm:$0xf]
        %v1327 = vld [vmem:[%s1319 + $0x1c] sm:$0xf]
        %v1328 = vld [vmem:[%s1319 + $0x20] sm:$0xf]
        %v1329 = vld [vmem:[%s1319 + $0x24] sm:$0xf]
        %v1330 = vld [vmem:[%s1319 + $0x28] sm:$0xf]
        %v1331 = vld [vmem:[%s1319 + $0x2c] sm:$0xf]
        %v1332 = vld [vmem:[%s1319 + $0x30] sm:$0xf]
        %v1333 = vld [vmem:[%s1319 + $0x34] sm:$0xf]
        %v1334 = vld [vmem:[%s1319 + $0x38] sm:$0xf]
        %v1335 = vld [vmem:[%s1319 + $0x3c] sm:$0xf]
        %v1336 = vld [vmem:[%s1319 + $0x40] sm:$0xf]
        %v1337 = vld [vmem:[%s1319 + $0x44] sm:$0xf]
        %v1338 = vld [vmem:[%s1319 + $0x48] sm:$0xf]
        %v1339 = vld [vmem:[%s1319 + $0x4c] sm:$0xf]
        %v1340 = vld [vmem:[%s1319 + $0x50] sm:$0xf]
        %v1341 = vld [vmem:[%s1319 + $0x54] sm:$0xf]
        %v1342 = vld [vmem:[%s1319 + $0x58] sm:$0xf]
        %v1343 = vld [vmem:[%s1319 + $0x5c] sm:$0xf]
        %v1368 = vunpack.c.l.b16 %v1320
        %v1369 = vunpack.c.l.b16 %v1321
        %v1370 = vunpack.c.l.b16 %v1322
        %v1371 = vunpack.c.l.b16 %v1323
        %v1372 = vunpack.c.l.b16 %v1324
        %v1373 = vunpack.c.l.b16 %v1325
        %v1374 = vunpack.c.l.b16 %v1326
        %v1375 = vunpack.c.l.b16 %v1327
        %v1376 = vunpack.c.l.b16 %v1328
        %v1377 = vunpack.c.l.b16 %v1329
        %v1378 = vunpack.c.l.b16 %v1330
        %v1379 = vunpack.c.l.b16 %v1331
        %v1380 = vunpack.c.l.b16 %v1332
        %v1381 = vunpack.c.l.b16 %v1333
        %v1382 = vunpack.c.l.b16 %v1334
        %v1383 = vunpack.c.l.b16 %v1335
        %v1384 = vunpack.c.l.b16 %v1336
        %v1385 = vunpack.c.l.b16 %v1337
        %v1386 = vunpack.c.l.b16 %v1338
        %v1387 = vunpack.c.l.b16 %v1339
        %v1388 = vunpack.c.l.b16 %v1340
        %v1389 = vunpack.c.l.b16 %v1341
        %v1390 = vunpack.c.l.b16 %v1342
        %v1391 = vunpack.c.l.b16 %v1343
        %v1392 = vpack.c.b16 %v1369, %v1368
        %v1393 = vpack.c.b16 %v1371, %v1370
        %v1394 = vpack.c.b16 %v1373, %v1372
        %v1395 = vpack.c.b16 %v1375, %v1374
        %v1396 = vpack.c.b16 %v1377, %v1376
        %v1397 = vpack.c.b16 %v1379, %v1378
        %v1398 = vpack.c.b16 %v1381, %v1380
        %v1399 = vpack.c.b16 %v1383, %v1382
        %v1400 = vpack.c.b16 %v1385, %v1384
        %v1401 = vpack.c.b16 %v1387, %v1386
        %v1402 = vpack.c.b16 %v1389, %v1388
        %v1403 = vpack.c.b16 %v1391, %v1390
        %v1417 = vsel %vm1150, %v1077, 0
        %v1420 = vsel %vm1150, %v1079, 0
        %v1423 = vsel %vm1150, %v1082, 0
        %v1426 = vsel %vm1150, %v1084, 0
        %v1429 = vsel %vm1150, %v1087, 0
        %v1432 = vsel %vm1150, %v1089, 0
        %v1435 = vsel %vm1150, %v1092, 0
        %v1438 = vsel %vm1150, %v1094, 0
        %v1441 = vsel %vm1150, %v1097, 0
        %v1444 = vsel %vm1150, %v1099, 0
        %v1447 = vsel %vm1150, %v1102, 0
        %v1450 = vsel %vm1150, %v1104, 0
        %v1453 = vsel %vm1150, %v1107, 0
        %v1456 = vsel %vm1150, %v1109, 0
        %v1459 = vsel %vm1150, %v1112, 0
        %v1462 = vsel %vm1150, %v1114, 0
        %v1465 = vsel %vm1150, %v1117, 0
        %v1468 = vsel %vm1150, %v1119, 0
        %v1471 = vsel %vm1150, %v1122, 0
        %v1474 = vsel %vm1150, %v1124, 0
        %v1477 = vsel %vm1150, %v1127, 0
        %v1480 = vsel %vm1150, %v1129, 0
        %v1483 = vsel %vm1150, %v1132, 0
        %v1486 = vsel %vm1150, %v1134, 0
        %v1489 = vsel %vm1150, %v1137, 0
        %v1492 = vsel %vm1150, %v1139, 0
        %v1495 = vsel %vm1150, %v1142, 0
        %v1498 = vsel %vm1150, %v1144, 0
        %v1501 = vsel %vm1150, %v1147, 0
        %v1504 = vsel %vm1150, %v1149, 0
        %v1507 = vsel %vm1150, %v1310, 0
        %v1510 = vsel %vm1150, %v1312, 0
        %1512 = vmatpush.bf16.msra.mxu0 %v1399
        %1513 = vmatpush.bf16.msra.mxu0 %v1398
        %1514 = vmatpush.bf16.msra.mxu0 %v1397
        %1515 = vmatpush.bf16.msra.mxu0 %v1396
        %1516 = vmatpush.bf16.msra.mxu0 %v1395
        %1517 = vmatpush.bf16.msra.mxu0 %v1394
        %1518 = vmatpush.bf16.msra.mxu0 %v1393
        %1519 = vmatpush.bf16.msra.mxu0 %v1392
        %1520 = vmatmul.bf16.gmra.mxu0 %v1158
        %v1521 = vpop.f32.mrf.mxu0
        %v1522 = vadd.f32 0.0, %v1521
        %v1523 = vpop.f32.mrf.mxu0
        %v1524 = vadd.f32 0.0, %v1523
        %1525 = vmatmul.bf16.gmra.mxu0 %v1161
        %v1526 = vpop.f32.mrf.mxu0
        %v1527 = vadd.f32 0.0, %v1526
        %v1528 = vpop.f32.mrf.mxu0
        %v1529 = vadd.f32 0.0, %v1528
        %1530 = vmatmul.bf16.gmra.mxu0 %v1164
        %v1531 = vpop.f32.mrf.mxu0
        %v1532 = vadd.f32 0.0, %v1531
        %v1533 = vpop.f32.mrf.mxu0
        %v1534 = vadd.f32 0.0, %v1533
        %1535 = vmatmul.bf16.gmra.mxu0 %v1167
        %v1536 = vpop.f32.mrf.mxu0
        %v1537 = vadd.f32 0.0, %v1536
        %v1538 = vpop.f32.mrf.mxu0
        %v1539 = vadd.f32 0.0, %v1538
        %1540 = vmatmul.bf16.gmra.mxu0 %v1170
        %v1541 = vpop.f32.mrf.mxu0
        %v1542 = vadd.f32 0.0, %v1541
        %v1543 = vpop.f32.mrf.mxu0
        %v1544 = vadd.f32 0.0, %v1543
        %1545 = vmatmul.bf16.gmra.mxu0 %v1173
        %v1546 = vpop.f32.mrf.mxu0
        %v1547 = vadd.f32 0.0, %v1546
        %v1548 = vpop.f32.mrf.mxu0
        %v1549 = vadd.f32 0.0, %v1548
        %1550 = vmatmul.bf16.gmra.mxu0 %v1176
        %v1551 = vpop.f32.mrf.mxu0
        %v1552 = vadd.f32 0.0, %v1551
        %v1553 = vpop.f32.mrf.mxu0
        %v1554 = vadd.f32 0.0, %v1553
        %1555 = vmatmul.bf16.gmra.mxu0 %v1179
        %v1556 = vpop.f32.mrf.mxu0
        %v1557 = vadd.f32 0.0, %v1556
        %v1558 = vpop.f32.mrf.mxu0
        %v1559 = vadd.f32 0.0, %v1558
        %1560 = vmatmul.bf16.gmra.mxu0 %v1182
        %v1561 = vpop.f32.mrf.mxu0
        %v1562 = vadd.f32 0.0, %v1561
        %v1563 = vpop.f32.mrf.mxu0
        %v1564 = vadd.f32 0.0, %v1563
        %1565 = vmatmul.bf16.gmra.mxu0 %v1185
        %v1566 = vpop.f32.mrf.mxu0
        %v1567 = vadd.f32 0.0, %v1566
        %v1568 = vpop.f32.mrf.mxu0
        %v1569 = vadd.f32 0.0, %v1568
        %1570 = vmatmul.bf16.gmra.mxu0 %v1188
        %v1571 = vpop.f32.mrf.mxu0
        %v1572 = vadd.f32 0.0, %v1571
        %v1573 = vpop.f32.mrf.mxu0
        %v1574 = vadd.f32 0.0, %v1573
        %1575 = vmatmul.bf16.gmra.mxu0 %v1191
        %v1576 = vpop.f32.mrf.mxu0
        %v1577 = vadd.f32 0.0, %v1576
        %v1578 = vpop.f32.mrf.mxu0
        %v1579 = vadd.f32 0.0, %v1578
        %1580 = vmatmul.bf16.gmra.mxu0 %v1194
        %v1581 = vpop.f32.mrf.mxu0
        %v1582 = vadd.f32 0.0, %v1581
        %v1583 = vpop.f32.mrf.mxu0
        %v1584 = vadd.f32 0.0, %v1583
        %1585 = vmatmul.bf16.gmra.mxu0 %v1197
        %v1586 = vpop.f32.mrf.mxu0
        %v1587 = vadd.f32 0.0, %v1586
        %v1588 = vpop.f32.mrf.mxu0
        %v1589 = vadd.f32 0.0, %v1588
        %1590 = vmatmul.bf16.gmra.mxu0 %v1200
        %v1591 = vpop.f32.mrf.mxu0
        %v1592 = vadd.f32 0.0, %v1591
        %v1593 = vpop.f32.mrf.mxu0
        %v1594 = vadd.f32 0.0, %v1593
        %1595 = vmatmul.bf16.gmra.mxu0 %v1203
        %v1596 = vpop.f32.mrf.mxu0
        %v1597 = vadd.f32 0.0, %v1596
        %v1598 = vpop.f32.mrf.mxu0
        %v1599 = vadd.f32 0.0, %v1598
        %1600 = vmatmul.bf16.gmra.mxu0 %v1206
        %v1601 = vpop.f32.mrf.mxu0
        %v1602 = vadd.f32 0.0, %v1601
        %v1603 = vpop.f32.mrf.mxu0
        %v1604 = vadd.f32 0.0, %v1603
        %1605 = vmatmul.bf16.gmra.mxu0 %v1209
        %v1606 = vpop.f32.mrf.mxu0
        %v1607 = vadd.f32 0.0, %v1606
        %v1608 = vpop.f32.mrf.mxu0
        %v1609 = vadd.f32 0.0, %v1608
        %1610 = vmatmul.bf16.gmra.mxu0 %v1212
        %v1611 = vpop.f32.mrf.mxu0
        %v1612 = vadd.f32 0.0, %v1611
        %v1613 = vpop.f32.mrf.mxu0
        %v1614 = vadd.f32 0.0, %v1613
        %1615 = vmatmul.bf16.gmra.mxu0 %v1215
        %v1616 = vpop.f32.mrf.mxu0
        %v1617 = vadd.f32 0.0, %v1616
        %v1618 = vpop.f32.mrf.mxu0
        %v1619 = vadd.f32 0.0, %v1618
        %1620 = vmatmul.bf16.gmra.mxu0 %v1218
        %v1621 = vpop.f32.mrf.mxu0
        %v1622 = vadd.f32 0.0, %v1621
        %v1623 = vpop.f32.mrf.mxu0
        %v1624 = vadd.f32 0.0, %v1623
        %1625 = vmatmul.bf16.gmra.mxu0 %v1221
        %v1626 = vpop.f32.mrf.mxu0
        %v1627 = vadd.f32 0.0, %v1626
        %v1628 = vpop.f32.mrf.mxu0
        %v1629 = vadd.f32 0.0, %v1628
        %1630 = vmatmul.bf16.gmra.mxu0 %v1224
        %v1631 = vpop.f32.mrf.mxu0
        %v1632 = vadd.f32 0.0, %v1631
        %v1633 = vpop.f32.mrf.mxu0
        %v1634 = vadd.f32 0.0, %v1633
        %1635 = vmatmul.bf16.gmra.mxu0 %v1227
        %v1636 = vpop.f32.mrf.mxu0
        %v1637 = vadd.f32 0.0, %v1636
        %v1638 = vpop.f32.mrf.mxu0
        %v1639 = vadd.f32 0.0, %v1638
        %1640 = vmatmul.bf16.gmra.mxu0 %v1230
        %v1641 = vpop.f32.mrf.mxu0
        %v1642 = vadd.f32 0.0, %v1641
        %v1643 = vpop.f32.mrf.mxu0
        %v1644 = vadd.f32 0.0, %v1643
        %1645 = vmatmul.bf16.gmra.mxu0 %v1233
        %v1646 = vpop.f32.mrf.mxu0
        %v1647 = vadd.f32 0.0, %v1646
        %v1648 = vpop.f32.mrf.mxu0
        %v1649 = vadd.f32 0.0, %v1648
        %1650 = vmatmul.bf16.gmra.mxu0 %v1236
        %v1651 = vpop.f32.mrf.mxu0
        %v1652 = vadd.f32 0.0, %v1651
        %v1653 = vpop.f32.mrf.mxu0
        %v1654 = vadd.f32 0.0, %v1653
        %1655 = vmatmul.bf16.gmra.mxu0 %v1239
        %v1656 = vpop.f32.mrf.mxu0
        %v1657 = vadd.f32 0.0, %v1656
        %v1658 = vpop.f32.mrf.mxu0
        %v1659 = vadd.f32 0.0, %v1658
        %1660 = vmatmul.bf16.gmra.mxu0 %v1242
        %v1661 = vpop.f32.mrf.mxu0
        %v1662 = vadd.f32 0.0, %v1661
        %v1663 = vpop.f32.mrf.mxu0
        %v1664 = vadd.f32 0.0, %v1663
        %1665 = vmatmul.bf16.gmra.mxu0 %v1245
        %v1666 = vpop.f32.mrf.mxu0
        %v1667 = vadd.f32 0.0, %v1666
        %v1668 = vpop.f32.mrf.mxu0
        %v1669 = vadd.f32 0.0, %v1668
        %1670 = vmatmul.bf16.gmra.mxu0 %v1314
        %v1671 = vpop.f32.mrf.mxu0
        %v1672 = vadd.f32 0.0, %v1671
        %v1673 = vpop.f32.mrf.mxu0
        %v1674 = vadd.f32 0.0, %v1673
        %1675 = vmatmul.bf16.gmra.mxu0 %v1317
        %v1676 = vpop.f32.mrf.mxu0
        %v1677 = vadd.f32 0.0, %v1676
        %v1678 = vpop.f32.mrf.mxu0
        %v1679 = vadd.f32 0.0, %v1678
        %1680 = vdwg.mxu0
        %1681 = vmatpush.bf16.msra.mxu0 0
        %1682 = vmatpush.bf16.msra.mxu0 0
        %1683 = vmatpush.bf16.msra.mxu0 0
        %1684 = vmatpush.bf16.msra.mxu0 0
        %1685 = vmatpush.bf16.msra.mxu0 %v1403
        %1686 = vmatpush.bf16.msra.mxu0 %v1402
        %1687 = vmatpush.bf16.msra.mxu0 %v1401
        %1688 = vmatpush.bf16.msra.mxu0 %v1400
        %1689 = vmatmul.bf16.gmra.mxu0 %v1417
        %v1690 = vpop.f32.mrf.mxu0
        %v1691 = vadd.f32 %v1522, %v1690
        %v1692 = vpop.f32.mrf.mxu0
        %v1693 = vadd.f32 %v1524, %v1692
        %1694 = vmatmul.bf16.gmra.mxu0 %v1420
        %v1695 = vpop.f32.mrf.mxu0
        %v1696 = vadd.f32 %v1527, %v1695
        %v1697 = vpop.f32.mrf.mxu0
        %v1698 = vadd.f32 %v1529, %v1697
        %1699 = vmatmul.bf16.gmra.mxu0 %v1423
        %v1700 = vpop.f32.mrf.mxu0
        %v1701 = vadd.f32 %v1532, %v1700
        %v1702 = vpop.f32.mrf.mxu0
        %v1703 = vadd.f32 %v1534, %v1702
        %1704 = vmatmul.bf16.gmra.mxu0 %v1426
        %v1705 = vpop.f32.mrf.mxu0
        %v1706 = vadd.f32 %v1537, %v1705
        %v1707 = vpop.f32.mrf.mxu0
        %v1708 = vadd.f32 %v1539, %v1707
        %1709 = vmatmul.bf16.gmra.mxu0 %v1429
        %v1710 = vpop.f32.mrf.mxu0
        %v1711 = vadd.f32 %v1542, %v1710
        %v1712 = vpop.f32.mrf.mxu0
        %v1713 = vadd.f32 %v1544, %v1712
        %1714 = vmatmul.bf16.gmra.mxu0 %v1432
        %v1715 = vpop.f32.mrf.mxu0
        %v1716 = vadd.f32 %v1547, %v1715
        %v1717 = vpop.f32.mrf.mxu0
        %v1718 = vadd.f32 %v1549, %v1717
        %1719 = vmatmul.bf16.gmra.mxu0 %v1435
        %v1720 = vpop.f32.mrf.mxu0
        %v1721 = vadd.f32 %v1552, %v1720
        %v1722 = vpop.f32.mrf.mxu0
        %v1723 = vadd.f32 %v1554, %v1722
        %1724 = vmatmul.bf16.gmra.mxu0 %v1438
        %v1725 = vpop.f32.mrf.mxu0
        %v1726 = vadd.f32 %v1557, %v1725
        %v1727 = vpop.f32.mrf.mxu0
        %v1728 = vadd.f32 %v1559, %v1727
        %1729 = vmatmul.bf16.gmra.mxu0 %v1441
        %v1730 = vpop.f32.mrf.mxu0
        %v1731 = vadd.f32 %v1562, %v1730
        %v1732 = vpop.f32.mrf.mxu0
        %v1733 = vadd.f32 %v1564, %v1732
        %1734 = vmatmul.bf16.gmra.mxu0 %v1444
        %v1735 = vpop.f32.mrf.mxu0
        %v1736 = vadd.f32 %v1567, %v1735
        %v1737 = vpop.f32.mrf.mxu0
        %v1738 = vadd.f32 %v1569, %v1737
        %1739 = vmatmul.bf16.gmra.mxu0 %v1447
        %v1740 = vpop.f32.mrf.mxu0
        %v1741 = vadd.f32 %v1572, %v1740
        %v1742 = vpop.f32.mrf.mxu0
        %v1743 = vadd.f32 %v1574, %v1742
        %1744 = vmatmul.bf16.gmra.mxu0 %v1450
        %v1745 = vpop.f32.mrf.mxu0
        %v1746 = vadd.f32 %v1577, %v1745
        %v1747 = vpop.f32.mrf.mxu0
        %v1748 = vadd.f32 %v1579, %v1747
        %1749 = vmatmul.bf16.gmra.mxu0 %v1453
        %v1750 = vpop.f32.mrf.mxu0
        %v1751 = vadd.f32 %v1582, %v1750
        %v1752 = vpop.f32.mrf.mxu0
        %v1753 = vadd.f32 %v1584, %v1752
        %1754 = vmatmul.bf16.gmra.mxu0 %v1456
        %v1755 = vpop.f32.mrf.mxu0
        %v1756 = vadd.f32 %v1587, %v1755
        %v1757 = vpop.f32.mrf.mxu0
        %v1758 = vadd.f32 %v1589, %v1757
        %1759 = vmatmul.bf16.gmra.mxu0 %v1459
        %v1760 = vpop.f32.mrf.mxu0
        %v1761 = vadd.f32 %v1592, %v1760
        %v1762 = vpop.f32.mrf.mxu0
        %v1763 = vadd.f32 %v1594, %v1762
        %1764 = vmatmul.bf16.gmra.mxu0 %v1462
        %v1765 = vpop.f32.mrf.mxu0
        %v1766 = vadd.f32 %v1597, %v1765
        %v1767 = vpop.f32.mrf.mxu0
        %v1768 = vadd.f32 %v1599, %v1767
        %1769 = vmatmul.bf16.gmra.mxu0 %v1465
        %v1770 = vpop.f32.mrf.mxu0
        %v1771 = vadd.f32 %v1602, %v1770
        %v1772 = vpop.f32.mrf.mxu0
        %v1773 = vadd.f32 %v1604, %v1772
        %1774 = vmatmul.bf16.gmra.mxu0 %v1468
        %v1775 = vpop.f32.mrf.mxu0
        %v1776 = vadd.f32 %v1607, %v1775
        %v1777 = vpop.f32.mrf.mxu0
        %v1778 = vadd.f32 %v1609, %v1777
        %1779 = vmatmul.bf16.gmra.mxu0 %v1471
        %v1780 = vpop.f32.mrf.mxu0
        %v1781 = vadd.f32 %v1612, %v1780
        %v1782 = vpop.f32.mrf.mxu0
        %v1783 = vadd.f32 %v1614, %v1782
        %1784 = vmatmul.bf16.gmra.mxu0 %v1474
        %v1785 = vpop.f32.mrf.mxu0
        %v1786 = vadd.f32 %v1617, %v1785
        %v1787 = vpop.f32.mrf.mxu0
        %v1788 = vadd.f32 %v1619, %v1787
        %1789 = vmatmul.bf16.gmra.mxu0 %v1477
        %v1790 = vpop.f32.mrf.mxu0
        %v1791 = vadd.f32 %v1622, %v1790
        %v1792 = vpop.f32.mrf.mxu0
        %v1793 = vadd.f32 %v1624, %v1792
        %1794 = vmatmul.bf16.gmra.mxu0 %v1480
        %v1795 = vpop.f32.mrf.mxu0
        %v1796 = vadd.f32 %v1627, %v1795
        %v1797 = vpop.f32.mrf.mxu0
        %v1798 = vadd.f32 %v1629, %v1797
        %1799 = vmatmul.bf16.gmra.mxu0 %v1483
        %v1800 = vpop.f32.mrf.mxu0
        %v1801 = vadd.f32 %v1632, %v1800
        %v1802 = vpop.f32.mrf.mxu0
        %v1803 = vadd.f32 %v1634, %v1802
        %1804 = vmatmul.bf16.gmra.mxu0 %v1486
        %v1805 = vpop.f32.mrf.mxu0
        %v1806 = vadd.f32 %v1637, %v1805
        %v1807 = vpop.f32.mrf.mxu0
        %v1808 = vadd.f32 %v1639, %v1807
        %1809 = vmatmul.bf16.gmra.mxu0 %v1489
        %v1810 = vpop.f32.mrf.mxu0
        %v1811 = vadd.f32 %v1642, %v1810
        %v1812 = vpop.f32.mrf.mxu0
        %v1813 = vadd.f32 %v1644, %v1812
        %1814 = vmatmul.bf16.gmra.mxu0 %v1492
        %v1815 = vpop.f32.mrf.mxu0
        %v1816 = vadd.f32 %v1647, %v1815
        %v1817 = vpop.f32.mrf.mxu0
        %v1818 = vadd.f32 %v1649, %v1817
        %1819 = vmatmul.bf16.gmra.mxu0 %v1495
        %v1820 = vpop.f32.mrf.mxu0
        %v1821 = vadd.f32 %v1652, %v1820
        %v1822 = vpop.f32.mrf.mxu0
        %v1823 = vadd.f32 %v1654, %v1822
        %1824 = vmatmul.bf16.gmra.mxu0 %v1498
        %v1825 = vpop.f32.mrf.mxu0
        %v1826 = vadd.f32 %v1657, %v1825
        %v1827 = vpop.f32.mrf.mxu0
        %v1828 = vadd.f32 %v1659, %v1827
        %1829 = vmatmul.bf16.gmra.mxu0 %v1501
        %v1830 = vpop.f32.mrf.mxu0
        %v1831 = vadd.f32 %v1662, %v1830
        %v1832 = vpop.f32.mrf.mxu0
        %v1833 = vadd.f32 %v1664, %v1832
        %1834 = vmatmul.bf16.gmra.mxu0 %v1504
        %v1835 = vpop.f32.mrf.mxu0
        %v1836 = vadd.f32 %v1667, %v1835
        %v1837 = vpop.f32.mrf.mxu0
        %v1838 = vadd.f32 %v1669, %v1837
        %1839 = vmatmul.bf16.gmra.mxu0 %v1507
        %v1840 = vpop.f32.mrf.mxu0
        %v1841 = vadd.f32 %v1672, %v1840
        %v1842 = vpop.f32.mrf.mxu0
        %v1843 = vadd.f32 %v1674, %v1842
        %1844 = vmatmul.bf16.gmra.mxu0 %v1510
        %v1845 = vpop.f32.mrf.mxu0
        %v1846 = vadd.f32 %v1677, %v1845
        %v1847 = vpop.f32.mrf.mxu0
        %v1848 = vadd.f32 %v1679, %v1847
        %1849 = vdwg.mxu0
        %v1874 = vunpack.c.l.b16 %v1247
        %v1875 = vunpack.c.l.b16 %v1248
        %v1876 = vunpack.c.l.b16 %v1249
        %v1877 = vunpack.c.l.b16 %v1250
        %v1878 = vunpack.c.l.b16 %v1251
        %v1879 = vunpack.c.l.b16 %v1252
        %v1880 = vunpack.c.l.b16 %v1253
        %v1881 = vunpack.c.l.b16 %v1254
        %v1882 = vunpack.c.l.b16 %v1255
        %v1883 = vunpack.c.l.b16 %v1256
        %v1884 = vunpack.c.l.b16 %v1257
        %v1885 = vunpack.c.l.b16 %v1258
        %v1886 = vunpack.c.l.b16 %v1259
        %v1887 = vunpack.c.l.b16 %v1260
        %v1888 = vunpack.c.l.b16 %v1261
        %v1889 = vunpack.c.l.b16 %v1262
        %v1890 = vunpack.c.l.b16 %v1263
        %v1891 = vunpack.c.l.b16 %v1264
        %v1892 = vunpack.c.l.b16 %v1265
        %v1893 = vunpack.c.l.b16 %v1266
        %v1894 = vunpack.c.l.b16 %v1267
        %v1895 = vunpack.c.l.b16 %v1268
        %v1896 = vunpack.c.l.b16 %v1269
        %v1897 = vunpack.c.l.b16 %v1270
        %v1898 = vpack.c.b16 %v1875, %v1874
        %v1899 = vpack.c.b16 %v1877, %v1876
        %v1900 = vpack.c.b16 %v1879, %v1878
        %v1901 = vpack.c.b16 %v1881, %v1880
        %v1902 = vpack.c.b16 %v1883, %v1882
        %v1903 = vpack.c.b16 %v1885, %v1884
        %v1904 = vpack.c.b16 %v1887, %v1886
        %v1905 = vpack.c.b16 %v1889, %v1888
        %v1906 = vpack.c.b16 %v1891, %v1890
        %v1907 = vpack.c.b16 %v1893, %v1892
        %v1908 = vpack.c.b16 %v1895, %v1894
        %v1909 = vpack.c.b16 %v1897, %v1896
        %v1923 = vsel %vm1150, %v1072, 0
        %v1926 = vsel %vm1150, %v1074, 0
        %1928 = vmatpush.bf16.msra.mxu0 %v1905
        %1929 = vmatpush.bf16.msra.mxu0 %v1904
        %1930 = vmatpush.bf16.msra.mxu0 %v1903
        %1931 = vmatpush.bf16.msra.mxu0 %v1902
        %1932 = vmatpush.bf16.msra.mxu0 %v1901
        %1933 = vmatpush.bf16.msra.mxu0 %v1900
        %1934 = vmatpush.bf16.msra.mxu0 %v1899
        %1935 = vmatpush.bf16.msra.mxu0 %v1898
        %1936 = vmatmul.bf16.gmra.mxu0 %v1152
        %v1937 = vpop.f32.mrf.mxu0
        %v1938 = vadd.f32 %v1691, %v1937
        %v1939 = vpop.f32.mrf.mxu0
        %v1940 = vadd.f32 %v1693, %v1939
        %1941 = vmatmul.bf16.gmra.mxu0 %v1155
        %v1942 = vpop.f32.mrf.mxu0
        %v1943 = vadd.f32 %v1696, %v1942
        %v1944 = vpop.f32.mrf.mxu0
        %v1945 = vadd.f32 %v1698, %v1944
        %1946 = vmatmul.bf16.gmra.mxu0 %v1158
        %v1947 = vpop.f32.mrf.mxu0
        %v1948 = vadd.f32 %v1701, %v1947
        %v1949 = vpop.f32.mrf.mxu0
        %v1950 = vadd.f32 %v1703, %v1949
        %1951 = vmatmul.bf16.gmra.mxu0 %v1161
        %v1952 = vpop.f32.mrf.mxu0
        %v1953 = vadd.f32 %v1706, %v1952
        %v1954 = vpop.f32.mrf.mxu0
        %v1955 = vadd.f32 %v1708, %v1954
        %1956 = vmatmul.bf16.gmra.mxu0 %v1164
        %v1957 = vpop.f32.mrf.mxu0
        %v1958 = vadd.f32 %v1711, %v1957
        %v1959 = vpop.f32.mrf.mxu0
        %v1960 = vadd.f32 %v1713, %v1959
        %1961 = vmatmul.bf16.gmra.mxu0 %v1167
        %v1962 = vpop.f32.mrf.mxu0
        %v1963 = vadd.f32 %v1716, %v1962
        %v1964 = vpop.f32.mrf.mxu0
        %v1965 = vadd.f32 %v1718, %v1964
        %1966 = vmatmul.bf16.gmra.mxu0 %v1170
        %v1967 = vpop.f32.mrf.mxu0
        %v1968 = vadd.f32 %v1721, %v1967
        %v1969 = vpop.f32.mrf.mxu0
        %v1970 = vadd.f32 %v1723, %v1969
        %1971 = vmatmul.bf16.gmra.mxu0 %v1173
        %v1972 = vpop.f32.mrf.mxu0
        %v1973 = vadd.f32 %v1726, %v1972
        %v1974 = vpop.f32.mrf.mxu0
        %v1975 = vadd.f32 %v1728, %v1974
        %1976 = vmatmul.bf16.gmra.mxu0 %v1176
        %v1977 = vpop.f32.mrf.mxu0
        %v1978 = vadd.f32 %v1731, %v1977
        %v1979 = vpop.f32.mrf.mxu0
        %v1980 = vadd.f32 %v1733, %v1979
        %1981 = vmatmul.bf16.gmra.mxu0 %v1179
        %v1982 = vpop.f32.mrf.mxu0
        %v1983 = vadd.f32 %v1736, %v1982
        %v1984 = vpop.f32.mrf.mxu0
        %v1985 = vadd.f32 %v1738, %v1984
        %1986 = vmatmul.bf16.gmra.mxu0 %v1182
        %v1987 = vpop.f32.mrf.mxu0
        %v1988 = vadd.f32 %v1741, %v1987
        %v1989 = vpop.f32.mrf.mxu0
        %v1990 = vadd.f32 %v1743, %v1989
        %1991 = vmatmul.bf16.gmra.mxu0 %v1185
        %v1992 = vpop.f32.mrf.mxu0
        %v1993 = vadd.f32 %v1746, %v1992
        %v1994 = vpop.f32.mrf.mxu0
        %v1995 = vadd.f32 %v1748, %v1994
        %1996 = vmatmul.bf16.gmra.mxu0 %v1188
        %v1997 = vpop.f32.mrf.mxu0
        %v1998 = vadd.f32 %v1751, %v1997
        %v1999 = vpop.f32.mrf.mxu0
        %v2000 = vadd.f32 %v1753, %v1999
        %2001 = vmatmul.bf16.gmra.mxu0 %v1191
        %v2002 = vpop.f32.mrf.mxu0
        %v2003 = vadd.f32 %v1756, %v2002
        %v2004 = vpop.f32.mrf.mxu0
        %v2005 = vadd.f32 %v1758, %v2004
        %2006 = vmatmul.bf16.gmra.mxu0 %v1194
        %v2007 = vpop.f32.mrf.mxu0
        %v2008 = vadd.f32 %v1761, %v2007
        %v2009 = vpop.f32.mrf.mxu0
        %v2010 = vadd.f32 %v1763, %v2009
        %2011 = vmatmul.bf16.gmra.mxu0 %v1197
        %v2012 = vpop.f32.mrf.mxu0
        %v2013 = vadd.f32 %v1766, %v2012
        %v2014 = vpop.f32.mrf.mxu0
        %v2015 = vadd.f32 %v1768, %v2014
        %2016 = vmatmul.bf16.gmra.mxu0 %v1200
        %v2017 = vpop.f32.mrf.mxu0
        %v2018 = vadd.f32 %v1771, %v2017
        %v2019 = vpop.f32.mrf.mxu0
        %v2020 = vadd.f32 %v1773, %v2019
        %2021 = vmatmul.bf16.gmra.mxu0 %v1203
        %v2022 = vpop.f32.mrf.mxu0
        %v2023 = vadd.f32 %v1776, %v2022
        %v2024 = vpop.f32.mrf.mxu0
        %v2025 = vadd.f32 %v1778, %v2024
        %2026 = vmatmul.bf16.gmra.mxu0 %v1206
        %v2027 = vpop.f32.mrf.mxu0
        %v2028 = vadd.f32 %v1781, %v2027
        %v2029 = vpop.f32.mrf.mxu0
        %v2030 = vadd.f32 %v1783, %v2029
        %2031 = vmatmul.bf16.gmra.mxu0 %v1209
        %v2032 = vpop.f32.mrf.mxu0
        %v2033 = vadd.f32 %v1786, %v2032
        %v2034 = vpop.f32.mrf.mxu0
        %v2035 = vadd.f32 %v1788, %v2034
        %2036 = vmatmul.bf16.gmra.mxu0 %v1212
        %v2037 = vpop.f32.mrf.mxu0
        %v2038 = vadd.f32 %v1791, %v2037
        %v2039 = vpop.f32.mrf.mxu0
        %v2040 = vadd.f32 %v1793, %v2039
        %2041 = vmatmul.bf16.gmra.mxu0 %v1215
        %v2042 = vpop.f32.mrf.mxu0
        %v2043 = vadd.f32 %v1796, %v2042
        %v2044 = vpop.f32.mrf.mxu0
        %v2045 = vadd.f32 %v1798, %v2044
        %2046 = vmatmul.bf16.gmra.mxu0 %v1218
        %v2047 = vpop.f32.mrf.mxu0
        %v2048 = vadd.f32 %v1801, %v2047
        %v2049 = vpop.f32.mrf.mxu0
        %v2050 = vadd.f32 %v1803, %v2049
        %2051 = vmatmul.bf16.gmra.mxu0 %v1221
        %v2052 = vpop.f32.mrf.mxu0
        %v2053 = vadd.f32 %v1806, %v2052
        %v2054 = vpop.f32.mrf.mxu0
        %v2055 = vadd.f32 %v1808, %v2054
        %2056 = vmatmul.bf16.gmra.mxu0 %v1224
        %v2057 = vpop.f32.mrf.mxu0
        %v2058 = vadd.f32 %v1811, %v2057
        %v2059 = vpop.f32.mrf.mxu0
        %v2060 = vadd.f32 %v1813, %v2059
        %2061 = vmatmul.bf16.gmra.mxu0 %v1227
        %v2062 = vpop.f32.mrf.mxu0
        %v2063 = vadd.f32 %v1816, %v2062
        %v2064 = vpop.f32.mrf.mxu0
        %v2065 = vadd.f32 %v1818, %v2064
        %2066 = vmatmul.bf16.gmra.mxu0 %v1230
        %v2067 = vpop.f32.mrf.mxu0
        %v2068 = vadd.f32 %v1821, %v2067
        %v2069 = vpop.f32.mrf.mxu0
        %v2070 = vadd.f32 %v1823, %v2069
        %2071 = vmatmul.bf16.gmra.mxu0 %v1233
        %v2072 = vpop.f32.mrf.mxu0
        %v2073 = vadd.f32 %v1826, %v2072
        %v2074 = vpop.f32.mrf.mxu0
        %v2075 = vadd.f32 %v1828, %v2074
        %2076 = vmatmul.bf16.gmra.mxu0 %v1236
        %v2077 = vpop.f32.mrf.mxu0
        %v2078 = vadd.f32 %v1831, %v2077
        %v2079 = vpop.f32.mrf.mxu0
        %v2080 = vadd.f32 %v1833, %v2079
        %2081 = vmatmul.bf16.gmra.mxu0 %v1239
        %v2082 = vpop.f32.mrf.mxu0
        %v2083 = vadd.f32 %v1836, %v2082
        %v2084 = vpop.f32.mrf.mxu0
        %v2085 = vadd.f32 %v1838, %v2084
        %2086 = vmatmul.bf16.gmra.mxu0 %v1242
        %v2087 = vpop.f32.mrf.mxu0
        %v2088 = vadd.f32 %v1841, %v2087
        %v2089 = vpop.f32.mrf.mxu0
        %v2090 = vadd.f32 %v1843, %v2089
        %2091 = vmatmul.bf16.gmra.mxu0 %v1245
        %v2092 = vpop.f32.mrf.mxu0
        %v2093 = vadd.f32 %v1846, %v2092
        %v2094 = vpop.f32.mrf.mxu0
        %v2095 = vadd.f32 %v1848, %v2094
        %2096 = vdwg.mxu0
        %2097 = vmatpush.bf16.msra.mxu0 0
        %2098 = vmatpush.bf16.msra.mxu0 0
        %2099 = vmatpush.bf16.msra.mxu0 0
        %2100 = vmatpush.bf16.msra.mxu0 0
        %2101 = vmatpush.bf16.msra.mxu0 %v1909
        %2102 = vmatpush.bf16.msra.mxu0 %v1908
        %2103 = vmatpush.bf16.msra.mxu0 %v1907
        %2104 = vmatpush.bf16.msra.mxu0 %v1906
        %2105 = vmatmul.bf16.gmra.mxu0 %v1923
        %v2106 = vpop.f32.mrf.mxu0
        %v2107 = vadd.f32 %v1938, %v2106
        %v2108 = vpop.f32.mrf.mxu0
        %v2109 = vadd.f32 %v1940, %v2108
        %2110 = vmatmul.bf16.gmra.mxu0 %v1926
        %v2111 = vpop.f32.mrf.mxu0
        %v2112 = vadd.f32 %v1943, %v2111
        %v2113 = vpop.f32.mrf.mxu0
        %v2114 = vadd.f32 %v1945, %v2113
        %2115 = vmatmul.bf16.gmra.mxu0 %v1417
        %v2116 = vpop.f32.mrf.mxu0
        %v2117 = vadd.f32 %v1948, %v2116
        %v2118 = vpop.f32.mrf.mxu0
        %v2119 = vadd.f32 %v1950, %v2118
        %2120 = vmatmul.bf16.gmra.mxu0 %v1420
        %v2121 = vpop.f32.mrf.mxu0
        %v2122 = vadd.f32 %v1953, %v2121
        %v2123 = vpop.f32.mrf.mxu0
        %v2124 = vadd.f32 %v1955, %v2123
        %2125 = vmatmul.bf16.gmra.mxu0 %v1423
        %v2126 = vpop.f32.mrf.mxu0
        %v2127 = vadd.f32 %v1958, %v2126
        %v2128 = vpop.f32.mrf.mxu0
        %v2129 = vadd.f32 %v1960, %v2128
        %2130 = vmatmul.bf16.gmra.mxu0 %v1426
        %v2131 = vpop.f32.mrf.mxu0
        %v2132 = vadd.f32 %v1963, %v2131
        %v2133 = vpop.f32.mrf.mxu0
        %v2134 = vadd.f32 %v1965, %v2133
        %2135 = vmatmul.bf16.gmra.mxu0 %v1429
        %v2136 = vpop.f32.mrf.mxu0
        %v2137 = vadd.f32 %v1968, %v2136
        %v2138 = vpop.f32.mrf.mxu0
        %v2139 = vadd.f32 %v1970, %v2138
        %2140 = vmatmul.bf16.gmra.mxu0 %v1432
        %v2141 = vpop.f32.mrf.mxu0
        %v2142 = vadd.f32 %v1973, %v2141
        %v2143 = vpop.f32.mrf.mxu0
        %v2144 = vadd.f32 %v1975, %v2143
        %2145 = vmatmul.bf16.gmra.mxu0 %v1435
        %v2146 = vpop.f32.mrf.mxu0
        %v2147 = vadd.f32 %v1978, %v2146
        %v2148 = vpop.f32.mrf.mxu0
        %v2149 = vadd.f32 %v1980, %v2148
        %2150 = vmatmul.bf16.gmra.mxu0 %v1438
        %v2151 = vpop.f32.mrf.mxu0
        %v2152 = vadd.f32 %v1983, %v2151
        %v2153 = vpop.f32.mrf.mxu0
        %v2154 = vadd.f32 %v1985, %v2153
        %2155 = vmatmul.bf16.gmra.mxu0 %v1441
        %v2156 = vpop.f32.mrf.mxu0
        %v2157 = vadd.f32 %v1988, %v2156
        %v2158 = vpop.f32.mrf.mxu0
        %v2159 = vadd.f32 %v1990, %v2158
        %2160 = vmatmul.bf16.gmra.mxu0 %v1444
        %v2161 = vpop.f32.mrf.mxu0
        %v2162 = vadd.f32 %v1993, %v2161
        %v2163 = vpop.f32.mrf.mxu0
        %v2164 = vadd.f32 %v1995, %v2163
        %2165 = vmatmul.bf16.gmra.mxu0 %v1447
        %v2166 = vpop.f32.mrf.mxu0
        %v2167 = vadd.f32 %v1998, %v2166
        %v2168 = vpop.f32.mrf.mxu0
        %v2169 = vadd.f32 %v2000, %v2168
        %2170 = vmatmul.bf16.gmra.mxu0 %v1450
        %v2171 = vpop.f32.mrf.mxu0
        %v2172 = vadd.f32 %v2003, %v2171
        %v2173 = vpop.f32.mrf.mxu0
        %v2174 = vadd.f32 %v2005, %v2173
        %2175 = vmatmul.bf16.gmra.mxu0 %v1453
        %v2176 = vpop.f32.mrf.mxu0
        %v2177 = vadd.f32 %v2008, %v2176
        %v2178 = vpop.f32.mrf.mxu0
        %v2179 = vadd.f32 %v2010, %v2178
        %2180 = vmatmul.bf16.gmra.mxu0 %v1456
        %v2181 = vpop.f32.mrf.mxu0
        %v2182 = vadd.f32 %v2013, %v2181
        %v2183 = vpop.f32.mrf.mxu0
        %v2184 = vadd.f32 %v2015, %v2183
        %2185 = vmatmul.bf16.gmra.mxu0 %v1459
        %v2186 = vpop.f32.mrf.mxu0
        %v2187 = vadd.f32 %v2018, %v2186
        %v2188 = vpop.f32.mrf.mxu0
        %v2189 = vadd.f32 %v2020, %v2188
        %2190 = vmatmul.bf16.gmra.mxu0 %v1462
        %v2191 = vpop.f32.mrf.mxu0
        %v2192 = vadd.f32 %v2023, %v2191
        %v2193 = vpop.f32.mrf.mxu0
        %v2194 = vadd.f32 %v2025, %v2193
        %2195 = vmatmul.bf16.gmra.mxu0 %v1465
        %v2196 = vpop.f32.mrf.mxu0
        %v2197 = vadd.f32 %v2028, %v2196
        %v2198 = vpop.f32.mrf.mxu0
        %v2199 = vadd.f32 %v2030, %v2198
        %2200 = vmatmul.bf16.gmra.mxu0 %v1468
        %v2201 = vpop.f32.mrf.mxu0
        %v2202 = vadd.f32 %v2033, %v2201
        %v2203 = vpop.f32.mrf.mxu0
        %v2204 = vadd.f32 %v2035, %v2203
        %2205 = vmatmul.bf16.gmra.mxu0 %v1471
        %v2206 = vpop.f32.mrf.mxu0
        %v2207 = vadd.f32 %v2038, %v2206
        %v2208 = vpop.f32.mrf.mxu0
        %v2209 = vadd.f32 %v2040, %v2208
        %2210 = vmatmul.bf16.gmra.mxu0 %v1474
        %v2211 = vpop.f32.mrf.mxu0
        %v2212 = vadd.f32 %v2043, %v2211
        %v2213 = vpop.f32.mrf.mxu0
        %v2214 = vadd.f32 %v2045, %v2213
        %2215 = vmatmul.bf16.gmra.mxu0 %v1477
        %v2216 = vpop.f32.mrf.mxu0
        %v2217 = vadd.f32 %v2048, %v2216
        %v2218 = vpop.f32.mrf.mxu0
        %v2219 = vadd.f32 %v2050, %v2218
        %2220 = vmatmul.bf16.gmra.mxu0 %v1480
        %v2221 = vpop.f32.mrf.mxu0
        %v2222 = vadd.f32 %v2053, %v2221
        %v2223 = vpop.f32.mrf.mxu0
        %v2224 = vadd.f32 %v2055, %v2223
        %2225 = vmatmul.bf16.gmra.mxu0 %v1483
        %v2226 = vpop.f32.mrf.mxu0
        %v2227 = vadd.f32 %v2058, %v2226
        %v2228 = vpop.f32.mrf.mxu0
        %v2229 = vadd.f32 %v2060, %v2228
        %2230 = vmatmul.bf16.gmra.mxu0 %v1486
        %v2231 = vpop.f32.mrf.mxu0
        %v2232 = vadd.f32 %v2063, %v2231
        %v2233 = vpop.f32.mrf.mxu0
        %v2234 = vadd.f32 %v2065, %v2233
        %2235 = vmatmul.bf16.gmra.mxu0 %v1489
        %v2236 = vpop.f32.mrf.mxu0
        %v2237 = vadd.f32 %v2068, %v2236
        %v2238 = vpop.f32.mrf.mxu0
        %v2239 = vadd.f32 %v2070, %v2238
        %2240 = vmatmul.bf16.gmra.mxu0 %v1492
        %v2241 = vpop.f32.mrf.mxu0
        %v2242 = vadd.f32 %v2073, %v2241
        %v2243 = vpop.f32.mrf.mxu0
        %v2244 = vadd.f32 %v2075, %v2243
        %2245 = vmatmul.bf16.gmra.mxu0 %v1495
        %v2246 = vpop.f32.mrf.mxu0
        %v2247 = vadd.f32 %v2078, %v2246
        %v2248 = vpop.f32.mrf.mxu0
        %v2249 = vadd.f32 %v2080, %v2248
        %2250 = vmatmul.bf16.gmra.mxu0 %v1498
        %v2251 = vpop.f32.mrf.mxu0
        %v2252 = vadd.f32 %v2083, %v2251
        %v2253 = vpop.f32.mrf.mxu0
        %v2254 = vadd.f32 %v2085, %v2253
        %2255 = vmatmul.bf16.gmra.mxu0 %v1501
        %v2256 = vpop.f32.mrf.mxu0
        %v2257 = vadd.f32 %v2088, %v2256
        %v2258 = vpop.f32.mrf.mxu0
        %v2259 = vadd.f32 %v2090, %v2258
        %2260 = vmatmul.bf16.gmra.mxu0 %v1504
        %v2261 = vpop.f32.mrf.mxu0
        %v2262 = vadd.f32 %v2093, %v2261
        %v2263 = vpop.f32.mrf.mxu0
        %v2264 = vadd.f32 %v2095, %v2263
        %2265 = vdwg.mxu0
        %v2270 = vunpack.c.l.b16 %v471
        %v2271 = vunpack.c.l.b16 %v472
        %v2272 = vunpack.c.l.b16 %v473
        %v2273 = vunpack.c.l.b16 %v474
        %v2274 = vpack.c.b16 %v2271, %v2270
        %v2275 = vpack.c.b16 %v2273, %v2272
        %v2277 = vunpack.c.l.b16 %v475
        %v2278 = vpack.c.b16 %v2277, %v2277
        %v2280 = vshrl.u32 %v2274, 16
        %v2282 = vshll.u32 %v2274, 16
        %v2284 = vrot.slane %v2282, 1
        %v2285 = vor.u32 %v2280, %v2284
        %v2287 = vshll.u32 %v2275, 16
        %v2289 = vrot.slane %v2287, 1
        %v2290 = vsel %vm684, %v2285, %v2289
        %v2291 = vshrl.u32 %v2275, 16
        %v2293 = vor.u32 %v2291, %v2289
        %v2295 = vshll.u32 %v2278, 16
        %v2297 = vrot.slane %v2295, 1
        %v2298 = vsel %vm684, %v2293, %v2297
        %2299 = vrot.lane.b32.xlu0 %v2290, 64
        %v2300 = vpop.permute.xlu0 %2299
        %2301 = vrot.lane.b32.xlu0 %v2298, 64
        %v2302 = vpop.permute.xlu0 %2301
        %v2303 = vrot.slane %v2274, 1
        %v2304 = vrot.slane %v2275, 1
        %v2305 = vsel %vm1069, %v2303, %v2304
        %v2306 = vrot.slane %v2278, 1
        %v2307 = vsel %vm1069, %v2304, %v2306
        %v2309 = vsel %vm1150, %v2274, %v2300
        %v2312 = vsel %vm1150, %v2275, %v2302
        %s2314 = scalar_lea.vmem %s3, 192
        %v2315 = vld [vmem:[%s2314] sm:$0xf]
        %v2316 = vld [vmem:[%s2314 + $0x4] sm:$0xf]
        %v2317 = vld [vmem:[%s2314 + $0x8] sm:$0xf]
        %v2318 = vld [vmem:[%s2314 + $0xc] sm:$0xf]
        %v2319 = vld [vmem:[%s2314 + $0x10] sm:$0xf]
        %v2320 = vld [vmem:[%s2314 + $0x14] sm:$0xf]
        %v2321 = vld [vmem:[%s2314 + $0x18] sm:$0xf]
        %v2322 = vld [vmem:[%s2314 + $0x1c] sm:$0xf]
        %v2323 = vld [vmem:[%s2314 + $0x20] sm:$0xf]
        %v2324 = vld [vmem:[%s2314 + $0x24] sm:$0xf]
        %v2325 = vld [vmem:[%s2314 + $0x28] sm:$0xf]
        %v2326 = vld [vmem:[%s2314 + $0x2c] sm:$0xf]
        %v2327 = vld [vmem:[%s2314 + $0x30] sm:$0xf]
        %v2328 = vld [vmem:[%s2314 + $0x34] sm:$0xf]
        %v2329 = vld [vmem:[%s2314 + $0x38] sm:$0xf]
        %v2330 = vld [vmem:[%s2314 + $0x3c] sm:$0xf]
        %v2331 = vld [vmem:[%s2314 + $0x40] sm:$0xf]
        %v2332 = vld [vmem:[%s2314 + $0x44] sm:$0xf]
        %v2333 = vld [vmem:[%s2314 + $0x48] sm:$0xf]
        %v2334 = vld [vmem:[%s2314 + $0x4c] sm:$0xf]
        %v2335 = vld [vmem:[%s2314 + $0x50] sm:$0xf]
        %v2336 = vld [vmem:[%s2314 + $0x54] sm:$0xf]
        %v2337 = vld [vmem:[%s2314 + $0x58] sm:$0xf]
        %v2338 = vld [vmem:[%s2314 + $0x5c] sm:$0xf]
        %v2363 = vunpack.c.l.b16 %v2315
        %v2364 = vunpack.c.l.b16 %v2316
        %v2365 = vunpack.c.l.b16 %v2317
        %v2366 = vunpack.c.l.b16 %v2318
        %v2367 = vunpack.c.l.b16 %v2319
        %v2368 = vunpack.c.l.b16 %v2320
        %v2369 = vunpack.c.l.b16 %v2321
        %v2370 = vunpack.c.l.b16 %v2322
        %v2371 = vunpack.c.l.b16 %v2323
        %v2372 = vunpack.c.l.b16 %v2324
        %v2373 = vunpack.c.l.b16 %v2325
        %v2374 = vunpack.c.l.b16 %v2326
        %v2375 = vunpack.c.l.b16 %v2327
        %v2376 = vunpack.c.l.b16 %v2328
        %v2377 = vunpack.c.l.b16 %v2329
        %v2378 = vunpack.c.l.b16 %v2330
        %v2379 = vunpack.c.l.b16 %v2331
        %v2380 = vunpack.c.l.b16 %v2332
        %v2381 = vunpack.c.l.b16 %v2333
        %v2382 = vunpack.c.l.b16 %v2334
        %v2383 = vunpack.c.l.b16 %v2335
        %v2384 = vunpack.c.l.b16 %v2336
        %v2385 = vunpack.c.l.b16 %v2337
        %v2386 = vunpack.c.l.b16 %v2338
        %v2387 = vpack.c.b16 %v2364, %v2363
        %v2388 = vpack.c.b16 %v2366, %v2365
        %v2389 = vpack.c.b16 %v2368, %v2367
        %v2390 = vpack.c.b16 %v2370, %v2369
        %v2391 = vpack.c.b16 %v2372, %v2371
        %v2392 = vpack.c.b16 %v2374, %v2373
        %v2393 = vpack.c.b16 %v2376, %v2375
        %v2394 = vpack.c.b16 %v2378, %v2377
        %v2395 = vpack.c.b16 %v2380, %v2379
        %v2396 = vpack.c.b16 %v2382, %v2381
        %v2397 = vpack.c.b16 %v2384, %v2383
        %v2398 = vpack.c.b16 %v2386, %v2385
        %v2412 = vsel %vm1150, %v2305, 0
        %v2415 = vsel %vm1150, %v2307, 0
        %2417 = vmatpush.bf16.msra.mxu0 %v2394
        %2418 = vmatpush.bf16.msra.mxu0 %v2393
        %2419 = vmatpush.bf16.msra.mxu0 %v2392
        %2420 = vmatpush.bf16.msra.mxu0 %v2391
        %2421 = vmatpush.bf16.msra.mxu0 %v2390
        %2422 = vmatpush.bf16.msra.mxu0 %v2389
        %2423 = vmatpush.bf16.msra.mxu0 %v2388
        %2424 = vmatpush.bf16.msra.mxu0 %v2387
        %2425 = vmatmul.bf16.gmra.mxu0 %v1164
        %v2426 = vpop.f32.mrf.mxu0
        %v2427 = vadd.f32 0.0, %v2426
        %v2428 = vpop.f32.mrf.mxu0
        %v2429 = vadd.f32 0.0, %v2428
        %2430 = vmatmul.bf16.gmra.mxu0 %v1167
        %v2431 = vpop.f32.mrf.mxu0
        %v2432 = vadd.f32 0.0, %v2431
        %v2433 = vpop.f32.mrf.mxu0
        %v2434 = vadd.f32 0.0, %v2433
        %2435 = vmatmul.bf16.gmra.mxu0 %v1170
        %v2436 = vpop.f32.mrf.mxu0
        %v2437 = vadd.f32 0.0, %v2436
        %v2438 = vpop.f32.mrf.mxu0
        %v2439 = vadd.f32 0.0, %v2438
        %2440 = vmatmul.bf16.gmra.mxu0 %v1173
        %v2441 = vpop.f32.mrf.mxu0
        %v2442 = vadd.f32 0.0, %v2441
        %v2443 = vpop.f32.mrf.mxu0
        %v2444 = vadd.f32 0.0, %v2443
        %2445 = vmatmul.bf16.gmra.mxu0 %v1176
        %v2446 = vpop.f32.mrf.mxu0
        %v2447 = vadd.f32 0.0, %v2446
        %v2448 = vpop.f32.mrf.mxu0
        %v2449 = vadd.f32 0.0, %v2448
        %2450 = vmatmul.bf16.gmra.mxu0 %v1179
        %v2451 = vpop.f32.mrf.mxu0
        %v2452 = vadd.f32 0.0, %v2451
        %v2453 = vpop.f32.mrf.mxu0
        %v2454 = vadd.f32 0.0, %v2453
        %2455 = vmatmul.bf16.gmra.mxu0 %v1182
        %v2456 = vpop.f32.mrf.mxu0
        %v2457 = vadd.f32 0.0, %v2456
        %v2458 = vpop.f32.mrf.mxu0
        %v2459 = vadd.f32 0.0, %v2458
        %2460 = vmatmul.bf16.gmra.mxu0 %v1185
        %v2461 = vpop.f32.mrf.mxu0
        %v2462 = vadd.f32 0.0, %v2461
        %v2463 = vpop.f32.mrf.mxu0
        %v2464 = vadd.f32 0.0, %v2463
        %2465 = vmatmul.bf16.gmra.mxu0 %v1188
        %v2466 = vpop.f32.mrf.mxu0
        %v2467 = vadd.f32 0.0, %v2466
        %v2468 = vpop.f32.mrf.mxu0
        %v2469 = vadd.f32 0.0, %v2468
        %2470 = vmatmul.bf16.gmra.mxu0 %v1191
        %v2471 = vpop.f32.mrf.mxu0
        %v2472 = vadd.f32 0.0, %v2471
        %v2473 = vpop.f32.mrf.mxu0
        %v2474 = vadd.f32 0.0, %v2473
        %2475 = vmatmul.bf16.gmra.mxu0 %v1194
        %v2476 = vpop.f32.mrf.mxu0
        %v2477 = vadd.f32 0.0, %v2476
        %v2478 = vpop.f32.mrf.mxu0
        %v2479 = vadd.f32 0.0, %v2478
        %2480 = vmatmul.bf16.gmra.mxu0 %v1197
        %v2481 = vpop.f32.mrf.mxu0
        %v2482 = vadd.f32 0.0, %v2481
        %v2483 = vpop.f32.mrf.mxu0
        %v2484 = vadd.f32 0.0, %v2483
        %2485 = vmatmul.bf16.gmra.mxu0 %v1200
        %v2486 = vpop.f32.mrf.mxu0
        %v2487 = vadd.f32 0.0, %v2486
        %v2488 = vpop.f32.mrf.mxu0
        %v2489 = vadd.f32 0.0, %v2488
        %2490 = vmatmul.bf16.gmra.mxu0 %v1203
        %v2491 = vpop.f32.mrf.mxu0
        %v2492 = vadd.f32 0.0, %v2491
        %v2493 = vpop.f32.mrf.mxu0
        %v2494 = vadd.f32 0.0, %v2493
        %2495 = vmatmul.bf16.gmra.mxu0 %v1206
        %v2496 = vpop.f32.mrf.mxu0
        %v2497 = vadd.f32 0.0, %v2496
        %v2498 = vpop.f32.mrf.mxu0
        %v2499 = vadd.f32 0.0, %v2498
        %2500 = vmatmul.bf16.gmra.mxu0 %v1209
        %v2501 = vpop.f32.mrf.mxu0
        %v2502 = vadd.f32 0.0, %v2501
        %v2503 = vpop.f32.mrf.mxu0
        %v2504 = vadd.f32 0.0, %v2503
        %2505 = vmatmul.bf16.gmra.mxu0 %v1212
        %v2506 = vpop.f32.mrf.mxu0
        %v2507 = vadd.f32 0.0, %v2506
        %v2508 = vpop.f32.mrf.mxu0
        %v2509 = vadd.f32 0.0, %v2508
        %2510 = vmatmul.bf16.gmra.mxu0 %v1215
        %v2511 = vpop.f32.mrf.mxu0
        %v2512 = vadd.f32 0.0, %v2511
        %v2513 = vpop.f32.mrf.mxu0
        %v2514 = vadd.f32 0.0, %v2513
        %2515 = vmatmul.bf16.gmra.mxu0 %v1218
        %v2516 = vpop.f32.mrf.mxu0
        %v2517 = vadd.f32 0.0, %v2516
        %v2518 = vpop.f32.mrf.mxu0
        %v2519 = vadd.f32 0.0, %v2518
        %2520 = vmatmul.bf16.gmra.mxu0 %v1221
        %v2521 = vpop.f32.mrf.mxu0
        %v2522 = vadd.f32 0.0, %v2521
        %v2523 = vpop.f32.mrf.mxu0
        %v2524 = vadd.f32 0.0, %v2523
        %2525 = vmatmul.bf16.gmra.mxu0 %v1224
        %v2526 = vpop.f32.mrf.mxu0
        %v2527 = vadd.f32 0.0, %v2526
        %v2528 = vpop.f32.mrf.mxu0
        %v2529 = vadd.f32 0.0, %v2528
        %2530 = vmatmul.bf16.gmra.mxu0 %v1227
        %v2531 = vpop.f32.mrf.mxu0
        %v2532 = vadd.f32 0.0, %v2531
        %v2533 = vpop.f32.mrf.mxu0
        %v2534 = vadd.f32 0.0, %v2533
        %2535 = vmatmul.bf16.gmra.mxu0 %v1230
        %v2536 = vpop.f32.mrf.mxu0
        %v2537 = vadd.f32 0.0, %v2536
        %v2538 = vpop.f32.mrf.mxu0
        %v2539 = vadd.f32 0.0, %v2538
        %2540 = vmatmul.bf16.gmra.mxu0 %v1233
        %v2541 = vpop.f32.mrf.mxu0
        %v2542 = vadd.f32 0.0, %v2541
        %v2543 = vpop.f32.mrf.mxu0
        %v2544 = vadd.f32 0.0, %v2543
        %2545 = vmatmul.bf16.gmra.mxu0 %v1236
        %v2546 = vpop.f32.mrf.mxu0
        %v2547 = vadd.f32 0.0, %v2546
        %v2548 = vpop.f32.mrf.mxu0
        %v2549 = vadd.f32 0.0, %v2548
        %2550 = vmatmul.bf16.gmra.mxu0 %v1239
        %v2551 = vpop.f32.mrf.mxu0
        %v2552 = vadd.f32 0.0, %v2551
        %v2553 = vpop.f32.mrf.mxu0
        %v2554 = vadd.f32 0.0, %v2553
        %2555 = vmatmul.bf16.gmra.mxu0 %v1242
        %v2556 = vpop.f32.mrf.mxu0
        %v2557 = vadd.f32 0.0, %v2556
        %v2558 = vpop.f32.mrf.mxu0
        %v2559 = vadd.f32 0.0, %v2558
        %2560 = vmatmul.bf16.gmra.mxu0 %v1245
        %v2561 = vpop.f32.mrf.mxu0
        %v2562 = vadd.f32 0.0, %v2561
        %v2563 = vpop.f32.mrf.mxu0
        %v2564 = vadd.f32 0.0, %v2563
        %2565 = vmatmul.bf16.gmra.mxu0 %v1314
        %v2566 = vpop.f32.mrf.mxu0
        %v2567 = vadd.f32 0.0, %v2566
        %v2568 = vpop.f32.mrf.mxu0
        %v2569 = vadd.f32 0.0, %v2568
        %2570 = vmatmul.bf16.gmra.mxu0 %v1317
        %v2571 = vpop.f32.mrf.mxu0
        %v2572 = vadd.f32 0.0, %v2571
        %v2573 = vpop.f32.mrf.mxu0
        %v2574 = vadd.f32 0.0, %v2573
        %2575 = vmatmul.bf16.gmra.mxu0 %v2309
        %v2576 = vpop.f32.mrf.mxu0
        %v2577 = vadd.f32 0.0, %v2576
        %v2578 = vpop.f32.mrf.mxu0
        %v2579 = vadd.f32 0.0, %v2578
        %2580 = vmatmul.bf16.gmra.mxu0 %v2312
        %v2581 = vpop.f32.mrf.mxu0
        %v2582 = vadd.f32 0.0, %v2581
        %v2583 = vpop.f32.mrf.mxu0
        %v2584 = vadd.f32 0.0, %v2583
        %2585 = vdwg.mxu0
        %2586 = vmatpush.bf16.msra.mxu0 0
        %2587 = vmatpush.bf16.msra.mxu0 0
        %2588 = vmatpush.bf16.msra.mxu0 0
        %2589 = vmatpush.bf16.msra.mxu0 0
        %2590 = vmatpush.bf16.msra.mxu0 %v2398
        %2591 = vmatpush.bf16.msra.mxu0 %v2397
        %2592 = vmatpush.bf16.msra.mxu0 %v2396
        %2593 = vmatpush.bf16.msra.mxu0 %v2395
        %2594 = vmatmul.bf16.gmra.mxu0 %v1423
        %v2595 = vpop.f32.mrf.mxu0
        %v2596 = vadd.f32 %v2427, %v2595
        %v2597 = vpop.f32.mrf.mxu0
        %v2598 = vadd.f32 %v2429, %v2597
        %2599 = vmatmul.bf16.gmra.mxu0 %v1426
        %v2600 = vpop.f32.mrf.mxu0
        %v2601 = vadd.f32 %v2432, %v2600
        %v2602 = vpop.f32.mrf.mxu0
        %v2603 = vadd.f32 %v2434, %v2602
        %2604 = vmatmul.bf16.gmra.mxu0 %v1429
        %v2605 = vpop.f32.mrf.mxu0
        %v2606 = vadd.f32 %v2437, %v2605
        %v2607 = vpop.f32.mrf.mxu0
        %v2608 = vadd.f32 %v2439, %v2607
        %2609 = vmatmul.bf16.gmra.mxu0 %v1432
        %v2610 = vpop.f32.mrf.mxu0
        %v2611 = vadd.f32 %v2442, %v2610
        %v2612 = vpop.f32.mrf.mxu0
        %v2613 = vadd.f32 %v2444, %v2612
        %2614 = vmatmul.bf16.gmra.mxu0 %v1435
        %v2615 = vpop.f32.mrf.mxu0
        %v2616 = vadd.f32 %v2447, %v2615
        %v2617 = vpop.f32.mrf.mxu0
        %v2618 = vadd.f32 %v2449, %v2617
        %2619 = vmatmul.bf16.gmra.mxu0 %v1438
        %v2620 = vpop.f32.mrf.mxu0
        %v2621 = vadd.f32 %v2452, %v2620
        %v2622 = vpop.f32.mrf.mxu0
        %v2623 = vadd.f32 %v2454, %v2622
        %2624 = vmatmul.bf16.gmra.mxu0 %v1441
        %v2625 = vpop.f32.mrf.mxu0
        %v2626 = vadd.f32 %v2457, %v2625
        %v2627 = vpop.f32.mrf.mxu0
        %v2628 = vadd.f32 %v2459, %v2627
        %2629 = vmatmul.bf16.gmra.mxu0 %v1444
        %v2630 = vpop.f32.mrf.mxu0
        %v2631 = vadd.f32 %v2462, %v2630
        %v2632 = vpop.f32.mrf.mxu0
        %v2633 = vadd.f32 %v2464, %v2632
        %2634 = vmatmul.bf16.gmra.mxu0 %v1447
        %v2635 = vpop.f32.mrf.mxu0
        %v2636 = vadd.f32 %v2467, %v2635
        %v2637 = vpop.f32.mrf.mxu0
        %v2638 = vadd.f32 %v2469, %v2637
        %2639 = vmatmul.bf16.gmra.mxu0 %v1450
        %v2640 = vpop.f32.mrf.mxu0
        %v2641 = vadd.f32 %v2472, %v2640
        %v2642 = vpop.f32.mrf.mxu0
        %v2643 = vadd.f32 %v2474, %v2642
        %2644 = vmatmul.bf16.gmra.mxu0 %v1453
        %v2645 = vpop.f32.mrf.mxu0
        %v2646 = vadd.f32 %v2477, %v2645
        %v2647 = vpop.f32.mrf.mxu0
        %v2648 = vadd.f32 %v2479, %v2647
        %2649 = vmatmul.bf16.gmra.mxu0 %v1456
        %v2650 = vpop.f32.mrf.mxu0
        %v2651 = vadd.f32 %v2482, %v2650
        %v2652 = vpop.f32.mrf.mxu0
        %v2653 = vadd.f32 %v2484, %v2652
        %2654 = vmatmul.bf16.gmra.mxu0 %v1459
        %v2655 = vpop.f32.mrf.mxu0
        %v2656 = vadd.f32 %v2487, %v2655
        %v2657 = vpop.f32.mrf.mxu0
        %v2658 = vadd.f32 %v2489, %v2657
        %2659 = vmatmul.bf16.gmra.mxu0 %v1462
        %v2660 = vpop.f32.mrf.mxu0
        %v2661 = vadd.f32 %v2492, %v2660
        %v2662 = vpop.f32.mrf.mxu0
        %v2663 = vadd.f32 %v2494, %v2662
        %2664 = vmatmul.bf16.gmra.mxu0 %v1465
        %v2665 = vpop.f32.mrf.mxu0
        %v2666 = vadd.f32 %v2497, %v2665
        %v2667 = vpop.f32.mrf.mxu0
        %v2668 = vadd.f32 %v2499, %v2667
        %2669 = vmatmul.bf16.gmra.mxu0 %v1468
        %v2670 = vpop.f32.mrf.mxu0
        %v2671 = vadd.f32 %v2502, %v2670
        %v2672 = vpop.f32.mrf.mxu0
        %v2673 = vadd.f32 %v2504, %v2672
        %2674 = vmatmul.bf16.gmra.mxu0 %v1471
        %v2675 = vpop.f32.mrf.mxu0
        %v2676 = vadd.f32 %v2507, %v2675
        %v2677 = vpop.f32.mrf.mxu0
        %v2678 = vadd.f32 %v2509, %v2677
        %2679 = vmatmul.bf16.gmra.mxu0 %v1474
        %v2680 = vpop.f32.mrf.mxu0
        %v2681 = vadd.f32 %v2512, %v2680
        %v2682 = vpop.f32.mrf.mxu0
        %v2683 = vadd.f32 %v2514, %v2682
        %2684 = vmatmul.bf16.gmra.mxu0 %v1477
        %v2685 = vpop.f32.mrf.mxu0
        %v2686 = vadd.f32 %v2517, %v2685
        %v2687 = vpop.f32.mrf.mxu0
        %v2688 = vadd.f32 %v2519, %v2687
        %2689 = vmatmul.bf16.gmra.mxu0 %v1480
        %v2690 = vpop.f32.mrf.mxu0
        %v2691 = vadd.f32 %v2522, %v2690
        %v2692 = vpop.f32.mrf.mxu0
        %v2693 = vadd.f32 %v2524, %v2692
        %2694 = vmatmul.bf16.gmra.mxu0 %v1483
        %v2695 = vpop.f32.mrf.mxu0
        %v2696 = vadd.f32 %v2527, %v2695
        %v2697 = vpop.f32.mrf.mxu0
        %v2698 = vadd.f32 %v2529, %v2697
        %2699 = vmatmul.bf16.gmra.mxu0 %v1486
        %v2700 = vpop.f32.mrf.mxu0
        %v2701 = vadd.f32 %v2532, %v2700
        %v2702 = vpop.f32.mrf.mxu0
        %v2703 = vadd.f32 %v2534, %v2702
        %2704 = vmatmul.bf16.gmra.mxu0 %v1489
        %v2705 = vpop.f32.mrf.mxu0
        %v2706 = vadd.f32 %v2537, %v2705
        %v2707 = vpop.f32.mrf.mxu0
        %v2708 = vadd.f32 %v2539, %v2707
        %2709 = vmatmul.bf16.gmra.mxu0 %v1492
        %v2710 = vpop.f32.mrf.mxu0
        %v2711 = vadd.f32 %v2542, %v2710
        %v2712 = vpop.f32.mrf.mxu0
        %v2713 = vadd.f32 %v2544, %v2712
        %2714 = vmatmul.bf16.gmra.mxu0 %v1495
        %v2715 = vpop.f32.mrf.mxu0
        %v2716 = vadd.f32 %v2547, %v2715
        %v2717 = vpop.f32.mrf.mxu0
        %v2718 = vadd.f32 %v2549, %v2717
        %2719 = vmatmul.bf16.gmra.mxu0 %v1498
        %v2720 = vpop.f32.mrf.mxu0
        %v2721 = vadd.f32 %v2552, %v2720
        %v2722 = vpop.f32.mrf.mxu0
        %v2723 = vadd.f32 %v2554, %v2722
        %2724 = vmatmul.bf16.gmra.mxu0 %v1501
        %v2725 = vpop.f32.mrf.mxu0
        %v2726 = vadd.f32 %v2557, %v2725
        %v2727 = vpop.f32.mrf.mxu0
        %v2728 = vadd.f32 %v2559, %v2727
        %2729 = vmatmul.bf16.gmra.mxu0 %v1504
        %v2730 = vpop.f32.mrf.mxu0
        %v2731 = vadd.f32 %v2562, %v2730
        %v2732 = vpop.f32.mrf.mxu0
        %v2733 = vadd.f32 %v2564, %v2732
        %2734 = vmatmul.bf16.gmra.mxu0 %v1507
        %v2735 = vpop.f32.mrf.mxu0
        %v2736 = vadd.f32 %v2567, %v2735
        %v2737 = vpop.f32.mrf.mxu0
        %v2738 = vadd.f32 %v2569, %v2737
        %2739 = vmatmul.bf16.gmra.mxu0 %v1510
        %v2740 = vpop.f32.mrf.mxu0
        %v2741 = vadd.f32 %v2572, %v2740
        %v2742 = vpop.f32.mrf.mxu0
        %v2743 = vadd.f32 %v2574, %v2742
        %2744 = vmatmul.bf16.gmra.mxu0 %v2412
        %v2745 = vpop.f32.mrf.mxu0
        %v2746 = vadd.f32 %v2577, %v2745
        %v2747 = vpop.f32.mrf.mxu0
        %v2748 = vadd.f32 %v2579, %v2747
        %2749 = vmatmul.bf16.gmra.mxu0 %v2415
        %v2750 = vpop.f32.mrf.mxu0
        %v2751 = vadd.f32 %v2582, %v2750
        %v2752 = vpop.f32.mrf.mxu0
        %v2753 = vadd.f32 %v2584, %v2752
        %2754 = vdwg.mxu0
        %v2755 = vadd.f32 %v2107, %v2596
        %v2756 = vadd.f32 %v2109, %v2598
        %v2757 = vadd.f32 %v2112, %v2601
        %v2758 = vadd.f32 %v2114, %v2603
        %v2759 = vadd.f32 %v2117, %v2606
        %v2760 = vadd.f32 %v2119, %v2608
        %v2761 = vadd.f32 %v2122, %v2611
        %v2762 = vadd.f32 %v2124, %v2613
        %v2763 = vadd.f32 %v2127, %v2616
        %v2764 = vadd.f32 %v2129, %v2618
        %v2765 = vadd.f32 %v2132, %v2621
        %v2766 = vadd.f32 %v2134, %v2623
        %v2767 = vadd.f32 %v2137, %v2626
        %v2768 = vadd.f32 %v2139, %v2628
        %v2769 = vadd.f32 %v2142, %v2631
        %v2770 = vadd.f32 %v2144, %v2633
        %v2771 = vadd.f32 %v2147, %v2636
        %v2772 = vadd.f32 %v2149, %v2638
        %v2773 = vadd.f32 %v2152, %v2641
        %v2774 = vadd.f32 %v2154, %v2643
        %v2775 = vadd.f32 %v2157, %v2646
        %v2776 = vadd.f32 %v2159, %v2648
        %v2777 = vadd.f32 %v2162, %v2651
        %v2778 = vadd.f32 %v2164, %v2653
        %v2779 = vadd.f32 %v2167, %v2656
        %v2780 = vadd.f32 %v2169, %v2658
        %v2781 = vadd.f32 %v2172, %v2661
        %v2782 = vadd.f32 %v2174, %v2663
        %v2783 = vadd.f32 %v2177, %v2666
        %v2784 = vadd.f32 %v2179, %v2668
        %v2785 = vadd.f32 %v2182, %v2671
        %v2786 = vadd.f32 %v2184, %v2673
        %v2787 = vadd.f32 %v2187, %v2676
        %v2788 = vadd.f32 %v2189, %v2678
        %v2789 = vadd.f32 %v2192, %v2681
        %v2790 = vadd.f32 %v2194, %v2683
        %v2791 = vadd.f32 %v2197, %v2686
        %v2792 = vadd.f32 %v2199, %v2688
        %v2793 = vadd.f32 %v2202, %v2691
        %v2794 = vadd.f32 %v2204, %v2693
        %v2795 = vadd.f32 %v2207, %v2696
        %v2796 = vadd.f32 %v2209, %v2698
        %v2797 = vadd.f32 %v2212, %v2701
        %v2798 = vadd.f32 %v2214, %v2703
        %v2799 = vadd.f32 %v2217, %v2706
        %v2800 = vadd.f32 %v2219, %v2708
        %v2801 = vadd.f32 %v2222, %v2711
        %v2802 = vadd.f32 %v2224, %v2713
        %v2803 = vadd.f32 %v2227, %v2716
        %v2804 = vadd.f32 %v2229, %v2718
        %v2805 = vadd.f32 %v2232, %v2721
        %v2806 = vadd.f32 %v2234, %v2723
        %v2807 = vadd.f32 %v2237, %v2726
        %v2808 = vadd.f32 %v2239, %v2728
        %v2809 = vadd.f32 %v2242, %v2731
        %v2810 = vadd.f32 %v2244, %v2733
        %v2811 = vadd.f32 %v2247, %v2736
        %v2812 = vadd.f32 %v2249, %v2738
        %v2813 = vadd.f32 %v2252, %v2741
        %v2814 = vadd.f32 %v2254, %v2743
        %v2815 = vadd.f32 %v2257, %v2746
        %v2816 = vadd.f32 %v2259, %v2748
        %v2817 = vadd.f32 %v2262, %v2751
        %v2818 = vadd.f32 %v2264, %v2753
        %v2819 = vld [vmem:[%s4] sm:$0x1]
        %v2821 = vperm.slane %v2819, 0
        %v2823 = vadd.f32 %v2755, %v2821
        %v2824 = vadd.f32 %v2756, %v2821
        %v2825 = vadd.f32 %v2757, %v2821
        %v2826 = vadd.f32 %v2758, %v2821
        %v2827 = vadd.f32 %v2759, %v2821
        %v2828 = vadd.f32 %v2760, %v2821
        %v2829 = vadd.f32 %v2761, %v2821
        %v2830 = vadd.f32 %v2762, %v2821
        %v2831 = vadd.f32 %v2763, %v2821
        %v2832 = vadd.f32 %v2764, %v2821
        %v2833 = vadd.f32 %v2765, %v2821
        %v2834 = vadd.f32 %v2766, %v2821
        %v2835 = vadd.f32 %v2767, %v2821
        %v2836 = vadd.f32 %v2768, %v2821
        %v2837 = vadd.f32 %v2769, %v2821
        %v2838 = vadd.f32 %v2770, %v2821
        %v2839 = vadd.f32 %v2771, %v2821
        %v2840 = vadd.f32 %v2772, %v2821
        %v2841 = vadd.f32 %v2773, %v2821
        %v2842 = vadd.f32 %v2774, %v2821
        %v2843 = vadd.f32 %v2775, %v2821
        %v2844 = vadd.f32 %v2776, %v2821
        %v2845 = vadd.f32 %v2777, %v2821
        %v2846 = vadd.f32 %v2778, %v2821
        %v2847 = vadd.f32 %v2779, %v2821
        %v2848 = vadd.f32 %v2780, %v2821
        %v2849 = vadd.f32 %v2781, %v2821
        %v2850 = vadd.f32 %v2782, %v2821
        %v2851 = vadd.f32 %v2783, %v2821
        %v2852 = vadd.f32 %v2784, %v2821
        %v2853 = vadd.f32 %v2785, %v2821
        %v2854 = vadd.f32 %v2786, %v2821
        %v2855 = vadd.f32 %v2787, %v2821
        %v2856 = vadd.f32 %v2788, %v2821
        %v2857 = vadd.f32 %v2789, %v2821
        %v2858 = vadd.f32 %v2790, %v2821
        %v2859 = vadd.f32 %v2791, %v2821
        %v2860 = vadd.f32 %v2792, %v2821
        %v2861 = vadd.f32 %v2793, %v2821
        %v2862 = vadd.f32 %v2794, %v2821
        %v2863 = vadd.f32 %v2795, %v2821
        %v2864 = vadd.f32 %v2796, %v2821
        %v2865 = vadd.f32 %v2797, %v2821
        %v2866 = vadd.f32 %v2798, %v2821
        %v2867 = vadd.f32 %v2799, %v2821
        %v2868 = vadd.f32 %v2800, %v2821
        %v2869 = vadd.f32 %v2801, %v2821
        %v2870 = vadd.f32 %v2802, %v2821
        %v2871 = vadd.f32 %v2803, %v2821
        %v2872 = vadd.f32 %v2804, %v2821
        %v2873 = vadd.f32 %v2805, %v2821
        %v2874 = vadd.f32 %v2806, %v2821
        %v2875 = vadd.f32 %v2807, %v2821
        %v2876 = vadd.f32 %v2808, %v2821
        %v2877 = vadd.f32 %v2809, %v2821
        %v2878 = vadd.f32 %v2810, %v2821
        %v2879 = vadd.f32 %v2811, %v2821
        %v2880 = vadd.f32 %v2812, %v2821
        %v2881 = vadd.f32 %v2813, %v2821
        %v2882 = vadd.f32 %v2814, %v2821
        %v2883 = vadd.f32 %v2815, %v2821
        %v2884 = vadd.f32 %v2816, %v2821
        %v2885 = vadd.f32 %v2817, %v2821
        %v2886 = vadd.f32 %v2818, %v2821
        %2887 = vst [vmem:[%s334] sm:$0xff] %v2823
        %2888 = vst [vmem:[%s334 + $0x8] sm:$0xff] %v2824
        %2889 = vst [vmem:[%s334 + $0x10] sm:$0xff] %v2825
        %2890 = vst [vmem:[%s334 + $0x18] sm:$0xff] %v2826
        %2891 = vst [vmem:[%s334 + $0x20] sm:$0xff] %v2827
        %2892 = vst [vmem:[%s334 + $0x28] sm:$0xff] %v2828
        %2893 = vst [vmem:[%s334 + $0x30] sm:$0xff] %v2829
        %2894 = vst [vmem:[%s334 + $0x38] sm:$0xff] %v2830
        %2895 = vst [vmem:[%s334 + $0x40] sm:$0xff] %v2831
        %2896 = vst [vmem:[%s334 + $0x48] sm:$0xff] %v2832
        %2897 = vst [vmem:[%s334 + $0x50] sm:$0xff] %v2833
        %2898 = vst [vmem:[%s334 + $0x58] sm:$0xff] %v2834
        %2899 = vst [vmem:[%s334 + $0x60] sm:$0xff] %v2835
        %2900 = vst [vmem:[%s334 + $0x68] sm:$0xff] %v2836
        %2901 = vst [vmem:[%s334 + $0x70] sm:$0xff] %v2837
        %2902 = vst [vmem:[%s334 + $0x78] sm:$0xff] %v2838
        %2903 = vst [vmem:[%s334 + $0x80] sm:$0xff] %v2839
        %2904 = vst [vmem:[%s334 + $0x88] sm:$0xff] %v2840
        %2905 = vst [vmem:[%s334 + $0x90] sm:$0xff] %v2841
        %2906 = vst [vmem:[%s334 + $0x98] sm:$0xff] %v2842
        %2907 = vst [vmem:[%s334 + $0xa0] sm:$0xff] %v2843
        %2908 = vst [vmem:[%s334 + $0xa8] sm:$0xff] %v2844
        %2909 = vst [vmem:[%s334 + $0xb0] sm:$0xff] %v2845
        %2910 = vst [vmem:[%s334 + $0xb8] sm:$0xff] %v2846
        %2911 = vst [vmem:[%s334 + $0xc0] sm:$0xff] %v2847
        %2912 = vst [vmem:[%s334 + $0xc8] sm:$0xff] %v2848
        %2913 = vst [vmem:[%s334 + $0xd0] sm:$0xff] %v2849
        %2914 = vst [vmem:[%s334 + $0xd8] sm:$0xff] %v2850
        %2915 = vst [vmem:[%s334 + $0xe0] sm:$0xff] %v2851
        %2916 = vst [vmem:[%s334 + $0xe8] sm:$0xff] %v2852
        %2917 = vst [vmem:[%s334 + $0xf0] sm:$0xff] %v2853
        %2918 = vst [vmem:[%s334 + $0xf8] sm:$0xff] %v2854
        %2919 = vst [vmem:[%s334 + $0x100] sm:$0xff] %v2855
        %2920 = vst [vmem:[%s334 + $0x108] sm:$0xff] %v2856
        %2921 = vst [vmem:[%s334 + $0x110] sm:$0xff] %v2857
        %2922 = vst [vmem:[%s334 + $0x118] sm:$0xff] %v2858
        %2923 = vst [vmem:[%s334 + $0x120] sm:$0xff] %v2859
        %2924 = vst [vmem:[%s334 + $0x128] sm:$0xff] %v2860
        %2925 = vst [vmem:[%s334 + $0x130] sm:$0xff] %v2861
        %2926 = vst [vmem:[%s334 + $0x138] sm:$0xff] %v2862
        %2927 = vst [vmem:[%s334 + $0x140] sm:$0xff] %v2863
        %2928 = vst [vmem:[%s334 + $0x148] sm:$0xff] %v2864
        %2929 = vst [vmem:[%s334 + $0x150] sm:$0xff] %v2865
        %2930 = vst [vmem:[%s334 + $0x158] sm:$0xff] %v2866
        %2931 = vst [vmem:[%s334 + $0x160] sm:$0xff] %v2867
        %2932 = vst [vmem:[%s334 + $0x168] sm:$0xff] %v2868
        %2933 = vst [vmem:[%s334 + $0x170] sm:$0xff] %v2869
        %2934 = vst [vmem:[%s334 + $0x178] sm:$0xff] %v2870
        %2935 = vst [vmem:[%s334 + $0x180] sm:$0xff] %v2871
        %2936 = vst [vmem:[%s334 + $0x188] sm:$0xff] %v2872
        %2937 = vst [vmem:[%s334 + $0x190] sm:$0xff] %v2873
        %2938 = vst [vmem:[%s334 + $0x198] sm:$0xff] %v2874
        %2939 = vst [vmem:[%s334 + $0x1a0] sm:$0xff] %v2875
        %2940 = vst [vmem:[%s334 + $0x1a8] sm:$0xff] %v2876
        %2941 = vst [vmem:[%s334 + $0x1b0] sm:$0xff] %v2877
        %2942 = vst [vmem:[%s334 + $0x1b8] sm:$0xff] %v2878
        %2943 = vst [vmem:[%s334 + $0x1c0] sm:$0xff] %v2879
        %2944 = vst [vmem:[%s334 + $0x1c8] sm:$0xff] %v2880
        %2945 = vst [vmem:[%s334 + $0x1d0] sm:$0xff] %v2881
        %2946 = vst [vmem:[%s334 + $0x1d8] sm:$0xff] %v2882
        %2947 = vst [vmem:[%s334 + $0x1e0] sm:$0xff] %v2883
        %2948 = vst [vmem:[%s334 + $0x1e8] sm:$0xff] %v2884
        %2949 = vst [vmem:[%s334 + $0x1f0] sm:$0xff] %v2885
        %2950 = vst [vmem:[%s334 + $0x1f8] sm:$0xff] %v2886
        %s2951 = sand.u32 %s177, 1
        %s2952 = scalar_lea.sflag [#allocation3], %s2951
        %s2953 = sand.u32 %s177, 1
        %s2954 = smul.addr %s2953, 512
        %s2955 = scalar_lea.vmem [#allocation2], %s2954
        // Predicated region
        $region41: #{hyper_synthesis_forward.5} parent=39 // pred_check
          %p2956 = pneg %p187
        $region42: #{hyper_synthesis_forward.5} parent=39 // pred_check_branch
          %2958 = sbr.rel (%p2956) target = $region44
        $region43: #{hyper_synthesis_forward.5} parent=39 // pred_region
          %s2959 = smul.u32 16, %s24
          %2961 = vsyncadd %s2952, 0
          %s2962 = smul.addr %s2959, 4
          %s2963 = smul.addr %s23, 128
          %s2964 = sadd.s32 %s2962, %s2963
          %s2965 = smul.addr %s2964, 8
          %s2966 = scalar_lea.hbm %s5, %s2965
          %s2967 = sshll.u32 %s2955, 4
          %s2968 = int_to_ptr.vmem [resolvable:$true] %s2967
          %s2969 = sshll.u32 %s2966, 4
          %s2970 = int_to_ptr.hbm [resolvable:$true] %s2969
          %2975 = dma.vmem_to_hbm [thread:$0]  %s2968, 8192, %s2970, %s2952, 128, 128, 8
        $region44: #{hyper_synthesis_forward.5} parent=39 // pred_fallthru
          _
      $region40: #{hyper_synthesis_forward.5} parent=5 // pred_fallthru
        _
      %p2976 = scmp.le.s32.totalorder 2, %s14
      // Predicated region
      $region45: #{hyper_synthesis_forward.5} parent=5 // pred_check
        %p2977 = pneg %p2976
      $region46: #{hyper_synthesis_forward.5} parent=5 // pred_check_branch
        %2979 = sbr.rel (%p2977) target = $region48
      $region47: #{hyper_synthesis_forward.5} parent=5 // pred_region
        %s2980 = ssub.s32 %s14, 2
        // Predicated region
        $region49: #{hyper_synthesis_forward.5} parent=47 // pred_check
          %p2981 = pneg %p193
        $region50: #{hyper_synthesis_forward.5} parent=47 // pred_check_branch
          %2983 = sbr.rel (%p2981) target = $region52
        $region51: #{hyper_synthesis_forward.5} parent=47 // pred_region
          %s2984 = sand.u32 %s178, 1
          %s2985 = scalar_lea.sflag [#allocation3], %s2984
          %s2986 = sand.u32 %s178, 1
          %s2987 = smul.addr %s2986, 512
          %s2988 = scalar_lea.vmem [#allocation2], %s2987
          %2990 = dma.done %s2985, 8192
        $region52: #{hyper_synthesis_forward.5} parent=47 // pred_fallthru
          _
      $region48: #{hyper_synthesis_forward.5} parent=5 // pred_fallthru
        _
    $region6: #{hyper_synthesis_forward.5} parent=1 // loop_footer
      %s18 = sadd.s32 1, %s14
    $region7: #{hyper_synthesis_forward.5} parent=1 // loop_footer_branch
      %13 = sbr.rel target = $region3
    $region8: #{hyper_synthesis_forward.5} parent=1 // loop_exit
      _
    %2991 = vsyncpa [#allocation3], 1
    %s2992 = scalar_lea.sflag [#allocation3], 1
    %2993 = vsyncpa %s2992, 1

</llo_original>
